<compile_context>
chip_gen: v7x
topology: tpu7x:2x2x1
jax: 0.10.0
libtpu: 0.0.40
codegen_flags: <defaults>
</compile_context>

<pallas_src>
import functools

import jax
import jax.numpy as jnp
from jax import lax
from jax.experimental import pallas as pl
from jax.experimental.pallas import tpu as pltpu


# ----------------------------- Pallas kernel --------------------------------
def _bigru_layer_kernel(x_ref, wih_ref, bih_ref,
                        whh_f_ref, whh_r_ref, bhh_f_ref, bhh_r_ref,
                        out_ref, gi_f_ref, gi_r_ref,
                        *, hidden, seq_len, batch):
    """One bidirectional GRU layer over the full sequence.

    x_ref   : (T*B, D_in)   time-major, flattened over (T, B)
    wih_ref : (D_in, 6H)    [W_ih_fwd^T | W_ih_rev^T]
    bih_ref : (1, 6H)
    whh_*   : (H, 3H)       per-direction W_hh^T
    bhh_*   : (1, 3H)
    out_ref : (T*B, 2H)     [:, :H] forward outputs, [:, H:] reverse outputs
    gi_*_ref: (T*B, 3H)     VMEM scratch holding precomputed input projections
    Gate order follows PyTorch: [r, z, n].
    """
    H = hidden
    T = seq_len
    B = batch

    # ---- Phase 1: one big batched input projection (both directions) -------
    gi = jnp.dot(x_ref[...], wih_ref[...],
                 preferred_element_type=jnp.float32) + bih_ref[...]
    gi_f_ref[...] = gi[:, 0:3 * H]
    gi_r_ref[...] = gi[:, 3 * H:6 * H]

    # ---- Hoist loop-invariant weight / bias reads ---------------------------
    whh_f = whh_f_ref[...]
    whh_r = whh_r_ref[...]
    bhh_f = jnp.broadcast_to(bhh_f_ref[...], (B, 3 * H))
    bhh_r = jnp.broadcast_to(bhh_r_ref[...], (B, 3 * H))

    def cell(gi_t, h, whh, bhh):
        gh = jnp.dot(h, whh, preferred_element_type=jnp.float32) + bhh
        r = jax.nn.sigmoid(gi_t[:, 0:H] + gh[:, 0:H])
        z = jax.nn.sigmoid(gi_t[:, H:2 * H] + gh[:, H:2 * H])
        n = jnp.tanh(gi_t[:, 2 * H:3 * H] + r * gh[:, 2 * H:3 * H])
        return (1.0 - z) * n + z * h

    # ---- Phase 2: serial recurrence, fwd & rev chains interleaved ----------
    def body(t, carry):
        h_f, h_r = carry
        fwd_row = pl.multiple_of(t * B, 8)
        rev_row = pl.multiple_of((T - 1 - t) * B, 8)

        gi_f = gi_f_ref[pl.ds(fwd_row, B), :]
        gi_r = gi_r_ref[pl.ds(rev_row, B), :]

        h_f = cell(gi_f, h_f, whh_f, bhh_f)
        h_r = cell(gi_r, h_r, whh_r, bhh_r)

        out_ref[pl.ds(fwd_row, B), 0:H] = h_f.astype(out_ref.dtype)
        out_ref[pl.ds(rev_row, B), H:2 * H] = h_r.astype(out_ref.dtype)
        return h_f, h_r

    h0 = jnp.zeros((B, H), jnp.float32)
    lax.fori_loop(0, T, body, (h0, h0), unroll=True)


def bigru_layer_pallas(x2d, wih_cat_t, bih_cat, whh_f_t, whh_r_t, bhh_f, bhh_r,
                       *, seq_len, batch, hidden):
    """Run one fused bidirectional GRU layer with a single pallas_call."""
    TB, D = x2d.shape
    H = hidden
    assert TB == seq_len * batch

    kernel = functools.partial(
        _bigru_layer_kernel, hidden=H, seq_len=seq_len, batch=batch)

    return pl.pallas_call(
        kernel,
        out_shape=jax.ShapeDtypeStruct((TB, 2 * H), jnp.float32),
        grid=(1,),
        in_specs=[
            pl.BlockSpec((TB, D), lambda i: (0, 0)),
            pl.BlockSpec((D, 6 * H), lambda i: (0, 0)),
            pl.BlockSpec((1, 6 * H), lambda i: (0, 0)),
            pl.BlockSpec((H, 3 * H), lambda i: (0, 0)),
            pl.BlockSpec((H, 3 * H), lambda i: (0, 0)),
            pl.BlockSpec((1, 3 * H), lambda i: (0, 0)),
            pl.BlockSpec((1, 3 * H), lambda i: (0, 0)),
        ],
        out_specs=pl.BlockSpec((TB, 2 * H), lambda i: (0, 0)),
        scratch_shapes=[
            pltpu.VMEM((TB, 3 * H), jnp.float32),   # gi forward
            pltpu.VMEM((TB, 3 * H), jnp.float32),   # gi reverse
        ],
        compiler_params=pltpu.CompilerParams(
            dimension_semantics=("arbitrary",)),    # recurrent -> sequential
    )(x2d, wih_cat_t, bih_cat, whh_f_t, whh_r_t, bhh_f, bhh_r)


# ----------------------------- BiGRU wrapper ---------------------------------
def bigru_forward(x_btd, packed_params, num_layers, hidden_size):
    """Equivalent of BiGRU.forward: returns out of shape (B, T, 2*H)."""
    B, T, D_in = x_btd.shape
    B_pad = max(8, ((B + 7) // 8) * 8)              # sublane-full batch

    x = jnp.transpose(x_btd, (1, 0, 2))             # -> time-major (T, B, D)
    if B_pad != B:
        x = jnp.pad(x, ((0, 0), (0, B_pad - B), (0, 0)))
    h = x.reshape(T * B_pad, D_in)

    for layer in range(num_layers):
        p = packed_params[layer]
        h = bigru_layer_pallas(
            h, p["wih_cat_t"], p["bih_cat"],
            p["whh_f_t"], p["whh_r_t"], p["bhh_f"], p["bhh_r"],
            seq_len=T, batch=B_pad, hidden=hidden_size)
        # TODO(synk): inter-layer dropout (p=0.2) omitted — eval-mode semantics.

    out = h.reshape(T, B_pad, 2 * hidden_size)[:, :B, :]
    return jnp.transpose(out, (1, 0, 2))            # back to (B, T, 2H)


# ----------------------------- parameters ------------------------------------
def init_raw_params(key, input_size, hidden_size, num_layers):
    """PyTorch nn.GRU-shaped weights, uniform(-k, k)."""
    params = {}
    k = 1.0 / jnp.sqrt(hidden_size)
    for layer in range(num_layers):
        in_sz = input_size if layer == 0 else 2 * hidden_size
        for direction in range(2):
            key, k1, k2, k3, k4 = jax.random.split(key, 5)
            params[(layer, direction)] = dict(
                w_ih=jax.random.uniform(k1, (3 * hidden_size, in_sz),
                                        jnp.float32, -k, k),
                w_hh=jax.random.uniform(k2, (3 * hidden_size, hidden_size),
                                        jnp.float32, -k, k),
                b_ih=jax.random.uniform(k3, (3 * hidden_size,),
                                        jnp.float32, -k, k),
                b_hh=jax.random.uniform(k4, (3 * hidden_size,),
                                        jnp.float32, -k, k),
            )
    return params


def pack_params(raw, num_layers):
    """Fuse the two directions of each layer for the Pallas kernel."""
    packed = []
    for layer in range(num_layers):
        pf, pr = raw[(layer, 0)], raw[(layer, 1)]
        packed.append(dict(
            wih_cat_t=jnp.concatenate([pf["w_ih"].T, pr["w_ih"].T], axis=1),
            bih_cat=jnp.concatenate([pf["b_ih"], pr["b_ih"]]).reshape(1, -1),
            whh_f_t=pf["w_hh"].T,
            whh_r_t=pr["w_hh"].T,
            bhh_f=pf["b_hh"].reshape(1, -1),
            bhh_r=pr["b_hh"].reshape(1, -1),
        ))
    return packed


# ----------------------------- pure-JAX reference ----------------------------
def _gru_direction_ref(x_tbd, w_ih, w_hh, b_ih, b_hh, reverse):
    H = w_hh.shape[1]
    B = x_tbd.shape[1]

    def step(h, x):
        gi = x @ w_ih.T + b_ih
        gh = h @ w_hh.T + b_hh
        r = jax.nn.sigmoid(gi[:, 0:H] + gh[:, 0:H])
        z = jax.nn.sigmoid(gi[:, H:2 * H] + gh[:, H:2 * H])
        n = jnp.tanh(gi[:, 2 * H:3 * H] + r * gh[:, 2 * H:3 * H])
        h_new = (1.0 - z) * n + z * h
        return h_new, h_new

    h0 = jnp.zeros((B, H), jnp.float32)
    _, ys = lax.scan(step, h0, x_tbd, reverse=reverse)
    return ys


def bigru_reference(x_btd, raw_params, num_layers):
    x = jnp.transpose(x_btd, (1, 0, 2))
    for layer in range(num_layers):
        outs = []
        for direction, rev in enumerate((False, True)):
            p = raw_params[(layer, direction)]
            outs.append(_gru_direction_ref(
                x, p["w_ih"], p["w_hh"], p["b_ih"], p["b_hh"], rev))
        x = jnp.concatenate(outs, axis=-1)
    return jnp.transpose(x, (1, 0, 2))


# ----------------------------- main -------------------------------------------
if __name__ == "__main__":
    INPUT_SIZE = 16
    HIDDEN = 32
    NUM_LAYERS = 2
    B, T = 4, 8

    key = jax.random.PRNGKey(0)
    key, xkey = jax.random.split(key)
    x = jax.random.normal(xkey, (B, T, INPUT_SIZE), jnp.float32)

    raw = init_raw_params(key, INPUT_SIZE, HIDDEN, NUM_LAYERS)
    packed = pack_params(raw, NUM_LAYERS)

    fwd = jax.jit(functools.partial(
        bigru_forward, num_layers=NUM_LAYERS, hidden_size=HIDDEN))
    out = jax.block_until_ready(fwd(x, packed))

    assert out.shape == (B, T, 2 * HIDDEN), out.shape

    ref = jax.block_until_ready(bigru_reference(x, raw, NUM_LAYERS))
    assert bool(jnp.allclose(out, ref, atol=2e-5, rtol=2e-5)), (
        "Pallas BiGRU output mismatch vs reference")

    print("KERNEL_OK")
</pallas_src>

<mosaic_0001>
module attributes {stable_mosaic.version = 11 : i64} {
  func.func @_bigru_layer_kernel(%arg0: i32, %arg1: memref<64x64xf32, #tpu.memory_space<vmem>>, %arg2: memref<64x192xf32, #tpu.memory_space<vmem>>, %arg3: memref<1x192xf32, #tpu.memory_space<vmem>>, %arg4: memref<32x96xf32, #tpu.memory_space<vmem>>, %arg5: memref<32x96xf32, #tpu.memory_space<vmem>>, %arg6: memref<1x96xf32, #tpu.memory_space<vmem>>, %arg7: memref<1x96xf32, #tpu.memory_space<vmem>>, %arg8: memref<64x64xf32, #tpu.memory_space<vmem>>, %arg9: memref<64x96xf32, #tpu.memory_space<vmem>>, %arg10: memref<64x96xf32, #tpu.memory_space<vmem>>) attributes {dimension_semantics = [#tpu.dimension_semantics<arbitrary>], iteration_bounds = array<i64: 1>, scalar_prefetch = 0 : i64, scratch_operands = 2 : i64, tpu.core_type = #tpu.core_type<tc>, window_params = [{pipeline_mode = #tpu.pipeline_mode<synchronous>, transform_indices = @transform_0, window_bounds = array<i64: 64, 64>}, {pipeline_mode = #tpu.pipeline_mode<synchronous>, transform_indices = @transform_1, window_bounds = array<i64: 64, 192>}, {pipeline_mode = #tpu.pipeline_mode<synchronous>, transform_indices = @transform_2, window_bounds = array<i64: 1, 192>}, {pipeline_mode = #tpu.pipeline_mode<synchronous>, transform_indices = @transform_3, window_bounds = array<i64: 32, 96>}, {pipeline_mode = #tpu.pipeline_mode<synchronous>, transform_indices = @transform_4, window_bounds = array<i64: 32, 96>}, {pipeline_mode = #tpu.pipeline_mode<synchronous>, transform_indices = @transform_5, window_bounds = array<i64: 1, 96>}, {pipeline_mode = #tpu.pipeline_mode<synchronous>, transform_indices = @transform_6, window_bounds = array<i64: 1, 96>}, {pipeline_mode = #tpu.pipeline_mode<synchronous>, transform_indices = @transform_7, window_bounds = array<i64: 64, 64>}]} {
    %c0 = arith.constant 0 : index
    %c0_0 = arith.constant 0 : index
    %0 = vector.load %arg1[%c0, %c0_0] : memref<64x64xf32, #tpu.memory_space<vmem>>, vector<64x64xf32>
    %c0_1 = arith.constant 0 : index
    %c0_2 = arith.constant 0 : index
    %1 = vector.load %arg2[%c0_1, %c0_2] : memref<64x192xf32, #tpu.memory_space<vmem>>, vector<64x192xf32>
    %cst = arith.constant dense<0.000000e+00> : vector<64x192xf32>
    %2 = tpu.matmul %0, %1, %cst {dimension_numbers = #tpu.dot_dimension_numbers<[1], [0], [0], [1], [0, 0, 1, 1], [], []>} : vector<64x64xf32>, vector<64x192xf32>, vector<64x192xf32> -> vector<64x192xf32>
    %c0_3 = arith.constant 0 : index
    %c0_4 = arith.constant 0 : index
    %3 = vector.load %arg3[%c0_3, %c0_4] : memref<1x192xf32, #tpu.memory_space<vmem>>, vector<1x192xf32>
    %4 = vector.broadcast %3 : vector<1x192xf32> to vector<64x192xf32>
    %5 = arith.addf %2, %4 : vector<64x192xf32>
    %6 = vector.extract_strided_slice %5 {offsets = [0, 0], sizes = [64, 96], strides = [1, 1]} : vector<64x192xf32> to vector<64x96xf32>
    %c0_5 = arith.constant 0 : index
    %c0_6 = arith.constant 0 : index
    %7 = vector.load %arg9[%c0_5, %c0_6] : memref<64x96xf32, #tpu.memory_space<vmem>>, vector<64x96xf32>
    tpu.vector_store %arg9[%c0_5, %c0_6], %6 {strides = array<i32>} : memref<64x96xf32, #tpu.memory_space<vmem>>, vector<64x96xf32>,
    %8 = vector.extract_strided_slice %5 {offsets = [0, 96], sizes = [64, 96], strides = [1, 1]} : vector<64x192xf32> to vector<64x96xf32>
    %c0_7 = arith.constant 0 : index
    %c0_8 = arith.constant 0 : index
    %9 = vector.load %arg10[%c0_7, %c0_8] : memref<64x96xf32, #tpu.memory_space<vmem>>, vector<64x96xf32>
    tpu.vector_store %arg10[%c0_7, %c0_8], %8 {strides = array<i32>} : memref<64x96xf32, #tpu.memory_space<vmem>>, vector<64x96xf32>,
    %c0_9 = arith.constant 0 : index
    %c0_10 = arith.constant 0 : index
    %10 = vector.load %arg4[%c0_9, %c0_10] : memref<32x96xf32, #tpu.memory_space<vmem>>, vector<32x96xf32>
    %c0_11 = arith.constant 0 : index
    %c0_12 = arith.constant 0 : index
    %11 = vector.load %arg5[%c0_11, %c0_12] : memref<32x96xf32, #tpu.memory_space<vmem>>, vector<32x96xf32>
    %c0_13 = arith.constant 0 : index
    %c0_14 = arith.constant 0 : index
    %12 = vector.load %arg6[%c0_13, %c0_14] : memref<1x96xf32, #tpu.memory_space<vmem>>, vector<1x96xf32>
    %13 = vector.shape_cast %12 : vector<1x96xf32> to vector<1x96xf32>
    %14 = vector.broadcast %13 : vector<1x96xf32> to vector<8x96xf32>
    %c0_15 = arith.constant 0 : index
    %c0_16 = arith.constant 0 : index
    %15 = vector.load %arg7[%c0_15, %c0_16] : memref<1x96xf32, #tpu.memory_space<vmem>>, vector<1x96xf32>
    %16 = vector.shape_cast %15 : vector<1x96xf32> to vector<1x96xf32>
    %17 = vector.broadcast %16 : vector<1x96xf32> to vector<8x96xf32>
    %cst_17 = arith.constant 0.000000e+00 : f32
    %18 = vector.broadcast %cst_17 : f32 to vector<8x32xf32>
    %c0_i32 = arith.constant 0 : i32
    %c8_i32 = arith.constant 8 : i32
    %19 = arith.muli %c0_i32, %c8_i32 : i32
    %20 = tpu.assume_multiple %19, 8 : i32
    %c7_i32 = arith.constant 7 : i32
    %21 = arith.subi %c7_i32, %c0_i32 : i32
    %c8_i32_18 = arith.constant 8 : i32
    %22 = arith.muli %21, %c8_i32_18 : i32
    %23 = tpu.assume_multiple %22, 8 : i32
    %24 = arith.index_cast %20 : i32 to index
    %c0_19 = arith.constant 0 : index
    %25 = vector.load %arg9[%24, %c0_19] : memref<64x96xf32, #tpu.memory_space<vmem>>, vector<8x96xf32>
    %26 = arith.index_cast %23 : i32 to index
    %c0_20 = arith.constant 0 : index
    %27 = vector.load %arg10[%26, %c0_20] : memref<64x96xf32, #tpu.memory_space<vmem>>, vector<8x96xf32>
    %cst_21 = arith.constant dense<0.000000e+00> : vector<8x96xf32>
    %28 = tpu.matmul %18, %10, %cst_21 {dimension_numbers = #tpu.dot_dimension_numbers<[1], [0], [0], [1], [0, 0, 1, 1], [], []>} : vector<8x32xf32>, vector<32x96xf32>, vector<8x96xf32> -> vector<8x96xf32>
    %29 = arith.addf %28, %14 : vector<8x96xf32>
    %30 = vector.extract_strided_slice %25 {offsets = [0, 0], sizes = [8, 32], strides = [1, 1]} : vector<8x96xf32> to vector<8x32xf32>
    %31 = vector.extract_strided_slice %29 {offsets = [0, 0], sizes = [8, 32], strides = [1, 1]} : vector<8x96xf32> to vector<8x32xf32>
    %32 = arith.addf %30, %31 : vector<8x32xf32>
    %33 = arith.negf %32 : vector<8x32xf32>
    %34 = math.exp %33 : vector<8x32xf32>
    %cst_22 = arith.constant 1.000000e+00 : f32
    %35 = vector.broadcast %cst_22 : f32 to vector<8x32xf32>
    %36 = arith.addf %35, %34 : vector<8x32xf32>
    %37 = arith.divf %35, %36 : vector<8x32xf32>
    %38 = vector.extract_strided_slice %25 {offsets = [0, 32], sizes = [8, 32], strides = [1, 1]} : vector<8x96xf32> to vector<8x32xf32>
    %39 = vector.extract_strided_slice %29 {offsets = [0, 32], sizes = [8, 32], strides = [1, 1]} : vector<8x96xf32> to vector<8x32xf32>
    %40 = arith.addf %38, %39 : vector<8x32xf32>
    %41 = arith.negf %40 : vector<8x32xf32>
    %42 = math.exp %41 : vector<8x32xf32>
    %cst_23 = arith.constant 1.000000e+00 : f32
    %43 = vector.broadcast %cst_23 : f32 to vector<8x32xf32>
    %44 = arith.addf %43, %42 : vector<8x32xf32>
    %45 = arith.divf %43, %44 : vector<8x32xf32>
    %46 = vector.extract_strided_slice %25 {offsets = [0, 64], sizes = [8, 32], strides = [1, 1]} : vector<8x96xf32> to vector<8x32xf32>
    %47 = vector.extract_strided_slice %29 {offsets = [0, 64], sizes = [8, 32], strides = [1, 1]} : vector<8x96xf32> to vector<8x32xf32>
    %48 = arith.mulf %37, %47 : vector<8x32xf32>
    %49 = arith.addf %46, %48 : vector<8x32xf32>
    %50 = math.tanh %49 : vector<8x32xf32>
    %cst_24 = arith.constant 1.000000e+00 : f32
    %51 = vector.broadcast %cst_24 : f32 to vector<8x32xf32>
    %52 = arith.subf %51, %45 : vector<8x32xf32>
    %53 = arith.mulf %52, %50 : vector<8x32xf32>
    %54 = arith.mulf %45, %18 : vector<8x32xf32>
    %55 = arith.addf %53, %54 : vector<8x32xf32>
    %cst_25 = arith.constant dense<0.000000e+00> : vector<8x96xf32>
    %56 = tpu.matmul %18, %11, %cst_25 {dimension_numbers = #tpu.dot_dimension_numbers<[1], [0], [0], [1], [0, 0, 1, 1], [], []>} : vector<8x32xf32>, vector<32x96xf32>, vector<8x96xf32> -> vector<8x96xf32>
    %57 = arith.addf %56, %17 : vector<8x96xf32>
    %58 = vector.extract_strided_slice %27 {offsets = [0, 0], sizes = [8, 32], strides = [1, 1]} : vector<8x96xf32> to vector<8x32xf32>
    %59 = vector.extract_strided_slice %57 {offsets = [0, 0], sizes = [8, 32], strides = [1, 1]} : vector<8x96xf32> to vector<8x32xf32>
    %60 = arith.addf %58, %59 : vector<8x32xf32>
    %61 = arith.negf %60 : vector<8x32xf32>
    %62 = math.exp %61 : vector<8x32xf32>
    %cst_26 = arith.constant 1.000000e+00 : f32
    %63 = vector.broadcast %cst_26 : f32 to vector<8x32xf32>
    %64 = arith.addf %63, %62 : vector<8x32xf32>
    %65 = arith.divf %63, %64 : vector<8x32xf32>
    %66 = vector.extract_strided_slice %27 {offsets = [0, 32], sizes = [8, 32], strides = [1, 1]} : vector<8x96xf32> to vector<8x32xf32>
    %67 = vector.extract_strided_slice %57 {offsets = [0, 32], sizes = [8, 32], strides = [1, 1]} : vector<8x96xf32> to vector<8x32xf32>
    %68 = arith.addf %66, %67 : vector<8x32xf32>
    %69 = arith.negf %68 : vector<8x32xf32>
    %70 = math.exp %69 : vector<8x32xf32>
    %cst_27 = arith.constant 1.000000e+00 : f32
    %71 = vector.broadcast %cst_27 : f32 to vector<8x32xf32>
    %72 = arith.addf %71, %70 : vector<8x32xf32>
    %73 = arith.divf %71, %72 : vector<8x32xf32>
    %74 = vector.extract_strided_slice %27 {offsets = [0, 64], sizes = [8, 32], strides = [1, 1]} : vector<8x96xf32> to vector<8x32xf32>
    %75 = vector.extract_strided_slice %57 {offsets = [0, 64], sizes = [8, 32], strides = [1, 1]} : vector<8x96xf32> to vector<8x32xf32>
    %76 = arith.mulf %65, %75 : vector<8x32xf32>
    %77 = arith.addf %74, %76 : vector<8x32xf32>
    %78 = math.tanh %77 : vector<8x32xf32>
    %cst_28 = arith.constant 1.000000e+00 : f32
    %79 = vector.broadcast %cst_28 : f32 to vector<8x32xf32>
    %80 = arith.subf %79, %73 : vector<8x32xf32>
    %81 = arith.mulf %80, %78 : vector<8x32xf32>
    %82 = arith.mulf %73, %18 : vector<8x32xf32>
    %83 = arith.addf %81, %82 : vector<8x32xf32>
    %84 = arith.index_cast %20 : i32 to index
    %c0_29 = arith.constant 0 : index
    %85 = vector.load %arg8[%84, %c0_29] : memref<64x64xf32, #tpu.memory_space<vmem>>, vector<8x32xf32>
    tpu.vector_store %arg8[%84, %c0_29], %55 {strides = array<i32>} : memref<64x64xf32, #tpu.memory_space<vmem>>, vector<8x32xf32>,
    %86 = arith.index_cast %23 : i32 to index
    %c32 = arith.constant 32 : index
    %87 = vector.load %arg8[%86, %c32] : memref<64x64xf32, #tpu.memory_space<vmem>>, vector<8x32xf32>
    tpu.vector_store %arg8[%86, %c32], %83 {strides = array<i32>} : memref<64x64xf32, #tpu.memory_space<vmem>>, vector<8x32xf32>,
    %c1_i32 = arith.constant 1 : i32
    %c8_i32_30 = arith.constant 8 : i32
    %88 = arith.muli %c1_i32, %c8_i32_30 : i32
    %89 = tpu.assume_multiple %88, 8 : i32
    %c7_i32_31 = arith.constant 7 : i32
    %90 = arith.subi %c7_i32_31, %c1_i32 : i32
    %c8_i32_32 = arith.constant 8 : i32
    %91 = arith.muli %90, %c8_i32_32 : i32
    %92 = tpu.assume_multiple %91, 8 : i32
    %93 = arith.index_cast %89 : i32 to index
    %c0_33 = arith.constant 0 : index
    %94 = vector.load %arg9[%93, %c0_33] : memref<64x96xf32, #tpu.memory_space<vmem>>, vector<8x96xf32>
    %95 = arith.index_cast %92 : i32 to index
    %c0_34 = arith.constant 0 : index
    %96 = vector.load %arg10[%95, %c0_34] : memref<64x96xf32, #tpu.memory_space<vmem>>, vector<8x96xf32>
    %cst_35 = arith.constant dense<0.000000e+00> : vector<8x96xf32>
    %97 = tpu.matmul %55, %10, %cst_35 {dimension_numbers = #tpu.dot_dimension_numbers<[1], [0], [0], [1], [0, 0, 1, 1], [], []>} : vector<8x32xf32>, vector<32x96xf32>, vector<8x96xf32> -> vector<8x96xf32>
    %98 = arith.addf %97, %14 : vector<8x96xf32>
    %99 = vector.extract_strided_slice %94 {offsets = [0, 0], sizes = [8, 32], strides = [1, 1]} : vector<8x96xf32> to vector<8x32xf32>
    %100 = vector.extract_strided_slice %98 {offsets = [0, 0], sizes = [8, 32], strides = [1, 1]} : vector<8x96xf32> to vector<8x32xf32>
    %101 = arith.addf %99, %100 : vector<8x32xf32>
    %102 = arith.negf %101 : vector<8x32xf32>
    %103 = math.exp %102 : vector<8x32xf32>
    %cst_36 = arith.constant 1.000000e+00 : f32
    %104 = vector.broadcast %cst_36 : f32 to vector<8x32xf32>
    %105 = arith.addf %104, %103 : vector<8x32xf32>
    %106 = arith.divf %104, %105 : vector<8x32xf32>
    %107 = vector.extract_strided_slice %94 {offsets = [0, 32], sizes = [8, 32], strides = [1, 1]} : vector<8x96xf32> to vector<8x32xf32>
    %108 = vector.extract_strided_slice %98 {offsets = [0, 32], sizes = [8, 32], strides = [1, 1]} : vector<8x96xf32> to vector<8x32xf32>
    %109 = arith.addf %107, %108 : vector<8x32xf32>
    %110 = arith.negf %109 : vector<8x32xf32>
    %111 = math.exp %110 : vector<8x32xf32>
    %cst_37 = arith.constant 1.000000e+00 : f32
    %112 = vector.broadcast %cst_37 : f32 to vector<8x32xf32>
    %113 = arith.addf %112, %111 : vector<8x32xf32>
    %114 = arith.divf %112, %113 : vector<8x32xf32>
    %115 = vector.extract_strided_slice %94 {offsets = [0, 64], sizes = [8, 32], strides = [1, 1]} : vector<8x96xf32> to vector<8x32xf32>
    %116 = vector.extract_strided_slice %98 {offsets = [0, 64], sizes = [8, 32], strides = [1, 1]} : vector<8x96xf32> to vector<8x32xf32>
    %117 = arith.mulf %106, %116 : vector<8x32xf32>
    %118 = arith.addf %115, %117 : vector<8x32xf32>
    %119 = math.tanh %118 : vector<8x32xf32>
    %cst_38 = arith.constant 1.000000e+00 : f32
    %120 = vector.broadcast %cst_38 : f32 to vector<8x32xf32>
    %121 = arith.subf %120, %114 : vector<8x32xf32>
    %122 = arith.mulf %121, %119 : vector<8x32xf32>
    %123 = arith.mulf %114, %55 : vector<8x32xf32>
    %124 = arith.addf %122, %123 : vector<8x32xf32>
    %cst_39 = arith.constant dense<0.000000e+00> : vector<8x96xf32>
    %125 = tpu.matmul %83, %11, %cst_39 {dimension_numbers = #tpu.dot_dimension_numbers<[1], [0], [0], [1], [0, 0, 1, 1], [], []>} : vector<8x32xf32>, vector<32x96xf32>, vector<8x96xf32> -> vector<8x96xf32>
    %126 = arith.addf %125, %17 : vector<8x96xf32>
    %127 = vector.extract_strided_slice %96 {offsets = [0, 0], sizes = [8, 32], strides = [1, 1]} : vector<8x96xf32> to vector<8x32xf32>
    %128 = vector.extract_strided_slice %126 {offsets = [0, 0], sizes = [8, 32], strides = [1, 1]} : vector<8x96xf32> to vector<8x32xf32>
    %129 = arith.addf %127, %128 : vector<8x32xf32>
    %130 = arith.negf %129 : vector<8x32xf32>
    %131 = math.exp %130 : vector<8x32xf32>
    %cst_40 = arith.constant 1.000000e+00 : f32
    %132 = vector.broadcast %cst_40 : f32 to vector<8x32xf32>
    %133 = arith.addf %132, %131 : vector<8x32xf32>
    %134 = arith.divf %132, %133 : vector<8x32xf32>
    %135 = vector.extract_strided_slice %96 {offsets = [0, 32], sizes = [8, 32], strides = [1, 1]} : vector<8x96xf32> to vector<8x32xf32>
    %136 = vector.extract_strided_slice %126 {offsets = [0, 32], sizes = [8, 32], strides = [1, 1]} : vector<8x96xf32> to vector<8x32xf32>
    %137 = arith.addf %135, %136 : vector<8x32xf32>
    %138 = arith.negf %137 : vector<8x32xf32>
    %139 = math.exp %138 : vector<8x32xf32>
    %cst_41 = arith.constant 1.000000e+00 : f32
    %140 = vector.broadcast %cst_41 : f32 to vector<8x32xf32>
    %141 = arith.addf %140, %139 : vector<8x32xf32>
    %142 = arith.divf %140, %141 : vector<8x32xf32>
    %143 = vector.extract_strided_slice %96 {offsets = [0, 64], sizes = [8, 32], strides = [1, 1]} : vector<8x96xf32> to vector<8x32xf32>
    %144 = vector.extract_strided_slice %126 {offsets = [0, 64], sizes = [8, 32], strides = [1, 1]} : vector<8x96xf32> to vector<8x32xf32>
    %145 = arith.mulf %134, %144 : vector<8x32xf32>
    %146 = arith.addf %143, %145 : vector<8x32xf32>
    %147 = math.tanh %146 : vector<8x32xf32>
    %cst_42 = arith.constant 1.000000e+00 : f32
    %148 = vector.broadcast %cst_42 : f32 to vector<8x32xf32>
    %149 = arith.subf %148, %142 : vector<8x32xf32>
    %150 = arith.mulf %149, %147 : vector<8x32xf32>
    %151 = arith.mulf %142, %83 : vector<8x32xf32>
    %152 = arith.addf %150, %151 : vector<8x32xf32>
    %153 = arith.index_cast %89 : i32 to index
    %c0_43 = arith.constant 0 : index
    %154 = vector.load %arg8[%153, %c0_43] : memref<64x64xf32, #tpu.memory_space<vmem>>, vector<8x32xf32>
    tpu.vector_store %arg8[%153, %c0_43], %124 {strides = array<i32>} : memref<64x64xf32, #tpu.memory_space<vmem>>, vector<8x32xf32>,
    %155 = arith.index_cast %92 : i32 to index
    %c32_44 = arith.constant 32 : index
    %156 = vector.load %arg8[%155, %c32_44] : memref<64x64xf32, #tpu.memory_space<vmem>>, vector<8x32xf32>
    tpu.vector_store %arg8[%155, %c32_44], %152 {strides = array<i32>} : memref<64x64xf32, #tpu.memory_space<vmem>>, vector<8x32xf32>,
    %c2_i32 = arith.constant 2 : i32
    %c8_i32_45 = arith.constant 8 : i32
    %157 = arith.muli %c2_i32, %c8_i32_45 : i32
    %158 = tpu.assume_multiple %157, 8 : i32
    %c7_i32_46 = arith.constant 7 : i32
    %159 = arith.subi %c7_i32_46, %c2_i32 : i32
    %c8_i32_47 = arith.constant 8 : i32
    %160 = arith.muli %159, %c8_i32_47 : i32
    %161 = tpu.assume_multiple %160, 8 : i32
    %162 = arith.index_cast %158 : i32 to index
    %c0_48 = arith.constant 0 : index
    %163 = vector.load %arg9[%162, %c0_48] : memref<64x96xf32, #tpu.memory_space<vmem>>, vector<8x96xf32>
    %164 = arith.index_cast %161 : i32 to index
    %c0_49 = arith.constant 0 : index
    %165 = vector.load %arg10[%164, %c0_49] : memref<64x96xf32, #tpu.memory_space<vmem>>, vector<8x96xf32>
    %cst_50 = arith.constant dense<0.000000e+00> : vector<8x96xf32>
    %166 = tpu.matmul %124, %10, %cst_50 {dimension_numbers = #tpu.dot_dimension_numbers<[1], [0], [0], [1], [0, 0, 1, 1], [], []>} : vector<8x32xf32>, vector<32x96xf32>, vector<8x96xf32> -> vector<8x96xf32>
    %167 = arith.addf %166, %14 : vector<8x96xf32>
    %168 = vector.extract_strided_slice %163 {offsets = [0, 0], sizes = [8, 32], strides = [1, 1]} : vector<8x96xf32> to vector<8x32xf32>
    %169 = vector.extract_strided_slice %167 {offsets = [0, 0], sizes = [8, 32], strides = [1, 1]} : vector<8x96xf32> to vector<8x32xf32>
    %170 = arith.addf %168, %169 : vector<8x32xf32>
    %171 = arith.negf %170 : vector<8x32xf32>
    %172 = math.exp %171 : vector<8x32xf32>
    %cst_51 = arith.constant 1.000000e+00 : f32
    %173 = vector.broadcast %cst_51 : f32 to vector<8x32xf32>
    %174 = arith.addf %173, %172 : vector<8x32xf32>
    %175 = arith.divf %173, %174 : vector<8x32xf32>
    %176 = vector.extract_strided_slice %163 {offsets = [0, 32], sizes = [8, 32], strides = [1, 1]} : vector<8x96xf32> to vector<8x32xf32>
    %177 = vector.extract_strided_slice %167 {offsets = [0, 32], sizes = [8, 32], strides = [1, 1]} : vector<8x96xf32> to vector<8x32xf32>
    %178 = arith.addf %176, %177 : vector<8x32xf32>
    %179 = arith.negf %178 : vector<8x32xf32>
    %180 = math.exp %179 : vector<8x32xf32>
    %cst_52 = arith.constant 1.000000e+00 : f32
    %181 = vector.broadcast %cst_52 : f32 to vector<8x32xf32>
    %182 = arith.addf %181, %180 : vector<8x32xf32>
    %183 = arith.divf %181, %182 : vector<8x32xf32>
    %184 = vector.extract_strided_slice %163 {offsets = [0, 64], sizes = [8, 32], strides = [1, 1]} : vector<8x96xf32> to vector<8x32xf32>
    %185 = vector.extract_strided_slice %167 {offsets = [0, 64], sizes = [8, 32], strides = [1, 1]} : vector<8x96xf32> to vector<8x32xf32>
    %186 = arith.mulf %175, %185 : vector<8x32xf32>
    %187 = arith.addf %184, %186 : vector<8x32xf32>
    %188 = math.tanh %187 : vector<8x32xf32>
    %cst_53 = arith.constant 1.000000e+00 : f32
    %189 = vector.broadcast %cst_53 : f32 to vector<8x32xf32>
    %190 = arith.subf %189, %183 : vector<8x32xf32>
    %191 = arith.mulf %190, %188 : vector<8x32xf32>
    %192 = arith.mulf %183, %124 : vector<8x32xf32>
    %193 = arith.addf %191, %192 : vector<8x32xf32>
    %cst_54 = arith.constant dense<0.000000e+00> : vector<8x96xf32>
    %194 = tpu.matmul %152, %11, %cst_54 {dimension_numbers = #tpu.dot_dimension_numbers<[1], [0], [0], [1], [0, 0, 1, 1], [], []>} : vector<8x32xf32>, vector<32x96xf32>, vector<8x96xf32> -> vector<8x96xf32>
    %195 = arith.addf %194, %17 : vector<8x96xf32>
    %196 = vector.extract_strided_slice %165 {offsets = [0, 0], sizes = [8, 32], strides = [1, 1]} : vector<8x96xf32> to vector<8x32xf32>
    %197 = vector.extract_strided_slice %195 {offsets = [0, 0], sizes = [8, 32], strides = [1, 1]} : vector<8x96xf32> to vector<8x32xf32>
    %198 = arith.addf %196, %197 : vector<8x32xf32>
    %199 = arith.negf %198 : vector<8x32xf32>
    %200 = math.exp %199 : vector<8x32xf32>
    %cst_55 = arith.constant 1.000000e+00 : f32
    %201 = vector.broadcast %cst_55 : f32 to vector<8x32xf32>
    %202 = arith.addf %201, %200 : vector<8x32xf32>
    %203 = arith.divf %201, %202 : vector<8x32xf32>
    %204 = vector.extract_strided_slice %165 {offsets = [0, 32], sizes = [8, 32], strides = [1, 1]} : vector<8x96xf32> to vector<8x32xf32>
    %205 = vector.extract_strided_slice %195 {offsets = [0, 32], sizes = [8, 32], strides = [1, 1]} : vector<8x96xf32> to vector<8x32xf32>
    %206 = arith.addf %204, %205 : vector<8x32xf32>
    %207 = arith.negf %206 : vector<8x32xf32>
    %208 = math.exp %207 : vector<8x32xf32>
    %cst_56 = arith.constant 1.000000e+00 : f32
    %209 = vector.broadcast %cst_56 : f32 to vector<8x32xf32>
    %210 = arith.addf %209, %208 : vector<8x32xf32>
    %211 = arith.divf %209, %210 : vector<8x32xf32>
    %212 = vector.extract_strided_slice %165 {offsets = [0, 64], sizes = [8, 32], strides = [1, 1]} : vector<8x96xf32> to vector<8x32xf32>
    %213 = vector.extract_strided_slice %195 {offsets = [0, 64], sizes = [8, 32], strides = [1, 1]} : vector<8x96xf32> to vector<8x32xf32>
    %214 = arith.mulf %203, %213 : vector<8x32xf32>
    %215 = arith.addf %212, %214 : vector<8x32xf32>
    %216 = math.tanh %215 : vector<8x32xf32>
    %cst_57 = arith.constant 1.000000e+00 : f32
    %217 = vector.broadcast %cst_57 : f32 to vector<8x32xf32>
    %218 = arith.subf %217, %211 : vector<8x32xf32>
    %219 = arith.mulf %218, %216 : vector<8x32xf32>
    %220 = arith.mulf %211, %152 : vector<8x32xf32>
    %221 = arith.addf %219, %220 : vector<8x32xf32>
    %222 = arith.index_cast %158 : i32 to index
    %c0_58 = arith.constant 0 : index
    %223 = vector.load %arg8[%222, %c0_58] : memref<64x64xf32, #tpu.memory_space<vmem>>, vector<8x32xf32>
    tpu.vector_store %arg8[%222, %c0_58], %193 {strides = array<i32>} : memref<64x64xf32, #tpu.memory_space<vmem>>, vector<8x32xf32>,
    %224 = arith.index_cast %161 : i32 to index
    %c32_59 = arith.constant 32 : index
    %225 = vector.load %arg8[%224, %c32_59] : memref<64x64xf32, #tpu.memory_space<vmem>>, vector<8x32xf32>
    tpu.vector_store %arg8[%224, %c32_59], %221 {strides = array<i32>} : memref<64x64xf32, #tpu.memory_space<vmem>>, vector<8x32xf32>,
    %c3_i32 = arith.constant 3 : i32
    %c8_i32_60 = arith.constant 8 : i32
    %226 = arith.muli %c3_i32, %c8_i32_60 : i32
    %227 = tpu.assume_multiple %226, 8 : i32
    %c7_i32_61 = arith.constant 7 : i32
    %228 = arith.subi %c7_i32_61, %c3_i32 : i32
    %c8_i32_62 = arith.constant 8 : i32
    %229 = arith.muli %228, %c8_i32_62 : i32
    %230 = tpu.assume_multiple %229, 8 : i32
    %231 = arith.index_cast %227 : i32 to index
    %c0_63 = arith.constant 0 : index
    %232 = vector.load %arg9[%231, %c0_63] : memref<64x96xf32, #tpu.memory_space<vmem>>, vector<8x96xf32>
    %233 = arith.index_cast %230 : i32 to index
    %c0_64 = arith.constant 0 : index
    %234 = vector.load %arg10[%233, %c0_64] : memref<64x96xf32, #tpu.memory_space<vmem>>, vector<8x96xf32>
    %cst_65 = arith.constant dense<0.000000e+00> : vector<8x96xf32>
    %235 = tpu.matmul %193, %10, %cst_65 {dimension_numbers = #tpu.dot_dimension_numbers<[1], [0], [0], [1], [0, 0, 1, 1], [], []>} : vector<8x32xf32>, vector<32x96xf32>, vector<8x96xf32> -> vector<8x96xf32>
    %236 = arith.addf %235, %14 : vector<8x96xf32>
    %237 = vector.extract_strided_slice %232 {offsets = [0, 0], sizes = [8, 32], strides = [1, 1]} : vector<8x96xf32> to vector<8x32xf32>
    %238 = vector.extract_strided_slice %236 {offsets = [0, 0], sizes = [8, 32], strides = [1, 1]} : vector<8x96xf32> to vector<8x32xf32>
    %239 = arith.addf %237, %238 : vector<8x32xf32>
    %240 = arith.negf %239 : vector<8x32xf32>
    %241 = math.exp %240 : vector<8x32xf32>
    %cst_66 = arith.constant 1.000000e+00 : f32
    %242 = vector.broadcast %cst_66 : f32 to vector<8x32xf32>
    %243 = arith.addf %242, %241 : vector<8x32xf32>
    %244 = arith.divf %242, %243 : vector<8x32xf32>
    %245 = vector.extract_strided_slice %232 {offsets = [0, 32], sizes = [8, 32], strides = [1, 1]} : vector<8x96xf32> to vector<8x32xf32>
    %246 = vector.extract_strided_slice %236 {offsets = [0, 32], sizes = [8, 32], strides = [1, 1]} : vector<8x96xf32> to vector<8x32xf32>
    %247 = arith.addf %245, %246 : vector<8x32xf32>
    %248 = arith.negf %247 : vector<8x32xf32>
    %249 = math.exp %248 : vector<8x32xf32>
    %cst_67 = arith.constant 1.000000e+00 : f32
    %250 = vector.broadcast %cst_67 : f32 to vector<8x32xf32>
    %251 = arith.addf %250, %249 : vector<8x32xf32>
    %252 = arith.divf %250, %251 : vector<8x32xf32>
    %253 = vector.extract_strided_slice %232 {offsets = [0, 64], sizes = [8, 32], strides = [1, 1]} : vector<8x96xf32> to vector<8x32xf32>
    %254 = vector.extract_strided_slice %236 {offsets = [0, 64], sizes = [8, 32], strides = [1, 1]} : vector<8x96xf32> to vector<8x32xf32>
    %255 = arith.mulf %244, %254 : vector<8x32xf32>
    %256 = arith.addf %253, %255 : vector<8x32xf32>
    %257 = math.tanh %256 : vector<8x32xf32>
    %cst_68 = arith.constant 1.000000e+00 : f32
    %258 = vector.broadcast %cst_68 : f32 to vector<8x32xf32>
    %259 = arith.subf %258, %252 : vector<8x32xf32>
    %260 = arith.mulf %259, %257 : vector<8x32xf32>
    %261 = arith.mulf %252, %193 : vector<8x32xf32>
    %262 = arith.addf %260, %261 : vector<8x32xf32>
    %cst_69 = arith.constant dense<0.000000e+00> : vector<8x96xf32>
    %263 = tpu.matmul %221, %11, %cst_69 {dimension_numbers = #tpu.dot_dimension_numbers<[1], [0], [0], [1], [0, 0, 1, 1], [], []>} : vector<8x32xf32>, vector<32x96xf32>, vector<8x96xf32> -> vector<8x96xf32>
    %264 = arith.addf %263, %17 : vector<8x96xf32>
    %265 = vector.extract_strided_slice %234 {offsets = [0, 0], sizes = [8, 32], strides = [1, 1]} : vector<8x96xf32> to vector<8x32xf32>
    %266 = vector.extract_strided_slice %264 {offsets = [0, 0], sizes = [8, 32], strides = [1, 1]} : vector<8x96xf32> to vector<8x32xf32>
    %267 = arith.addf %265, %266 : vector<8x32xf32>
    %268 = arith.negf %267 : vector<8x32xf32>
    %269 = math.exp %268 : vector<8x32xf32>
    %cst_70 = arith.constant 1.000000e+00 : f32
    %270 = vector.broadcast %cst_70 : f32 to vector<8x32xf32>
    %271 = arith.addf %270, %269 : vector<8x32xf32>
    %272 = arith.divf %270, %271 : vector<8x32xf32>
    %273 = vector.extract_strided_slice %234 {offsets = [0, 32], sizes = [8, 32], strides = [1, 1]} : vector<8x96xf32> to vector<8x32xf32>
    %274 = vector.extract_strided_slice %264 {offsets = [0, 32], sizes = [8, 32], strides = [1, 1]} : vector<8x96xf32> to vector<8x32xf32>
    %275 = arith.addf %273, %274 : vector<8x32xf32>
    %276 = arith.negf %275 : vector<8x32xf32>
    %277 = math.exp %276 : vector<8x32xf32>
    %cst_71 = arith.constant 1.000000e+00 : f32
    %278 = vector.broadcast %cst_71 : f32 to vector<8x32xf32>
    %279 = arith.addf %278, %277 : vector<8x32xf32>
    %280 = arith.divf %278, %279 : vector<8x32xf32>
    %281 = vector.extract_strided_slice %234 {offsets = [0, 64], sizes = [8, 32], strides = [1, 1]} : vector<8x96xf32> to vector<8x32xf32>
    %282 = vector.extract_strided_slice %264 {offsets = [0, 64], sizes = [8, 32], strides = [1, 1]} : vector<8x96xf32> to vector<8x32xf32>
    %283 = arith.mulf %272, %282 : vector<8x32xf32>
    %284 = arith.addf %281, %283 : vector<8x32xf32>
    %285 = math.tanh %284 : vector<8x32xf32>
    %cst_72 = arith.constant 1.000000e+00 : f32
    %286 = vector.broadcast %cst_72 : f32 to vector<8x32xf32>
    %287 = arith.subf %286, %280 : vector<8x32xf32>
    %288 = arith.mulf %287, %285 : vector<8x32xf32>
    %289 = arith.mulf %280, %221 : vector<8x32xf32>
    %290 = arith.addf %288, %289 : vector<8x32xf32>
    %291 = arith.index_cast %227 : i32 to index
    %c0_73 = arith.constant 0 : index
    %292 = vector.load %arg8[%291, %c0_73] : memref<64x64xf32, #tpu.memory_space<vmem>>, vector<8x32xf32>
    tpu.vector_store %arg8[%291, %c0_73], %262 {strides = array<i32>} : memref<64x64xf32, #tpu.memory_space<vmem>>, vector<8x32xf32>,
    %293 = arith.index_cast %230 : i32 to index
    %c32_74 = arith.constant 32 : index
    %294 = vector.load %arg8[%293, %c32_74] : memref<64x64xf32, #tpu.memory_space<vmem>>, vector<8x32xf32>
    tpu.vector_store %arg8[%293, %c32_74], %290 {strides = array<i32>} : memref<64x64xf32, #tpu.memory_space<vmem>>, vector<8x32xf32>,
    %c4_i32 = arith.constant 4 : i32
    %c8_i32_75 = arith.constant 8 : i32
    %295 = arith.muli %c4_i32, %c8_i32_75 : i32
    %296 = tpu.assume_multiple %295, 8 : i32
    %c7_i32_76 = arith.constant 7 : i32
    %297 = arith.subi %c7_i32_76, %c4_i32 : i32
    %c8_i32_77 = arith.constant 8 : i32
    %298 = arith.muli %297, %c8_i32_77 : i32
    %299 = tpu.assume_multiple %298, 8 : i32
    %300 = arith.index_cast %296 : i32 to index
    %c0_78 = arith.constant 0 : index
    %301 = vector.load %arg9[%300, %c0_78] : memref<64x96xf32, #tpu.memory_space<vmem>>, vector<8x96xf32>
    %302 = arith.index_cast %299 : i32 to index
    %c0_79 = arith.constant 0 : index
    %303 = vector.load %arg10[%302, %c0_79] : memref<64x96xf32, #tpu.memory_space<vmem>>, vector<8x96xf32>
    %cst_80 = arith.constant dense<0.000000e+00> : vector<8x96xf32>
    %304 = tpu.matmul %262, %10, %cst_80 {dimension_numbers = #tpu.dot_dimension_numbers<[1], [0], [0], [1], [0, 0, 1, 1], [], []>} : vector<8x32xf32>, vector<32x96xf32>, vector<8x96xf32> -> vector<8x96xf32>
    %305 = arith.addf %304, %14 : vector<8x96xf32>
    %306 = vector.extract_strided_slice %301 {offsets = [0, 0], sizes = [8, 32], strides = [1, 1]} : vector<8x96xf32> to vector<8x32xf32>
    %307 = vector.extract_strided_slice %305 {offsets = [0, 0], sizes = [8, 32], strides = [1, 1]} : vector<8x96xf32> to vector<8x32xf32>
    %308 = arith.addf %306, %307 : vector<8x32xf32>
    %309 = arith.negf %308 : vector<8x32xf32>
    %310 = math.exp %309 : vector<8x32xf32>
    %cst_81 = arith.constant 1.000000e+00 : f32
    %311 = vector.broadcast %cst_81 : f32 to vector<8x32xf32>
    %312 = arith.addf %311, %310 : vector<8x32xf32>
    %313 = arith.divf %311, %312 : vector<8x32xf32>
    %314 = vector.extract_strided_slice %301 {offsets = [0, 32], sizes = [8, 32], strides = [1, 1]} : vector<8x96xf32> to vector<8x32xf32>
    %315 = vector.extract_strided_slice %305 {offsets = [0, 32], sizes = [8, 32], strides = [1, 1]} : vector<8x96xf32> to vector<8x32xf32>
    %316 = arith.addf %314, %315 : vector<8x32xf32>
    %317 = arith.negf %316 : vector<8x32xf32>
    %318 = math.exp %317 : vector<8x32xf32>
    %cst_82 = arith.constant 1.000000e+00 : f32
    %319 = vector.broadcast %cst_82 : f32 to vector<8x32xf32>
    %320 = arith.addf %319, %318 : vector<8x32xf32>
    %321 = arith.divf %319, %320 : vector<8x32xf32>
    %322 = vector.extract_strided_slice %301 {offsets = [0, 64], sizes = [8, 32], strides = [1, 1]} : vector<8x96xf32> to vector<8x32xf32>
    %323 = vector.extract_strided_slice %305 {offsets = [0, 64], sizes = [8, 32], strides = [1, 1]} : vector<8x96xf32> to vector<8x32xf32>
    %324 = arith.mulf %313, %323 : vector<8x32xf32>
    %325 = arith.addf %322, %324 : vector<8x32xf32>
    %326 = math.tanh %325 : vector<8x32xf32>
    %cst_83 = arith.constant 1.000000e+00 : f32
    %327 = vector.broadcast %cst_83 : f32 to vector<8x32xf32>
    %328 = arith.subf %327, %321 : vector<8x32xf32>
    %329 = arith.mulf %328, %326 : vector<8x32xf32>
    %330 = arith.mulf %321, %262 : vector<8x32xf32>
    %331 = arith.addf %329, %330 : vector<8x32xf32>
    %cst_84 = arith.constant dense<0.000000e+00> : vector<8x96xf32>
    %332 = tpu.matmul %290, %11, %cst_84 {dimension_numbers = #tpu.dot_dimension_numbers<[1], [0], [0], [1], [0, 0, 1, 1], [], []>} : vector<8x32xf32>, vector<32x96xf32>, vector<8x96xf32> -> vector<8x96xf32>
    %333 = arith.addf %332, %17 : vector<8x96xf32>
    %334 = vector.extract_strided_slice %303 {offsets = [0, 0], sizes = [8, 32], strides = [1, 1]} : vector<8x96xf32> to vector<8x32xf32>
    %335 = vector.extract_strided_slice %333 {offsets = [0, 0], sizes = [8, 32], strides = [1, 1]} : vector<8x96xf32> to vector<8x32xf32>
    %336 = arith.addf %334, %335 : vector<8x32xf32>
    %337 = arith.negf %336 : vector<8x32xf32>
    %338 = math.exp %337 : vector<8x32xf32>
    %cst_85 = arith.constant 1.000000e+00 : f32
    %339 = vector.broadcast %cst_85 : f32 to vector<8x32xf32>
    %340 = arith.addf %339, %338 : vector<8x32xf32>
    %341 = arith.divf %339, %340 : vector<8x32xf32>
    %342 = vector.extract_strided_slice %303 {offsets = [0, 32], sizes = [8, 32], strides = [1, 1]} : vector<8x96xf32> to vector<8x32xf32>
    %343 = vector.extract_strided_slice %333 {offsets = [0, 32], sizes = [8, 32], strides = [1, 1]} : vector<8x96xf32> to vector<8x32xf32>
    %344 = arith.addf %342, %343 : vector<8x32xf32>
    %345 = arith.negf %344 : vector<8x32xf32>
    %346 = math.exp %345 : vector<8x32xf32>
    %cst_86 = arith.constant 1.000000e+00 : f32
    %347 = vector.broadcast %cst_86 : f32 to vector<8x32xf32>
    %348 = arith.addf %347, %346 : vector<8x32xf32>
    %349 = arith.divf %347, %348 : vector<8x32xf32>
    %350 = vector.extract_strided_slice %303 {offsets = [0, 64], sizes = [8, 32], strides = [1, 1]} : vector<8x96xf32> to vector<8x32xf32>
    %351 = vector.extract_strided_slice %333 {offsets = [0, 64], sizes = [8, 32], strides = [1, 1]} : vector<8x96xf32> to vector<8x32xf32>
    %352 = arith.mulf %341, %351 : vector<8x32xf32>
    %353 = arith.addf %350, %352 : vector<8x32xf32>
    %354 = math.tanh %353 : vector<8x32xf32>
    %cst_87 = arith.constant 1.000000e+00 : f32
    %355 = vector.broadcast %cst_87 : f32 to vector<8x32xf32>
    %356 = arith.subf %355, %349 : vector<8x32xf32>
    %357 = arith.mulf %356, %354 : vector<8x32xf32>
    %358 = arith.mulf %349, %290 : vector<8x32xf32>
    %359 = arith.addf %357, %358 : vector<8x32xf32>
    %360 = arith.index_cast %296 : i32 to index
    %c0_88 = arith.constant 0 : index
    %361 = vector.load %arg8[%360, %c0_88] : memref<64x64xf32, #tpu.memory_space<vmem>>, vector<8x32xf32>
    tpu.vector_store %arg8[%360, %c0_88], %331 {strides = array<i32>} : memref<64x64xf32, #tpu.memory_space<vmem>>, vector<8x32xf32>,
    %362 = arith.index_cast %299 : i32 to index
    %c32_89 = arith.constant 32 : index
    %363 = vector.load %arg8[%362, %c32_89] : memref<64x64xf32, #tpu.memory_space<vmem>>, vector<8x32xf32>
    tpu.vector_store %arg8[%362, %c32_89], %359 {strides = array<i32>} : memref<64x64xf32, #tpu.memory_space<vmem>>, vector<8x32xf32>,
    %c5_i32 = arith.constant 5 : i32
    %c8_i32_90 = arith.constant 8 : i32
    %364 = arith.muli %c5_i32, %c8_i32_90 : i32
    %365 = tpu.assume_multiple %364, 8 : i32
    %c7_i32_91 = arith.constant 7 : i32
    %366 = arith.subi %c7_i32_91, %c5_i32 : i32
    %c8_i32_92 = arith.constant 8 : i32
    %367 = arith.muli %366, %c8_i32_92 : i32
    %368 = tpu.assume_multiple %367, 8 : i32
    %369 = arith.index_cast %365 : i32 to index
    %c0_93 = arith.constant 0 : index
    %370 = vector.load %arg9[%369, %c0_93] : memref<64x96xf32, #tpu.memory_space<vmem>>, vector<8x96xf32>
    %371 = arith.index_cast %368 : i32 to index
    %c0_94 = arith.constant 0 : index
    %372 = vector.load %arg10[%371, %c0_94] : memref<64x96xf32, #tpu.memory_space<vmem>>, vector<8x96xf32>
    %cst_95 = arith.constant dense<0.000000e+00> : vector<8x96xf32>
    %373 = tpu.matmul %331, %10, %cst_95 {dimension_numbers = #tpu.dot_dimension_numbers<[1], [0], [0], [1], [0, 0, 1, 1], [], []>} : vector<8x32xf32>, vector<32x96xf32>, vector<8x96xf32> -> vector<8x96xf32>
    %374 = arith.addf %373, %14 : vector<8x96xf32>
    %375 = vector.extract_strided_slice %370 {offsets = [0, 0], sizes = [8, 32], strides = [1, 1]} : vector<8x96xf32> to vector<8x32xf32>
    %376 = vector.extract_strided_slice %374 {offsets = [0, 0], sizes = [8, 32], strides = [1, 1]} : vector<8x96xf32> to vector<8x32xf32>
    %377 = arith.addf %375, %376 : vector<8x32xf32>
    %378 = arith.negf %377 : vector<8x32xf32>
    %379 = math.exp %378 : vector<8x32xf32>
    %cst_96 = arith.constant 1.000000e+00 : f32
    %380 = vector.broadcast %cst_96 : f32 to vector<8x32xf32>
    %381 = arith.addf %380, %379 : vector<8x32xf32>
    %382 = arith.divf %380, %381 : vector<8x32xf32>
    %383 = vector.extract_strided_slice %370 {offsets = [0, 32], sizes = [8, 32], strides = [1, 1]} : vector<8x96xf32> to vector<8x32xf32>
    %384 = vector.extract_strided_slice %374 {offsets = [0, 32], sizes = [8, 32], strides = [1, 1]} : vector<8x96xf32> to vector<8x32xf32>
    %385 = arith.addf %383, %384 : vector<8x32xf32>
    %386 = arith.negf %385 : vector<8x32xf32>
    %387 = math.exp %386 : vector<8x32xf32>
    %cst_97 = arith.constant 1.000000e+00 : f32
    %388 = vector.broadcast %cst_97 : f32 to vector<8x32xf32>
    %389 = arith.addf %388, %387 : vector<8x32xf32>
    %390 = arith.divf %388, %389 : vector<8x32xf32>
    %391 = vector.extract_strided_slice %370 {offsets = [0, 64], sizes = [8, 32], strides = [1, 1]} : vector<8x96xf32> to vector<8x32xf32>
    %392 = vector.extract_strided_slice %374 {offsets = [0, 64], sizes = [8, 32], strides = [1, 1]} : vector<8x96xf32> to vector<8x32xf32>
    %393 = arith.mulf %382, %392 : vector<8x32xf32>
    %394 = arith.addf %391, %393 : vector<8x32xf32>
    %395 = math.tanh %394 : vector<8x32xf32>
    %cst_98 = arith.constant 1.000000e+00 : f32
    %396 = vector.broadcast %cst_98 : f32 to vector<8x32xf32>
    %397 = arith.subf %396, %390 : vector<8x32xf32>
    %398 = arith.mulf %397, %395 : vector<8x32xf32>
    %399 = arith.mulf %390, %331 : vector<8x32xf32>
    %400 = arith.addf %398, %399 : vector<8x32xf32>
    %cst_99 = arith.constant dense<0.000000e+00> : vector<8x96xf32>
    %401 = tpu.matmul %359, %11, %cst_99 {dimension_numbers = #tpu.dot_dimension_numbers<[1], [0], [0], [1], [0, 0, 1, 1], [], []>} : vector<8x32xf32>, vector<32x96xf32>, vector<8x96xf32> -> vector<8x96xf32>
    %402 = arith.addf %401, %17 : vector<8x96xf32>
    %403 = vector.extract_strided_slice %372 {offsets = [0, 0], sizes = [8, 32], strides = [1, 1]} : vector<8x96xf32> to vector<8x32xf32>
    %404 = vector.extract_strided_slice %402 {offsets = [0, 0], sizes = [8, 32], strides = [1, 1]} : vector<8x96xf32> to vector<8x32xf32>
    %405 = arith.addf %403, %404 : vector<8x32xf32>
    %406 = arith.negf %405 : vector<8x32xf32>
    %407 = math.exp %406 : vector<8x32xf32>
    %cst_100 = arith.constant 1.000000e+00 : f32
    %408 = vector.broadcast %cst_100 : f32 to vector<8x32xf32>
    %409 = arith.addf %408, %407 : vector<8x32xf32>
    %410 = arith.divf %408, %409 : vector<8x32xf32>
    %411 = vector.extract_strided_slice %372 {offsets = [0, 32], sizes = [8, 32], strides = [1, 1]} : vector<8x96xf32> to vector<8x32xf32>
    %412 = vector.extract_strided_slice %402 {offsets = [0, 32], sizes = [8, 32], strides = [1, 1]} : vector<8x96xf32> to vector<8x32xf32>
    %413 = arith.addf %411, %412 : vector<8x32xf32>
    %414 = arith.negf %413 : vector<8x32xf32>
    %415 = math.exp %414 : vector<8x32xf32>
    %cst_101 = arith.constant 1.000000e+00 : f32
    %416 = vector.broadcast %cst_101 : f32 to vector<8x32xf32>
    %417 = arith.addf %416, %415 : vector<8x32xf32>
    %418 = arith.divf %416, %417 : vector<8x32xf32>
    %419 = vector.extract_strided_slice %372 {offsets = [0, 64], sizes = [8, 32], strides = [1, 1]} : vector<8x96xf32> to vector<8x32xf32>
    %420 = vector.extract_strided_slice %402 {offsets = [0, 64], sizes = [8, 32], strides = [1, 1]} : vector<8x96xf32> to vector<8x32xf32>
    %421 = arith.mulf %410, %420 : vector<8x32xf32>
    %422 = arith.addf %419, %421 : vector<8x32xf32>
    %423 = math.tanh %422 : vector<8x32xf32>
    %cst_102 = arith.constant 1.000000e+00 : f32
    %424 = vector.broadcast %cst_102 : f32 to vector<8x32xf32>
    %425 = arith.subf %424, %418 : vector<8x32xf32>
    %426 = arith.mulf %425, %423 : vector<8x32xf32>
    %427 = arith.mulf %418, %359 : vector<8x32xf32>
    %428 = arith.addf %426, %427 : vector<8x32xf32>
    %429 = arith.index_cast %365 : i32 to index
    %c0_103 = arith.constant 0 : index
    %430 = vector.load %arg8[%429, %c0_103] : memref<64x64xf32, #tpu.memory_space<vmem>>, vector<8x32xf32>
    tpu.vector_store %arg8[%429, %c0_103], %400 {strides = array<i32>} : memref<64x64xf32, #tpu.memory_space<vmem>>, vector<8x32xf32>,
    %431 = arith.index_cast %368 : i32 to index
    %c32_104 = arith.constant 32 : index
    %432 = vector.load %arg8[%431, %c32_104] : memref<64x64xf32, #tpu.memory_space<vmem>>, vector<8x32xf32>
    tpu.vector_store %arg8[%431, %c32_104], %428 {strides = array<i32>} : memref<64x64xf32, #tpu.memory_space<vmem>>, vector<8x32xf32>,
    %c6_i32 = arith.constant 6 : i32
    %c8_i32_105 = arith.constant 8 : i32
    %433 = arith.muli %c6_i32, %c8_i32_105 : i32
    %434 = tpu.assume_multiple %433, 8 : i32
    %c7_i32_106 = arith.constant 7 : i32
    %435 = arith.subi %c7_i32_106, %c6_i32 : i32
    %c8_i32_107 = arith.constant 8 : i32
    %436 = arith.muli %435, %c8_i32_107 : i32
    %437 = tpu.assume_multiple %436, 8 : i32
    %438 = arith.index_cast %434 : i32 to index
    %c0_108 = arith.constant 0 : index
    %439 = vector.load %arg9[%438, %c0_108] : memref<64x96xf32, #tpu.memory_space<vmem>>, vector<8x96xf32>
    %440 = arith.index_cast %437 : i32 to index
    %c0_109 = arith.constant 0 : index
    %441 = vector.load %arg10[%440, %c0_109] : memref<64x96xf32, #tpu.memory_space<vmem>>, vector<8x96xf32>
    %cst_110 = arith.constant dense<0.000000e+00> : vector<8x96xf32>
    %442 = tpu.matmul %400, %10, %cst_110 {dimension_numbers = #tpu.dot_dimension_numbers<[1], [0], [0], [1], [0, 0, 1, 1], [], []>} : vector<8x32xf32>, vector<32x96xf32>, vector<8x96xf32> -> vector<8x96xf32>
    %443 = arith.addf %442, %14 : vector<8x96xf32>
    %444 = vector.extract_strided_slice %439 {offsets = [0, 0], sizes = [8, 32], strides = [1, 1]} : vector<8x96xf32> to vector<8x32xf32>
    %445 = vector.extract_strided_slice %443 {offsets = [0, 0], sizes = [8, 32], strides = [1, 1]} : vector<8x96xf32> to vector<8x32xf32>
    %446 = arith.addf %444, %445 : vector<8x32xf32>
    %447 = arith.negf %446 : vector<8x32xf32>
    %448 = math.exp %447 : vector<8x32xf32>
    %cst_111 = arith.constant 1.000000e+00 : f32
    %449 = vector.broadcast %cst_111 : f32 to vector<8x32xf32>
    %450 = arith.addf %449, %448 : vector<8x32xf32>
    %451 = arith.divf %449, %450 : vector<8x32xf32>
    %452 = vector.extract_strided_slice %439 {offsets = [0, 32], sizes = [8, 32], strides = [1, 1]} : vector<8x96xf32> to vector<8x32xf32>
    %453 = vector.extract_strided_slice %443 {offsets = [0, 32], sizes = [8, 32], strides = [1, 1]} : vector<8x96xf32> to vector<8x32xf32>
    %454 = arith.addf %452, %453 : vector<8x32xf32>
    %455 = arith.negf %454 : vector<8x32xf32>
    %456 = math.exp %455 : vector<8x32xf32>
    %cst_112 = arith.constant 1.000000e+00 : f32
    %457 = vector.broadcast %cst_112 : f32 to vector<8x32xf32>
    %458 = arith.addf %457, %456 : vector<8x32xf32>
    %459 = arith.divf %457, %458 : vector<8x32xf32>
    %460 = vector.extract_strided_slice %439 {offsets = [0, 64], sizes = [8, 32], strides = [1, 1]} : vector<8x96xf32> to vector<8x32xf32>
    %461 = vector.extract_strided_slice %443 {offsets = [0, 64], sizes = [8, 32], strides = [1, 1]} : vector<8x96xf32> to vector<8x32xf32>
    %462 = arith.mulf %451, %461 : vector<8x32xf32>
    %463 = arith.addf %460, %462 : vector<8x32xf32>
    %464 = math.tanh %463 : vector<8x32xf32>
    %cst_113 = arith.constant 1.000000e+00 : f32
    %465 = vector.broadcast %cst_113 : f32 to vector<8x32xf32>
    %466 = arith.subf %465, %459 : vector<8x32xf32>
    %467 = arith.mulf %466, %464 : vector<8x32xf32>
    %468 = arith.mulf %459, %400 : vector<8x32xf32>
    %469 = arith.addf %467, %468 : vector<8x32xf32>
    %cst_114 = arith.constant dense<0.000000e+00> : vector<8x96xf32>
    %470 = tpu.matmul %428, %11, %cst_114 {dimension_numbers = #tpu.dot_dimension_numbers<[1], [0], [0], [1], [0, 0, 1, 1], [], []>} : vector<8x32xf32>, vector<32x96xf32>, vector<8x96xf32> -> vector<8x96xf32>
    %471 = arith.addf %470, %17 : vector<8x96xf32>
    %472 = vector.extract_strided_slice %441 {offsets = [0, 0], sizes = [8, 32], strides = [1, 1]} : vector<8x96xf32> to vector<8x32xf32>
    %473 = vector.extract_strided_slice %471 {offsets = [0, 0], sizes = [8, 32], strides = [1, 1]} : vector<8x96xf32> to vector<8x32xf32>
    %474 = arith.addf %472, %473 : vector<8x32xf32>
    %475 = arith.negf %474 : vector<8x32xf32>
    %476 = math.exp %475 : vector<8x32xf32>
    %cst_115 = arith.constant 1.000000e+00 : f32
    %477 = vector.broadcast %cst_115 : f32 to vector<8x32xf32>
    %478 = arith.addf %477, %476 : vector<8x32xf32>
    %479 = arith.divf %477, %478 : vector<8x32xf32>
    %480 = vector.extract_strided_slice %441 {offsets = [0, 32], sizes = [8, 32], strides = [1, 1]} : vector<8x96xf32> to vector<8x32xf32>
    %481 = vector.extract_strided_slice %471 {offsets = [0, 32], sizes = [8, 32], strides = [1, 1]} : vector<8x96xf32> to vector<8x32xf32>
    %482 = arith.addf %480, %481 : vector<8x32xf32>
    %483 = arith.negf %482 : vector<8x32xf32>
    %484 = math.exp %483 : vector<8x32xf32>
    %cst_116 = arith.constant 1.000000e+00 : f32
    %485 = vector.broadcast %cst_116 : f32 to vector<8x32xf32>
    %486 = arith.addf %485, %484 : vector<8x32xf32>
    %487 = arith.divf %485, %486 : vector<8x32xf32>
    %488 = vector.extract_strided_slice %441 {offsets = [0, 64], sizes = [8, 32], strides = [1, 1]} : vector<8x96xf32> to vector<8x32xf32>
    %489 = vector.extract_strided_slice %471 {offsets = [0, 64], sizes = [8, 32], strides = [1, 1]} : vector<8x96xf32> to vector<8x32xf32>
    %490 = arith.mulf %479, %489 : vector<8x32xf32>
    %491 = arith.addf %488, %490 : vector<8x32xf32>
    %492 = math.tanh %491 : vector<8x32xf32>
    %cst_117 = arith.constant 1.000000e+00 : f32
    %493 = vector.broadcast %cst_117 : f32 to vector<8x32xf32>
    %494 = arith.subf %493, %487 : vector<8x32xf32>
    %495 = arith.mulf %494, %492 : vector<8x32xf32>
    %496 = arith.mulf %487, %428 : vector<8x32xf32>
    %497 = arith.addf %495, %496 : vector<8x32xf32>
    %498 = arith.index_cast %434 : i32 to index
    %c0_118 = arith.constant 0 : index
    %499 = vector.load %arg8[%498, %c0_118] : memref<64x64xf32, #tpu.memory_space<vmem>>, vector<8x32xf32>
    tpu.vector_store %arg8[%498, %c0_118], %469 {strides = array<i32>} : memref<64x64xf32, #tpu.memory_space<vmem>>, vector<8x32xf32>,
    %500 = arith.index_cast %437 : i32 to index
    %c32_119 = arith.constant 32 : index
    %501 = vector.load %arg8[%500, %c32_119] : memref<64x64xf32, #tpu.memory_space<vmem>>, vector<8x32xf32>
    tpu.vector_store %arg8[%500, %c32_119], %497 {strides = array<i32>} : memref<64x64xf32, #tpu.memory_space<vmem>>, vector<8x32xf32>,
    %c7_i32_120 = arith.constant 7 : i32
    %c8_i32_121 = arith.constant 8 : i32
    %502 = arith.muli %c7_i32_120, %c8_i32_121 : i32
    %503 = tpu.assume_multiple %502, 8 : i32
    %c7_i32_122 = arith.constant 7 : i32
    %504 = arith.subi %c7_i32_122, %c7_i32_120 : i32
    %c8_i32_123 = arith.constant 8 : i32
    %505 = arith.muli %504, %c8_i32_123 : i32
    %506 = tpu.assume_multiple %505, 8 : i32
    %507 = arith.index_cast %503 : i32 to index
    %c0_124 = arith.constant 0 : index
    %508 = vector.load %arg9[%507, %c0_124] : memref<64x96xf32, #tpu.memory_space<vmem>>, vector<8x96xf32>
    %509 = arith.index_cast %506 : i32 to index
    %c0_125 = arith.constant 0 : index
    %510 = vector.load %arg10[%509, %c0_125] : memref<64x96xf32, #tpu.memory_space<vmem>>, vector<8x96xf32>
    %cst_126 = arith.constant dense<0.000000e+00> : vector<8x96xf32>
    %511 = tpu.matmul %469, %10, %cst_126 {dimension_numbers = #tpu.dot_dimension_numbers<[1], [0], [0], [1], [0, 0, 1, 1], [], []>} : vector<8x32xf32>, vector<32x96xf32>, vector<8x96xf32> -> vector<8x96xf32>
    %512 = arith.addf %511, %14 : vector<8x96xf32>
    %513 = vector.extract_strided_slice %508 {offsets = [0, 0], sizes = [8, 32], strides = [1, 1]} : vector<8x96xf32> to vector<8x32xf32>
    %514 = vector.extract_strided_slice %512 {offsets = [0, 0], sizes = [8, 32], strides = [1, 1]} : vector<8x96xf32> to vector<8x32xf32>
    %515 = arith.addf %513, %514 : vector<8x32xf32>
    %516 = arith.negf %515 : vector<8x32xf32>
    %517 = math.exp %516 : vector<8x32xf32>
    %cst_127 = arith.constant 1.000000e+00 : f32
    %518 = vector.broadcast %cst_127 : f32 to vector<8x32xf32>
    %519 = arith.addf %518, %517 : vector<8x32xf32>
    %520 = arith.divf %518, %519 : vector<8x32xf32>
    %521 = vector.extract_strided_slice %508 {offsets = [0, 32], sizes = [8, 32], strides = [1, 1]} : vector<8x96xf32> to vector<8x32xf32>
    %522 = vector.extract_strided_slice %512 {offsets = [0, 32], sizes = [8, 32], strides = [1, 1]} : vector<8x96xf32> to vector<8x32xf32>
    %523 = arith.addf %521, %522 : vector<8x32xf32>
    %524 = arith.negf %523 : vector<8x32xf32>
    %525 = math.exp %524 : vector<8x32xf32>
    %cst_128 = arith.constant 1.000000e+00 : f32
    %526 = vector.broadcast %cst_128 : f32 to vector<8x32xf32>
    %527 = arith.addf %526, %525 : vector<8x32xf32>
    %528 = arith.divf %526, %527 : vector<8x32xf32>
    %529 = vector.extract_strided_slice %508 {offsets = [0, 64], sizes = [8, 32], strides = [1, 1]} : vector<8x96xf32> to vector<8x32xf32>
    %530 = vector.extract_strided_slice %512 {offsets = [0, 64], sizes = [8, 32], strides = [1, 1]} : vector<8x96xf32> to vector<8x32xf32>
    %531 = arith.mulf %520, %530 : vector<8x32xf32>
    %532 = arith.addf %529, %531 : vector<8x32xf32>
    %533 = math.tanh %532 : vector<8x32xf32>
    %cst_129 = arith.constant 1.000000e+00 : f32
    %534 = vector.broadcast %cst_129 : f32 to vector<8x32xf32>
    %535 = arith.subf %534, %528 : vector<8x32xf32>
    %536 = arith.mulf %535, %533 : vector<8x32xf32>
    %537 = arith.mulf %528, %469 : vector<8x32xf32>
    %538 = arith.addf %536, %537 : vector<8x32xf32>
    %cst_130 = arith.constant dense<0.000000e+00> : vector<8x96xf32>
    %539 = tpu.matmul %497, %11, %cst_130 {dimension_numbers = #tpu.dot_dimension_numbers<[1], [0], [0], [1], [0, 0, 1, 1], [], []>} : vector<8x32xf32>, vector<32x96xf32>, vector<8x96xf32> -> vector<8x96xf32>
    %540 = arith.addf %539, %17 : vector<8x96xf32>
    %541 = vector.extract_strided_slice %510 {offsets = [0, 0], sizes = [8, 32], strides = [1, 1]} : vector<8x96xf32> to vector<8x32xf32>
    %542 = vector.extract_strided_slice %540 {offsets = [0, 0], sizes = [8, 32], strides = [1, 1]} : vector<8x96xf32> to vector<8x32xf32>
    %543 = arith.addf %541, %542 : vector<8x32xf32>
    %544 = arith.negf %543 : vector<8x32xf32>
    %545 = math.exp %544 : vector<8x32xf32>
    %cst_131 = arith.constant 1.000000e+00 : f32
    %546 = vector.broadcast %cst_131 : f32 to vector<8x32xf32>
    %547 = arith.addf %546, %545 : vector<8x32xf32>
    %548 = arith.divf %546, %547 : vector<8x32xf32>
    %549 = vector.extract_strided_slice %510 {offsets = [0, 32], sizes = [8, 32], strides = [1, 1]} : vector<8x96xf32> to vector<8x32xf32>
    %550 = vector.extract_strided_slice %540 {offsets = [0, 32], sizes = [8, 32], strides = [1, 1]} : vector<8x96xf32> to vector<8x32xf32>
    %551 = arith.addf %549, %550 : vector<8x32xf32>
    %552 = arith.negf %551 : vector<8x32xf32>
    %553 = math.exp %552 : vector<8x32xf32>
    %cst_132 = arith.constant 1.000000e+00 : f32
    %554 = vector.broadcast %cst_132 : f32 to vector<8x32xf32>
    %555 = arith.addf %554, %553 : vector<8x32xf32>
    %556 = arith.divf %554, %555 : vector<8x32xf32>
    %557 = vector.extract_strided_slice %510 {offsets = [0, 64], sizes = [8, 32], strides = [1, 1]} : vector<8x96xf32> to vector<8x32xf32>
    %558 = vector.extract_strided_slice %540 {offsets = [0, 64], sizes = [8, 32], strides = [1, 1]} : vector<8x96xf32> to vector<8x32xf32>
    %559 = arith.mulf %548, %558 : vector<8x32xf32>
    %560 = arith.addf %557, %559 : vector<8x32xf32>
    %561 = math.tanh %560 : vector<8x32xf32>
    %cst_133 = arith.constant 1.000000e+00 : f32
    %562 = vector.broadcast %cst_133 : f32 to vector<8x32xf32>
    %563 = arith.subf %562, %556 : vector<8x32xf32>
    %564 = arith.mulf %563, %561 : vector<8x32xf32>
    %565 = arith.mulf %556, %497 : vector<8x32xf32>
    %566 = arith.addf %564, %565 : vector<8x32xf32>
    %567 = arith.index_cast %503 : i32 to index
    %c0_134 = arith.constant 0 : index
    %568 = vector.load %arg8[%567, %c0_134] : memref<64x64xf32, #tpu.memory_space<vmem>>, vector<8x32xf32>
    tpu.vector_store %arg8[%567, %c0_134], %538 {strides = array<i32>} : memref<64x64xf32, #tpu.memory_space<vmem>>, vector<8x32xf32>,
    %569 = arith.index_cast %506 : i32 to index
    %c32_135 = arith.constant 32 : index
    %570 = vector.load %arg8[%569, %c32_135] : memref<64x64xf32, #tpu.memory_space<vmem>>, vector<8x32xf32>
    tpu.vector_store %arg8[%569, %c32_135], %566 {strides = array<i32>} : memref<64x64xf32, #tpu.memory_space<vmem>>, vector<8x32xf32>,
    %c8_i32_136 = arith.constant 8 : i32
    return
  }
  func.func @transform_0(%arg0: i32) -> (i32, i32) {
    %c0_i32 = arith.constant 0 : i32
    %c0_i32_0 = arith.constant 0 : i32
    %c0_i32_1 = arith.constant 0 : i32
    return %c0_i32, %c0_i32_0 : i32, i32
  }
  func.func @transform_1(%arg0: i32) -> (i32, i32) {
    %c0_i32 = arith.constant 0 : i32
    %c0_i32_0 = arith.constant 0 : i32
    %c0_i32_1 = arith.constant 0 : i32
    return %c0_i32, %c0_i32_0 : i32, i32
  }
  func.func @transform_2(%arg0: i32) -> (i32, i32) {
    %c0_i32 = arith.constant 0 : i32
    %c0_i32_0 = arith.constant 0 : i32
    %c0_i32_1 = arith.constant 0 : i32
    return %c0_i32, %c0_i32_0 : i32, i32
  }
  func.func @transform_3(%arg0: i32) -> (i32, i32) {
    %c0_i32 = arith.constant 0 : i32
    %c0_i32_0 = arith.constant 0 : i32
    %c0_i32_1 = arith.constant 0 : i32
    return %c0_i32, %c0_i32_0 : i32, i32
  }
  func.func @transform_4(%arg0: i32) -> (i32, i32) {
    %c0_i32 = arith.constant 0 : i32
    %c0_i32_0 = arith.constant 0 : i32
    %c0_i32_1 = arith.constant 0 : i32
    return %c0_i32, %c0_i32_0 : i32, i32
  }
  func.func @transform_5(%arg0: i32) -> (i32, i32) {
    %c0_i32 = arith.constant 0 : i32
    %c0_i32_0 = arith.constant 0 : i32
    %c0_i32_1 = arith.constant 0 : i32
    return %c0_i32, %c0_i32_0 : i32, i32
  }
  func.func @transform_6(%arg0: i32) -> (i32, i32) {
    %c0_i32 = arith.constant 0 : i32
    %c0_i32_0 = arith.constant 0 : i32
    %c0_i32_1 = arith.constant 0 : i32
    return %c0_i32, %c0_i32_0 : i32, i32
  }
  func.func @transform_7(%arg0: i32) -> (i32, i32) {
    %c0_i32 = arith.constant 0 : i32
    %c0_i32_0 = arith.constant 0 : i32
    %c0_i32_1 = arith.constant 0 : i32
    return %c0_i32, %c0_i32_0 : i32, i32
  }
}

module attributes {stable_mosaic.version = 11 : i64} {
  func.func @_bigru_layer_kernel(%arg0: i32, %arg1: memref<64x16xf32, #tpu.memory_space<vmem>>, %arg2: memref<16x192xf32, #tpu.memory_space<vmem>>, %arg3: memref<1x192xf32, #tpu.memory_space<vmem>>, %arg4: memref<32x96xf32, #tpu.memory_space<vmem>>, %arg5: memref<32x96xf32, #tpu.memory_space<vmem>>, %arg6: memref<1x96xf32, #tpu.memory_space<vmem>>, %arg7: memref<1x96xf32, #tpu.memory_space<vmem>>, %arg8: memref<64x64xf32, #tpu.memory_space<vmem>>, %arg9: memref<64x96xf32, #tpu.memory_space<vmem>>, %arg10: memref<64x96xf32, #tpu.memory_space<vmem>>) attributes {dimension_semantics = [#tpu.dimension_semantics<arbitrary>], iteration_bounds = array<i64: 1>, scalar_prefetch = 0 : i64, scratch_operands = 2 : i64, tpu.core_type = #tpu.core_type<tc>, window_params = [{pipeline_mode = #tpu.pipeline_mode<synchronous>, transform_indices = @transform_0, window_bounds = array<i64: 64, 16>}, {pipeline_mode = #tpu.pipeline_mode<synchronous>, transform_indices = @transform_1, window_bounds = array<i64: 16, 192>}, {pipeline_mode = #tpu.pipeline_mode<synchronous>, transform_indices = @transform_2, window_bounds = array<i64: 1, 192>}, {pipeline_mode = #tpu.pipeline_mode<synchronous>, transform_indices = @transform_3, window_bounds = array<i64: 32, 96>}, {pipeline_mode = #tpu.pipeline_mode<synchronous>, transform_indices = @transform_4, window_bounds = array<i64: 32, 96>}, {pipeline_mode = #tpu.pipeline_mode<synchronous>, transform_indices = @transform_5, window_bounds = array<i64: 1, 96>}, {pipeline_mode = #tpu.pipeline_mode<synchronous>, transform_indices = @transform_6, window_bounds = array<i64: 1, 96>}, {pipeline_mode = #tpu.pipeline_mode<synchronous>, transform_indices = @transform_7, window_bounds = array<i64: 64, 64>}]} {
    %c0 = arith.constant 0 : index
    %c0_0 = arith.constant 0 : index
    %0 = vector.load %arg1[%c0, %c0_0] : memref<64x16xf32, #tpu.memory_space<vmem>>, vector<64x16xf32>
    %c0_1 = arith.constant 0 : index
    %c0_2 = arith.constant 0 : index
    %1 = vector.load %arg2[%c0_1, %c0_2] : memref<16x192xf32, #tpu.memory_space<vmem>>, vector<16x192xf32>
    %cst = arith.constant dense<0.000000e+00> : vector<64x192xf32>
    %2 = tpu.matmul %0, %1, %cst {dimension_numbers = #tpu.dot_dimension_numbers<[1], [0], [0], [1], [0, 0, 1, 1], [], []>} : vector<64x16xf32>, vector<16x192xf32>, vector<64x192xf32> -> vector<64x192xf32>
    %c0_3 = arith.constant 0 : index
    %c0_4 = arith.constant 0 : index
    %3 = vector.load %arg3[%c0_3, %c0_4] : memref<1x192xf32, #tpu.memory_space<vmem>>, vector<1x192xf32>
    %4 = vector.broadcast %3 : vector<1x192xf32> to vector<64x192xf32>
    %5 = arith.addf %2, %4 : vector<64x192xf32>
    %6 = vector.extract_strided_slice %5 {offsets = [0, 0], sizes = [64, 96], strides = [1, 1]} : vector<64x192xf32> to vector<64x96xf32>
    %c0_5 = arith.constant 0 : index
    %c0_6 = arith.constant 0 : index
    %7 = vector.load %arg9[%c0_5, %c0_6] : memref<64x96xf32, #tpu.memory_space<vmem>>, vector<64x96xf32>
    tpu.vector_store %arg9[%c0_5, %c0_6], %6 {strides = array<i32>} : memref<64x96xf32, #tpu.memory_space<vmem>>, vector<64x96xf32>,
    %8 = vector.extract_strided_slice %5 {offsets = [0, 96], sizes = [64, 96], strides = [1, 1]} : vector<64x192xf32> to vector<64x96xf32>
    %c0_7 = arith.constant 0 : index
    %c0_8 = arith.constant 0 : index
    %9 = vector.load %arg10[%c0_7, %c0_8] : memref<64x96xf32, #tpu.memory_space<vmem>>, vector<64x96xf32>
    tpu.vector_store %arg10[%c0_7, %c0_8], %8 {strides = array<i32>} : memref<64x96xf32, #tpu.memory_space<vmem>>, vector<64x96xf32>,
    %c0_9 = arith.constant 0 : index
    %c0_10 = arith.constant 0 : index
    %10 = vector.load %arg4[%c0_9, %c0_10] : memref<32x96xf32, #tpu.memory_space<vmem>>, vector<32x96xf32>
    %c0_11 = arith.constant 0 : index
    %c0_12 = arith.constant 0 : index
    %11 = vector.load %arg5[%c0_11, %c0_12] : memref<32x96xf32, #tpu.memory_space<vmem>>, vector<32x96xf32>
    %c0_13 = arith.constant 0 : index
    %c0_14 = arith.constant 0 : index
    %12 = vector.load %arg6[%c0_13, %c0_14] : memref<1x96xf32, #tpu.memory_space<vmem>>, vector<1x96xf32>
    %13 = vector.shape_cast %12 : vector<1x96xf32> to vector<1x96xf32>
    %14 = vector.broadcast %13 : vector<1x96xf32> to vector<8x96xf32>
    %c0_15 = arith.constant 0 : index
    %c0_16 = arith.constant 0 : index
    %15 = vector.load %arg7[%c0_15, %c0_16] : memref<1x96xf32, #tpu.memory_space<vmem>>, vector<1x96xf32>
    %16 = vector.shape_cast %15 : vector<1x96xf32> to vector<1x96xf32>
    %17 = vector.broadcast %16 : vector<1x96xf32> to vector<8x96xf32>
    %cst_17 = arith.constant 0.000000e+00 : f32
    %18 = vector.broadcast %cst_17 : f32 to vector<8x32xf32>
    %c0_i32 = arith.constant 0 : i32
    %c8_i32 = arith.constant 8 : i32
    %19 = arith.muli %c0_i32, %c8_i32 : i32
    %20 = tpu.assume_multiple %19, 8 : i32
    %c7_i32 = arith.constant 7 : i32
    %21 = arith.subi %c7_i32, %c0_i32 : i32
    %c8_i32_18 = arith.constant 8 : i32
    %22 = arith.muli %21, %c8_i32_18 : i32
    %23 = tpu.assume_multiple %22, 8 : i32
    %24 = arith.index_cast %20 : i32 to index
    %c0_19 = arith.constant 0 : index
    %25 = vector.load %arg9[%24, %c0_19] : memref<64x96xf32, #tpu.memory_space<vmem>>, vector<8x96xf32>
    %26 = arith.index_cast %23 : i32 to index
    %c0_20 = arith.constant 0 : index
    %27 = vector.load %arg10[%26, %c0_20] : memref<64x96xf32, #tpu.memory_space<vmem>>, vector<8x96xf32>
    %cst_21 = arith.constant dense<0.000000e+00> : vector<8x96xf32>
    %28 = tpu.matmul %18, %10, %cst_21 {dimension_numbers = #tpu.dot_dimension_numbers<[1], [0], [0], [1], [0, 0, 1, 1], [], []>} : vector<8x32xf32>, vector<32x96xf32>, vector<8x96xf32> -> vector<8x96xf32>
    %29 = arith.addf %28, %14 : vector<8x96xf32>
    %30 = vector.extract_strided_slice %25 {offsets = [0, 0], sizes = [8, 32], strides = [1, 1]} : vector<8x96xf32> to vector<8x32xf32>
    %31 = vector.extract_strided_slice %29 {offsets = [0, 0], sizes = [8, 32], strides = [1, 1]} : vector<8x96xf32> to vector<8x32xf32>
    %32 = arith.addf %30, %31 : vector<8x32xf32>
    %33 = arith.negf %32 : vector<8x32xf32>
    %34 = math.exp %33 : vector<8x32xf32>
    %cst_22 = arith.constant 1.000000e+00 : f32
    %35 = vector.broadcast %cst_22 : f32 to vector<8x32xf32>
    %36 = arith.addf %35, %34 : vector<8x32xf32>
    %37 = arith.divf %35, %36 : vector<8x32xf32>
    %38 = vector.extract_strided_slice %25 {offsets = [0, 32], sizes = [8, 32], strides = [1, 1]} : vector<8x96xf32> to vector<8x32xf32>
    %39 = vector.extract_strided_slice %29 {offsets = [0, 32], sizes = [8, 32], strides = [1, 1]} : vector<8x96xf32> to vector<8x32xf32>
    %40 = arith.addf %38, %39 : vector<8x32xf32>
    %41 = arith.negf %40 : vector<8x32xf32>
    %42 = math.exp %41 : vector<8x32xf32>
    %cst_23 = arith.constant 1.000000e+00 : f32
    %43 = vector.broadcast %cst_23 : f32 to vector<8x32xf32>
    %44 = arith.addf %43, %42 : vector<8x32xf32>
    %45 = arith.divf %43, %44 : vector<8x32xf32>
    %46 = vector.extract_strided_slice %25 {offsets = [0, 64], sizes = [8, 32], strides = [1, 1]} : vector<8x96xf32> to vector<8x32xf32>
    %47 = vector.extract_strided_slice %29 {offsets = [0, 64], sizes = [8, 32], strides = [1, 1]} : vector<8x96xf32> to vector<8x32xf32>
    %48 = arith.mulf %37, %47 : vector<8x32xf32>
    %49 = arith.addf %46, %48 : vector<8x32xf32>
    %50 = math.tanh %49 : vector<8x32xf32>
    %cst_24 = arith.constant 1.000000e+00 : f32
    %51 = vector.broadcast %cst_24 : f32 to vector<8x32xf32>
    %52 = arith.subf %51, %45 : vector<8x32xf32>
    %53 = arith.mulf %52, %50 : vector<8x32xf32>
    %54 = arith.mulf %45, %18 : vector<8x32xf32>
    %55 = arith.addf %53, %54 : vector<8x32xf32>
    %cst_25 = arith.constant dense<0.000000e+00> : vector<8x96xf32>
    %56 = tpu.matmul %18, %11, %cst_25 {dimension_numbers = #tpu.dot_dimension_numbers<[1], [0], [0], [1], [0, 0, 1, 1], [], []>} : vector<8x32xf32>, vector<32x96xf32>, vector<8x96xf32> -> vector<8x96xf32>
    %57 = arith.addf %56, %17 : vector<8x96xf32>
    %58 = vector.extract_strided_slice %27 {offsets = [0, 0], sizes = [8, 32], strides = [1, 1]} : vector<8x96xf32> to vector<8x32xf32>
    %59 = vector.extract_strided_slice %57 {offsets = [0, 0], sizes = [8, 32], strides = [1, 1]} : vector<8x96xf32> to vector<8x32xf32>
    %60 = arith.addf %58, %59 : vector<8x32xf32>
    %61 = arith.negf %60 : vector<8x32xf32>
    %62 = math.exp %61 : vector<8x32xf32>
    %cst_26 = arith.constant 1.000000e+00 : f32
    %63 = vector.broadcast %cst_26 : f32 to vector<8x32xf32>
    %64 = arith.addf %63, %62 : vector<8x32xf32>
    %65 = arith.divf %63, %64 : vector<8x32xf32>
    %66 = vector.extract_strided_slice %27 {offsets = [0, 32], sizes = [8, 32], strides = [1, 1]} : vector<8x96xf32> to vector<8x32xf32>
    %67 = vector.extract_strided_slice %57 {offsets = [0, 32], sizes = [8, 32], strides = [1, 1]} : vector<8x96xf32> to vector<8x32xf32>
    %68 = arith.addf %66, %67 : vector<8x32xf32>
    %69 = arith.negf %68 : vector<8x32xf32>
    %70 = math.exp %69 : vector<8x32xf32>
    %cst_27 = arith.constant 1.000000e+00 : f32
    %71 = vector.broadcast %cst_27 : f32 to vector<8x32xf32>
    %72 = arith.addf %71, %70 : vector<8x32xf32>
    %73 = arith.divf %71, %72 : vector<8x32xf32>
    %74 = vector.extract_strided_slice %27 {offsets = [0, 64], sizes = [8, 32], strides = [1, 1]} : vector<8x96xf32> to vector<8x32xf32>
    %75 = vector.extract_strided_slice %57 {offsets = [0, 64], sizes = [8, 32], strides = [1, 1]} : vector<8x96xf32> to vector<8x32xf32>
    %76 = arith.mulf %65, %75 : vector<8x32xf32>
    %77 = arith.addf %74, %76 : vector<8x32xf32>
    %78 = math.tanh %77 : vector<8x32xf32>
    %cst_28 = arith.constant 1.000000e+00 : f32
    %79 = vector.broadcast %cst_28 : f32 to vector<8x32xf32>
    %80 = arith.subf %79, %73 : vector<8x32xf32>
    %81 = arith.mulf %80, %78 : vector<8x32xf32>
    %82 = arith.mulf %73, %18 : vector<8x32xf32>
    %83 = arith.addf %81, %82 : vector<8x32xf32>
    %84 = arith.index_cast %20 : i32 to index
    %c0_29 = arith.constant 0 : index
    %85 = vector.load %arg8[%84, %c0_29] : memref<64x64xf32, #tpu.memory_space<vmem>>, vector<8x32xf32>
    tpu.vector_store %arg8[%84, %c0_29], %55 {strides = array<i32>} : memref<64x64xf32, #tpu.memory_space<vmem>>, vector<8x32xf32>,
    %86 = arith.index_cast %23 : i32 to index
    %c32 = arith.constant 32 : index
    %87 = vector.load %arg8[%86, %c32] : memref<64x64xf32, #tpu.memory_space<vmem>>, vector<8x32xf32>
    tpu.vector_store %arg8[%86, %c32], %83 {strides = array<i32>} : memref<64x64xf32, #tpu.memory_space<vmem>>, vector<8x32xf32>,
    %c1_i32 = arith.constant 1 : i32
    %c8_i32_30 = arith.constant 8 : i32
    %88 = arith.muli %c1_i32, %c8_i32_30 : i32
    %89 = tpu.assume_multiple %88, 8 : i32
    %c7_i32_31 = arith.constant 7 : i32
    %90 = arith.subi %c7_i32_31, %c1_i32 : i32
    %c8_i32_32 = arith.constant 8 : i32
    %91 = arith.muli %90, %c8_i32_32 : i32
    %92 = tpu.assume_multiple %91, 8 : i32
    %93 = arith.index_cast %89 : i32 to index
    %c0_33 = arith.constant 0 : index
    %94 = vector.load %arg9[%93, %c0_33] : memref<64x96xf32, #tpu.memory_space<vmem>>, vector<8x96xf32>
    %95 = arith.index_cast %92 : i32 to index
    %c0_34 = arith.constant 0 : index
    %96 = vector.load %arg10[%95, %c0_34] : memref<64x96xf32, #tpu.memory_space<vmem>>, vector<8x96xf32>
    %cst_35 = arith.constant dense<0.000000e+00> : vector<8x96xf32>
    %97 = tpu.matmul %55, %10, %cst_35 {dimension_numbers = #tpu.dot_dimension_numbers<[1], [0], [0], [1], [0, 0, 1, 1], [], []>} : vector<8x32xf32>, vector<32x96xf32>, vector<8x96xf32> -> vector<8x96xf32>
    %98 = arith.addf %97, %14 : vector<8x96xf32>
    %99 = vector.extract_strided_slice %94 {offsets = [0, 0], sizes = [8, 32], strides = [1, 1]} : vector<8x96xf32> to vector<8x32xf32>
    %100 = vector.extract_strided_slice %98 {offsets = [0, 0], sizes = [8, 32], strides = [1, 1]} : vector<8x96xf32> to vector<8x32xf32>
    %101 = arith.addf %99, %100 : vector<8x32xf32>
    %102 = arith.negf %101 : vector<8x32xf32>
    %103 = math.exp %102 : vector<8x32xf32>
    %cst_36 = arith.constant 1.000000e+00 : f32
    %104 = vector.broadcast %cst_36 : f32 to vector<8x32xf32>
    %105 = arith.addf %104, %103 : vector<8x32xf32>
    %106 = arith.divf %104, %105 : vector<8x32xf32>
    %107 = vector.extract_strided_slice %94 {offsets = [0, 32], sizes = [8, 32], strides = [1, 1]} : vector<8x96xf32> to vector<8x32xf32>
    %108 = vector.extract_strided_slice %98 {offsets = [0, 32], sizes = [8, 32], strides = [1, 1]} : vector<8x96xf32> to vector<8x32xf32>
    %109 = arith.addf %107, %108 : vector<8x32xf32>
    %110 = arith.negf %109 : vector<8x32xf32>
    %111 = math.exp %110 : vector<8x32xf32>
    %cst_37 = arith.constant 1.000000e+00 : f32
    %112 = vector.broadcast %cst_37 : f32 to vector<8x32xf32>
    %113 = arith.addf %112, %111 : vector<8x32xf32>
    %114 = arith.divf %112, %113 : vector<8x32xf32>
    %115 = vector.extract_strided_slice %94 {offsets = [0, 64], sizes = [8, 32], strides = [1, 1]} : vector<8x96xf32> to vector<8x32xf32>
    %116 = vector.extract_strided_slice %98 {offsets = [0, 64], sizes = [8, 32], strides = [1, 1]} : vector<8x96xf32> to vector<8x32xf32>
    %117 = arith.mulf %106, %116 : vector<8x32xf32>
    %118 = arith.addf %115, %117 : vector<8x32xf32>
    %119 = math.tanh %118 : vector<8x32xf32>
    %cst_38 = arith.constant 1.000000e+00 : f32
    %120 = vector.broadcast %cst_38 : f32 to vector<8x32xf32>
    %121 = arith.subf %120, %114 : vector<8x32xf32>
    %122 = arith.mulf %121, %119 : vector<8x32xf32>
    %123 = arith.mulf %114, %55 : vector<8x32xf32>
    %124 = arith.addf %122, %123 : vector<8x32xf32>
    %cst_39 = arith.constant dense<0.000000e+00> : vector<8x96xf32>
    %125 = tpu.matmul %83, %11, %cst_39 {dimension_numbers = #tpu.dot_dimension_numbers<[1], [0], [0], [1], [0, 0, 1, 1], [], []>} : vector<8x32xf32>, vector<32x96xf32>, vector<8x96xf32> -> vector<8x96xf32>
    %126 = arith.addf %125, %17 : vector<8x96xf32>
    %127 = vector.extract_strided_slice %96 {offsets = [0, 0], sizes = [8, 32], strides = [1, 1]} : vector<8x96xf32> to vector<8x32xf32>
    %128 = vector.extract_strided_slice %126 {offsets = [0, 0], sizes = [8, 32], strides = [1, 1]} : vector<8x96xf32> to vector<8x32xf32>
    %129 = arith.addf %127, %128 : vector<8x32xf32>
    %130 = arith.negf %129 : vector<8x32xf32>
    %131 = math.exp %130 : vector<8x32xf32>
    %cst_40 = arith.constant 1.000000e+00 : f32
    %132 = vector.broadcast %cst_40 : f32 to vector<8x32xf32>
    %133 = arith.addf %132, %131 : vector<8x32xf32>
    %134 = arith.divf %132, %133 : vector<8x32xf32>
    %135 = vector.extract_strided_slice %96 {offsets = [0, 32], sizes = [8, 32], strides = [1, 1]} : vector<8x96xf32> to vector<8x32xf32>
    %136 = vector.extract_strided_slice %126 {offsets = [0, 32], sizes = [8, 32], strides = [1, 1]} : vector<8x96xf32> to vector<8x32xf32>
    %137 = arith.addf %135, %136 : vector<8x32xf32>
    %138 = arith.negf %137 : vector<8x32xf32>
    %139 = math.exp %138 : vector<8x32xf32>
    %cst_41 = arith.constant 1.000000e+00 : f32
    %140 = vector.broadcast %cst_41 : f32 to vector<8x32xf32>
    %141 = arith.addf %140, %139 : vector<8x32xf32>
    %142 = arith.divf %140, %141 : vector<8x32xf32>
    %143 = vector.extract_strided_slice %96 {offsets = [0, 64], sizes = [8, 32], strides = [1, 1]} : vector<8x96xf32> to vector<8x32xf32>
    %144 = vector.extract_strided_slice %126 {offsets = [0, 64], sizes = [8, 32], strides = [1, 1]} : vector<8x96xf32> to vector<8x32xf32>
    %145 = arith.mulf %134, %144 : vector<8x32xf32>
    %146 = arith.addf %143, %145 : vector<8x32xf32>
    %147 = math.tanh %146 : vector<8x32xf32>
    %cst_42 = arith.constant 1.000000e+00 : f32
    %148 = vector.broadcast %cst_42 : f32 to vector<8x32xf32>
    %149 = arith.subf %148, %142 : vector<8x32xf32>
    %150 = arith.mulf %149, %147 : vector<8x32xf32>
    %151 = arith.mulf %142, %83 : vector<8x32xf32>
    %152 = arith.addf %150, %151 : vector<8x32xf32>
    %153 = arith.index_cast %89 : i32 to index
    %c0_43 = arith.constant 0 : index
    %154 = vector.load %arg8[%153, %c0_43] : memref<64x64xf32, #tpu.memory_space<vmem>>, vector<8x32xf32>
    tpu.vector_store %arg8[%153, %c0_43], %124 {strides = array<i32>} : memref<64x64xf32, #tpu.memory_space<vmem>>, vector<8x32xf32>,
    %155 = arith.index_cast %92 : i32 to index
    %c32_44 = arith.constant 32 : index
    %156 = vector.load %arg8[%155, %c32_44] : memref<64x64xf32, #tpu.memory_space<vmem>>, vector<8x32xf32>
    tpu.vector_store %arg8[%155, %c32_44], %152 {strides = array<i32>} : memref<64x64xf32, #tpu.memory_space<vmem>>, vector<8x32xf32>,
    %c2_i32 = arith.constant 2 : i32
    %c8_i32_45 = arith.constant 8 : i32
    %157 = arith.muli %c2_i32, %c8_i32_45 : i32
    %158 = tpu.assume_multiple %157, 8 : i32
    %c7_i32_46 = arith.constant 7 : i32
    %159 = arith.subi %c7_i32_46, %c2_i32 : i32
    %c8_i32_47 = arith.constant 8 : i32
    %160 = arith.muli %159, %c8_i32_47 : i32
    %161 = tpu.assume_multiple %160, 8 : i32
    %162 = arith.index_cast %158 : i32 to index
    %c0_48 = arith.constant 0 : index
    %163 = vector.load %arg9[%162, %c0_48] : memref<64x96xf32, #tpu.memory_space<vmem>>, vector<8x96xf32>
    %164 = arith.index_cast %161 : i32 to index
    %c0_49 = arith.constant 0 : index
    %165 = vector.load %arg10[%164, %c0_49] : memref<64x96xf32, #tpu.memory_space<vmem>>, vector<8x96xf32>
    %cst_50 = arith.constant dense<0.000000e+00> : vector<8x96xf32>
    %166 = tpu.matmul %124, %10, %cst_50 {dimension_numbers = #tpu.dot_dimension_numbers<[1], [0], [0], [1], [0, 0, 1, 1], [], []>} : vector<8x32xf32>, vector<32x96xf32>, vector<8x96xf32> -> vector<8x96xf32>
    %167 = arith.addf %166, %14 : vector<8x96xf32>
    %168 = vector.extract_strided_slice %163 {offsets = [0, 0], sizes = [8, 32], strides = [1, 1]} : vector<8x96xf32> to vector<8x32xf32>
    %169 = vector.extract_strided_slice %167 {offsets = [0, 0], sizes = [8, 32], strides = [1, 1]} : vector<8x96xf32> to vector<8x32xf32>
    %170 = arith.addf %168, %169 : vector<8x32xf32>
    %171 = arith.negf %170 : vector<8x32xf32>
    %172 = math.exp %171 : vector<8x32xf32>
    %cst_51 = arith.constant 1.000000e+00 : f32
    %173 = vector.broadcast %cst_51 : f32 to vector<8x32xf32>
    %174 = arith.addf %173, %172 : vector<8x32xf32>
    %175 = arith.divf %173, %174 : vector<8x32xf32>
    %176 = vector.extract_strided_slice %163 {offsets = [0, 32], sizes = [8, 32], strides = [1, 1]} : vector<8x96xf32> to vector<8x32xf32>
    %177 = vector.extract_strided_slice %167 {offsets = [0, 32], sizes = [8, 32], strides = [1, 1]} : vector<8x96xf32> to vector<8x32xf32>
    %178 = arith.addf %176, %177 : vector<8x32xf32>
    %179 = arith.negf %178 : vector<8x32xf32>
    %180 = math.exp %179 : vector<8x32xf32>
    %cst_52 = arith.constant 1.000000e+00 : f32
    %181 = vector.broadcast %cst_52 : f32 to vector<8x32xf32>
    %182 = arith.addf %181, %180 : vector<8x32xf32>
    %183 = arith.divf %181, %182 : vector<8x32xf32>
    %184 = vector.extract_strided_slice %163 {offsets = [0, 64], sizes = [8, 32], strides = [1, 1]} : vector<8x96xf32> to vector<8x32xf32>
    %185 = vector.extract_strided_slice %167 {offsets = [0, 64], sizes = [8, 32], strides = [1, 1]} : vector<8x96xf32> to vector<8x32xf32>
    %186 = arith.mulf %175, %185 : vector<8x32xf32>
    %187 = arith.addf %184, %186 : vector<8x32xf32>
    %188 = math.tanh %187 : vector<8x32xf32>
    %cst_53 = arith.constant 1.000000e+00 : f32
    %189 = vector.broadcast %cst_53 : f32 to vector<8x32xf32>
    %190 = arith.subf %189, %183 : vector<8x32xf32>
    %191 = arith.mulf %190, %188 : vector<8x32xf32>
    %192 = arith.mulf %183, %124 : vector<8x32xf32>
    %193 = arith.addf %191, %192 : vector<8x32xf32>
    %cst_54 = arith.constant dense<0.000000e+00> : vector<8x96xf32>
    %194 = tpu.matmul %152, %11, %cst_54 {dimension_numbers = #tpu.dot_dimension_numbers<[1], [0], [0], [1], [0, 0, 1, 1], [], []>} : vector<8x32xf32>, vector<32x96xf32>, vector<8x96xf32> -> vector<8x96xf32>
    %195 = arith.addf %194, %17 : vector<8x96xf32>
    %196 = vector.extract_strided_slice %165 {offsets = [0, 0], sizes = [8, 32], strides = [1, 1]} : vector<8x96xf32> to vector<8x32xf32>
    %197 = vector.extract_strided_slice %195 {offsets = [0, 0], sizes = [8, 32], strides = [1, 1]} : vector<8x96xf32> to vector<8x32xf32>
    %198 = arith.addf %196, %197 : vector<8x32xf32>
    %199 = arith.negf %198 : vector<8x32xf32>
    %200 = math.exp %199 : vector<8x32xf32>
    %cst_55 = arith.constant 1.000000e+00 : f32
    %201 = vector.broadcast %cst_55 : f32 to vector<8x32xf32>
    %202 = arith.addf %201, %200 : vector<8x32xf32>
    %203 = arith.divf %201, %202 : vector<8x32xf32>
    %204 = vector.extract_strided_slice %165 {offsets = [0, 32], sizes = [8, 32], strides = [1, 1]} : vector<8x96xf32> to vector<8x32xf32>
    %205 = vector.extract_strided_slice %195 {offsets = [0, 32], sizes = [8, 32], strides = [1, 1]} : vector<8x96xf32> to vector<8x32xf32>
    %206 = arith.addf %204, %205 : vector<8x32xf32>
    %207 = arith.negf %206 : vector<8x32xf32>
    %208 = math.exp %207 : vector<8x32xf32>
    %cst_56 = arith.constant 1.000000e+00 : f32
    %209 = vector.broadcast %cst_56 : f32 to vector<8x32xf32>
    %210 = arith.addf %209, %208 : vector<8x32xf32>
    %211 = arith.divf %209, %210 : vector<8x32xf32>
    %212 = vector.extract_strided_slice %165 {offsets = [0, 64], sizes = [8, 32], strides = [1, 1]} : vector<8x96xf32> to vector<8x32xf32>
    %213 = vector.extract_strided_slice %195 {offsets = [0, 64], sizes = [8, 32], strides = [1, 1]} : vector<8x96xf32> to vector<8x32xf32>
    %214 = arith.mulf %203, %213 : vector<8x32xf32>
    %215 = arith.addf %212, %214 : vector<8x32xf32>
    %216 = math.tanh %215 : vector<8x32xf32>
    %cst_57 = arith.constant 1.000000e+00 : f32
    %217 = vector.broadcast %cst_57 : f32 to vector<8x32xf32>
    %218 = arith.subf %217, %211 : vector<8x32xf32>
    %219 = arith.mulf %218, %216 : vector<8x32xf32>
    %220 = arith.mulf %211, %152 : vector<8x32xf32>
    %221 = arith.addf %219, %220 : vector<8x32xf32>
    %222 = arith.index_cast %158 : i32 to index
    %c0_58 = arith.constant 0 : index
    %223 = vector.load %arg8[%222, %c0_58] : memref<64x64xf32, #tpu.memory_space<vmem>>, vector<8x32xf32>
    tpu.vector_store %arg8[%222, %c0_58], %193 {strides = array<i32>} : memref<64x64xf32, #tpu.memory_space<vmem>>, vector<8x32xf32>,
    %224 = arith.index_cast %161 : i32 to index
    %c32_59 = arith.constant 32 : index
    %225 = vector.load %arg8[%224, %c32_59] : memref<64x64xf32, #tpu.memory_space<vmem>>, vector<8x32xf32>
    tpu.vector_store %arg8[%224, %c32_59], %221 {strides = array<i32>} : memref<64x64xf32, #tpu.memory_space<vmem>>, vector<8x32xf32>,
    %c3_i32 = arith.constant 3 : i32
    %c8_i32_60 = arith.constant 8 : i32
    %226 = arith.muli %c3_i32, %c8_i32_60 : i32
    %227 = tpu.assume_multiple %226, 8 : i32
    %c7_i32_61 = arith.constant 7 : i32
    %228 = arith.subi %c7_i32_61, %c3_i32 : i32
    %c8_i32_62 = arith.constant 8 : i32
    %229 = arith.muli %228, %c8_i32_62 : i32
    %230 = tpu.assume_multiple %229, 8 : i32
    %231 = arith.index_cast %227 : i32 to index
    %c0_63 = arith.constant 0 : index
    %232 = vector.load %arg9[%231, %c0_63] : memref<64x96xf32, #tpu.memory_space<vmem>>, vector<8x96xf32>
    %233 = arith.index_cast %230 : i32 to index
    %c0_64 = arith.constant 0 : index
    %234 = vector.load %arg10[%233, %c0_64] : memref<64x96xf32, #tpu.memory_space<vmem>>, vector<8x96xf32>
    %cst_65 = arith.constant dense<0.000000e+00> : vector<8x96xf32>
    %235 = tpu.matmul %193, %10, %cst_65 {dimension_numbers = #tpu.dot_dimension_numbers<[1], [0], [0], [1], [0, 0, 1, 1], [], []>} : vector<8x32xf32>, vector<32x96xf32>, vector<8x96xf32> -> vector<8x96xf32>
    %236 = arith.addf %235, %14 : vector<8x96xf32>
    %237 = vector.extract_strided_slice %232 {offsets = [0, 0], sizes = [8, 32], strides = [1, 1]} : vector<8x96xf32> to vector<8x32xf32>
    %238 = vector.extract_strided_slice %236 {offsets = [0, 0], sizes = [8, 32], strides = [1, 1]} : vector<8x96xf32> to vector<8x32xf32>
    %239 = arith.addf %237, %238 : vector<8x32xf32>
    %240 = arith.negf %239 : vector<8x32xf32>
    %241 = math.exp %240 : vector<8x32xf32>
    %cst_66 = arith.constant 1.000000e+00 : f32
    %242 = vector.broadcast %cst_66 : f32 to vector<8x32xf32>
    %243 = arith.addf %242, %241 : vector<8x32xf32>
    %244 = arith.divf %242, %243 : vector<8x32xf32>
    %245 = vector.extract_strided_slice %232 {offsets = [0, 32], sizes = [8, 32], strides = [1, 1]} : vector<8x96xf32> to vector<8x32xf32>
    %246 = vector.extract_strided_slice %236 {offsets = [0, 32], sizes = [8, 32], strides = [1, 1]} : vector<8x96xf32> to vector<8x32xf32>
    %247 = arith.addf %245, %246 : vector<8x32xf32>
    %248 = arith.negf %247 : vector<8x32xf32>
    %249 = math.exp %248 : vector<8x32xf32>
    %cst_67 = arith.constant 1.000000e+00 : f32
    %250 = vector.broadcast %cst_67 : f32 to vector<8x32xf32>
    %251 = arith.addf %250, %249 : vector<8x32xf32>
    %252 = arith.divf %250, %251 : vector<8x32xf32>
    %253 = vector.extract_strided_slice %232 {offsets = [0, 64], sizes = [8, 32], strides = [1, 1]} : vector<8x96xf32> to vector<8x32xf32>
    %254 = vector.extract_strided_slice %236 {offsets = [0, 64], sizes = [8, 32], strides = [1, 1]} : vector<8x96xf32> to vector<8x32xf32>
    %255 = arith.mulf %244, %254 : vector<8x32xf32>
    %256 = arith.addf %253, %255 : vector<8x32xf32>
    %257 = math.tanh %256 : vector<8x32xf32>
    %cst_68 = arith.constant 1.000000e+00 : f32
    %258 = vector.broadcast %cst_68 : f32 to vector<8x32xf32>
    %259 = arith.subf %258, %252 : vector<8x32xf32>
    %260 = arith.mulf %259, %257 : vector<8x32xf32>
    %261 = arith.mulf %252, %193 : vector<8x32xf32>
    %262 = arith.addf %260, %261 : vector<8x32xf32>
    %cst_69 = arith.constant dense<0.000000e+00> : vector<8x96xf32>
    %263 = tpu.matmul %221, %11, %cst_69 {dimension_numbers = #tpu.dot_dimension_numbers<[1], [0], [0], [1], [0, 0, 1, 1], [], []>} : vector<8x32xf32>, vector<32x96xf32>, vector<8x96xf32> -> vector<8x96xf32>
    %264 = arith.addf %263, %17 : vector<8x96xf32>
    %265 = vector.extract_strided_slice %234 {offsets = [0, 0], sizes = [8, 32], strides = [1, 1]} : vector<8x96xf32> to vector<8x32xf32>
    %266 = vector.extract_strided_slice %264 {offsets = [0, 0], sizes = [8, 32], strides = [1, 1]} : vector<8x96xf32> to vector<8x32xf32>
    %267 = arith.addf %265, %266 : vector<8x32xf32>
    %268 = arith.negf %267 : vector<8x32xf32>
    %269 = math.exp %268 : vector<8x32xf32>
    %cst_70 = arith.constant 1.000000e+00 : f32
    %270 = vector.broadcast %cst_70 : f32 to vector<8x32xf32>
    %271 = arith.addf %270, %269 : vector<8x32xf32>
    %272 = arith.divf %270, %271 : vector<8x32xf32>
    %273 = vector.extract_strided_slice %234 {offsets = [0, 32], sizes = [8, 32], strides = [1, 1]} : vector<8x96xf32> to vector<8x32xf32>
    %274 = vector.extract_strided_slice %264 {offsets = [0, 32], sizes = [8, 32], strides = [1, 1]} : vector<8x96xf32> to vector<8x32xf32>
    %275 = arith.addf %273, %274 : vector<8x32xf32>
    %276 = arith.negf %275 : vector<8x32xf32>
    %277 = math.exp %276 : vector<8x32xf32>
    %cst_71 = arith.constant 1.000000e+00 : f32
    %278 = vector.broadcast %cst_71 : f32 to vector<8x32xf32>
    %279 = arith.addf %278, %277 : vector<8x32xf32>
    %280 = arith.divf %278, %279 : vector<8x32xf32>
    %281 = vector.extract_strided_slice %234 {offsets = [0, 64], sizes = [8, 32], strides = [1, 1]} : vector<8x96xf32> to vector<8x32xf32>
    %282 = vector.extract_strided_slice %264 {offsets = [0, 64], sizes = [8, 32], strides = [1, 1]} : vector<8x96xf32> to vector<8x32xf32>
    %283 = arith.mulf %272, %282 : vector<8x32xf32>
    %284 = arith.addf %281, %283 : vector<8x32xf32>
    %285 = math.tanh %284 : vector<8x32xf32>
    %cst_72 = arith.constant 1.000000e+00 : f32
    %286 = vector.broadcast %cst_72 : f32 to vector<8x32xf32>
    %287 = arith.subf %286, %280 : vector<8x32xf32>
    %288 = arith.mulf %287, %285 : vector<8x32xf32>
    %289 = arith.mulf %280, %221 : vector<8x32xf32>
    %290 = arith.addf %288, %289 : vector<8x32xf32>
    %291 = arith.index_cast %227 : i32 to index
    %c0_73 = arith.constant 0 : index
    %292 = vector.load %arg8[%291, %c0_73] : memref<64x64xf32, #tpu.memory_space<vmem>>, vector<8x32xf32>
    tpu.vector_store %arg8[%291, %c0_73], %262 {strides = array<i32>} : memref<64x64xf32, #tpu.memory_space<vmem>>, vector<8x32xf32>,
    %293 = arith.index_cast %230 : i32 to index
    %c32_74 = arith.constant 32 : index
    %294 = vector.load %arg8[%293, %c32_74] : memref<64x64xf32, #tpu.memory_space<vmem>>, vector<8x32xf32>
    tpu.vector_store %arg8[%293, %c32_74], %290 {strides = array<i32>} : memref<64x64xf32, #tpu.memory_space<vmem>>, vector<8x32xf32>,
    %c4_i32 = arith.constant 4 : i32
    %c8_i32_75 = arith.constant 8 : i32
    %295 = arith.muli %c4_i32, %c8_i32_75 : i32
    %296 = tpu.assume_multiple %295, 8 : i32
    %c7_i32_76 = arith.constant 7 : i32
    %297 = arith.subi %c7_i32_76, %c4_i32 : i32
    %c8_i32_77 = arith.constant 8 : i32
    %298 = arith.muli %297, %c8_i32_77 : i32
    %299 = tpu.assume_multiple %298, 8 : i32
    %300 = arith.index_cast %296 : i32 to index
    %c0_78 = arith.constant 0 : index
    %301 = vector.load %arg9[%300, %c0_78] : memref<64x96xf32, #tpu.memory_space<vmem>>, vector<8x96xf32>
    %302 = arith.index_cast %299 : i32 to index
    %c0_79 = arith.constant 0 : index
    %303 = vector.load %arg10[%302, %c0_79] : memref<64x96xf32, #tpu.memory_space<vmem>>, vector<8x96xf32>
    %cst_80 = arith.constant dense<0.000000e+00> : vector<8x96xf32>
    %304 = tpu.matmul %262, %10, %cst_80 {dimension_numbers = #tpu.dot_dimension_numbers<[1], [0], [0], [1], [0, 0, 1, 1], [], []>} : vector<8x32xf32>, vector<32x96xf32>, vector<8x96xf32> -> vector<8x96xf32>
    %305 = arith.addf %304, %14 : vector<8x96xf32>
    %306 = vector.extract_strided_slice %301 {offsets = [0, 0], sizes = [8, 32], strides = [1, 1]} : vector<8x96xf32> to vector<8x32xf32>
    %307 = vector.extract_strided_slice %305 {offsets = [0, 0], sizes = [8, 32], strides = [1, 1]} : vector<8x96xf32> to vector<8x32xf32>
    %308 = arith.addf %306, %307 : vector<8x32xf32>
    %309 = arith.negf %308 : vector<8x32xf32>
    %310 = math.exp %309 : vector<8x32xf32>
    %cst_81 = arith.constant 1.000000e+00 : f32
    %311 = vector.broadcast %cst_81 : f32 to vector<8x32xf32>
    %312 = arith.addf %311, %310 : vector<8x32xf32>
    %313 = arith.divf %311, %312 : vector<8x32xf32>
    %314 = vector.extract_strided_slice %301 {offsets = [0, 32], sizes = [8, 32], strides = [1, 1]} : vector<8x96xf32> to vector<8x32xf32>
    %315 = vector.extract_strided_slice %305 {offsets = [0, 32], sizes = [8, 32], strides = [1, 1]} : vector<8x96xf32> to vector<8x32xf32>
    %316 = arith.addf %314, %315 : vector<8x32xf32>
    %317 = arith.negf %316 : vector<8x32xf32>
    %318 = math.exp %317 : vector<8x32xf32>
    %cst_82 = arith.constant 1.000000e+00 : f32
    %319 = vector.broadcast %cst_82 : f32 to vector<8x32xf32>
    %320 = arith.addf %319, %318 : vector<8x32xf32>
    %321 = arith.divf %319, %320 : vector<8x32xf32>
    %322 = vector.extract_strided_slice %301 {offsets = [0, 64], sizes = [8, 32], strides = [1, 1]} : vector<8x96xf32> to vector<8x32xf32>
    %323 = vector.extract_strided_slice %305 {offsets = [0, 64], sizes = [8, 32], strides = [1, 1]} : vector<8x96xf32> to vector<8x32xf32>
    %324 = arith.mulf %313, %323 : vector<8x32xf32>
    %325 = arith.addf %322, %324 : vector<8x32xf32>
    %326 = math.tanh %325 : vector<8x32xf32>
    %cst_83 = arith.constant 1.000000e+00 : f32
    %327 = vector.broadcast %cst_83 : f32 to vector<8x32xf32>
    %328 = arith.subf %327, %321 : vector<8x32xf32>
    %329 = arith.mulf %328, %326 : vector<8x32xf32>
    %330 = arith.mulf %321, %262 : vector<8x32xf32>
    %331 = arith.addf %329, %330 : vector<8x32xf32>
    %cst_84 = arith.constant dense<0.000000e+00> : vector<8x96xf32>
    %332 = tpu.matmul %290, %11, %cst_84 {dimension_numbers = #tpu.dot_dimension_numbers<[1], [0], [0], [1], [0, 0, 1, 1], [], []>} : vector<8x32xf32>, vector<32x96xf32>, vector<8x96xf32> -> vector<8x96xf32>
    %333 = arith.addf %332, %17 : vector<8x96xf32>
    %334 = vector.extract_strided_slice %303 {offsets = [0, 0], sizes = [8, 32], strides = [1, 1]} : vector<8x96xf32> to vector<8x32xf32>
    %335 = vector.extract_strided_slice %333 {offsets = [0, 0], sizes = [8, 32], strides = [1, 1]} : vector<8x96xf32> to vector<8x32xf32>
    %336 = arith.addf %334, %335 : vector<8x32xf32>
    %337 = arith.negf %336 : vector<8x32xf32>
    %338 = math.exp %337 : vector<8x32xf32>
    %cst_85 = arith.constant 1.000000e+00 : f32
    %339 = vector.broadcast %cst_85 : f32 to vector<8x32xf32>
    %340 = arith.addf %339, %338 : vector<8x32xf32>
    %341 = arith.divf %339, %340 : vector<8x32xf32>
    %342 = vector.extract_strided_slice %303 {offsets = [0, 32], sizes = [8, 32], strides = [1, 1]} : vector<8x96xf32> to vector<8x32xf32>
    %343 = vector.extract_strided_slice %333 {offsets = [0, 32], sizes = [8, 32], strides = [1, 1]} : vector<8x96xf32> to vector<8x32xf32>
    %344 = arith.addf %342, %343 : vector<8x32xf32>
    %345 = arith.negf %344 : vector<8x32xf32>
    %346 = math.exp %345 : vector<8x32xf32>
    %cst_86 = arith.constant 1.000000e+00 : f32
    %347 = vector.broadcast %cst_86 : f32 to vector<8x32xf32>
    %348 = arith.addf %347, %346 : vector<8x32xf32>
    %349 = arith.divf %347, %348 : vector<8x32xf32>
    %350 = vector.extract_strided_slice %303 {offsets = [0, 64], sizes = [8, 32], strides = [1, 1]} : vector<8x96xf32> to vector<8x32xf32>
    %351 = vector.extract_strided_slice %333 {offsets = [0, 64], sizes = [8, 32], strides = [1, 1]} : vector<8x96xf32> to vector<8x32xf32>
    %352 = arith.mulf %341, %351 : vector<8x32xf32>
    %353 = arith.addf %350, %352 : vector<8x32xf32>
    %354 = math.tanh %353 : vector<8x32xf32>
    %cst_87 = arith.constant 1.000000e+00 : f32
    %355 = vector.broadcast %cst_87 : f32 to vector<8x32xf32>
    %356 = arith.subf %355, %349 : vector<8x32xf32>
    %357 = arith.mulf %356, %354 : vector<8x32xf32>
    %358 = arith.mulf %349, %290 : vector<8x32xf32>
    %359 = arith.addf %357, %358 : vector<8x32xf32>
    %360 = arith.index_cast %296 : i32 to index
    %c0_88 = arith.constant 0 : index
    %361 = vector.load %arg8[%360, %c0_88] : memref<64x64xf32, #tpu.memory_space<vmem>>, vector<8x32xf32>
    tpu.vector_store %arg8[%360, %c0_88], %331 {strides = array<i32>} : memref<64x64xf32, #tpu.memory_space<vmem>>, vector<8x32xf32>,
    %362 = arith.index_cast %299 : i32 to index
    %c32_89 = arith.constant 32 : index
    %363 = vector.load %arg8[%362, %c32_89] : memref<64x64xf32, #tpu.memory_space<vmem>>, vector<8x32xf32>
    tpu.vector_store %arg8[%362, %c32_89], %359 {strides = array<i32>} : memref<64x64xf32, #tpu.memory_space<vmem>>, vector<8x32xf32>,
    %c5_i32 = arith.constant 5 : i32
    %c8_i32_90 = arith.constant 8 : i32
    %364 = arith.muli %c5_i32, %c8_i32_90 : i32
    %365 = tpu.assume_multiple %364, 8 : i32
    %c7_i32_91 = arith.constant 7 : i32
    %366 = arith.subi %c7_i32_91, %c5_i32 : i32
    %c8_i32_92 = arith.constant 8 : i32
    %367 = arith.muli %366, %c8_i32_92 : i32
    %368 = tpu.assume_multiple %367, 8 : i32
    %369 = arith.index_cast %365 : i32 to index
    %c0_93 = arith.constant 0 : index
    %370 = vector.load %arg9[%369, %c0_93] : memref<64x96xf32, #tpu.memory_space<vmem>>, vector<8x96xf32>
    %371 = arith.index_cast %368 : i32 to index
    %c0_94 = arith.constant 0 : index
    %372 = vector.load %arg10[%371, %c0_94] : memref<64x96xf32, #tpu.memory_space<vmem>>, vector<8x96xf32>
    %cst_95 = arith.constant dense<0.000000e+00> : vector<8x96xf32>
    %373 = tpu.matmul %331, %10, %cst_95 {dimension_numbers = #tpu.dot_dimension_numbers<[1], [0], [0], [1], [0, 0, 1, 1], [], []>} : vector<8x32xf32>, vector<32x96xf32>, vector<8x96xf32> -> vector<8x96xf32>
    %374 = arith.addf %373, %14 : vector<8x96xf32>
    %375 = vector.extract_strided_slice %370 {offsets = [0, 0], sizes = [8, 32], strides = [1, 1]} : vector<8x96xf32> to vector<8x32xf32>
    %376 = vector.extract_strided_slice %374 {offsets = [0, 0], sizes = [8, 32], strides = [1, 1]} : vector<8x96xf32> to vector<8x32xf32>
    %377 = arith.addf %375, %376 : vector<8x32xf32>
    %378 = arith.negf %377 : vector<8x32xf32>
    %379 = math.exp %378 : vector<8x32xf32>
    %cst_96 = arith.constant 1.000000e+00 : f32
    %380 = vector.broadcast %cst_96 : f32 to vector<8x32xf32>
    %381 = arith.addf %380, %379 : vector<8x32xf32>
    %382 = arith.divf %380, %381 : vector<8x32xf32>
    %383 = vector.extract_strided_slice %370 {offsets = [0, 32], sizes = [8, 32], strides = [1, 1]} : vector<8x96xf32> to vector<8x32xf32>
    %384 = vector.extract_strided_slice %374 {offsets = [0, 32], sizes = [8, 32], strides = [1, 1]} : vector<8x96xf32> to vector<8x32xf32>
    %385 = arith.addf %383, %384 : vector<8x32xf32>
    %386 = arith.negf %385 : vector<8x32xf32>
    %387 = math.exp %386 : vector<8x32xf32>
    %cst_97 = arith.constant 1.000000e+00 : f32
    %388 = vector.broadcast %cst_97 : f32 to vector<8x32xf32>
    %389 = arith.addf %388, %387 : vector<8x32xf32>
    %390 = arith.divf %388, %389 : vector<8x32xf32>
    %391 = vector.extract_strided_slice %370 {offsets = [0, 64], sizes = [8, 32], strides = [1, 1]} : vector<8x96xf32> to vector<8x32xf32>
    %392 = vector.extract_strided_slice %374 {offsets = [0, 64], sizes = [8, 32], strides = [1, 1]} : vector<8x96xf32> to vector<8x32xf32>
    %393 = arith.mulf %382, %392 : vector<8x32xf32>
    %394 = arith.addf %391, %393 : vector<8x32xf32>
    %395 = math.tanh %394 : vector<8x32xf32>
    %cst_98 = arith.constant 1.000000e+00 : f32
    %396 = vector.broadcast %cst_98 : f32 to vector<8x32xf32>
    %397 = arith.subf %396, %390 : vector<8x32xf32>
    %398 = arith.mulf %397, %395 : vector<8x32xf32>
    %399 = arith.mulf %390, %331 : vector<8x32xf32>
    %400 = arith.addf %398, %399 : vector<8x32xf32>
    %cst_99 = arith.constant dense<0.000000e+00> : vector<8x96xf32>
    %401 = tpu.matmul %359, %11, %cst_99 {dimension_numbers = #tpu.dot_dimension_numbers<[1], [0], [0], [1], [0, 0, 1, 1], [], []>} : vector<8x32xf32>, vector<32x96xf32>, vector<8x96xf32> -> vector<8x96xf32>
    %402 = arith.addf %401, %17 : vector<8x96xf32>
    %403 = vector.extract_strided_slice %372 {offsets = [0, 0], sizes = [8, 32], strides = [1, 1]} : vector<8x96xf32> to vector<8x32xf32>
    %404 = vector.extract_strided_slice %402 {offsets = [0, 0], sizes = [8, 32], strides = [1, 1]} : vector<8x96xf32> to vector<8x32xf32>
    %405 = arith.addf %403, %404 : vector<8x32xf32>
    %406 = arith.negf %405 : vector<8x32xf32>
    %407 = math.exp %406 : vector<8x32xf32>
    %cst_100 = arith.constant 1.000000e+00 : f32
    %408 = vector.broadcast %cst_100 : f32 to vector<8x32xf32>
    %409 = arith.addf %408, %407 : vector<8x32xf32>
    %410 = arith.divf %408, %409 : vector<8x32xf32>
    %411 = vector.extract_strided_slice %372 {offsets = [0, 32], sizes = [8, 32], strides = [1, 1]} : vector<8x96xf32> to vector<8x32xf32>
    %412 = vector.extract_strided_slice %402 {offsets = [0, 32], sizes = [8, 32], strides = [1, 1]} : vector<8x96xf32> to vector<8x32xf32>
    %413 = arith.addf %411, %412 : vector<8x32xf32>
    %414 = arith.negf %413 : vector<8x32xf32>
    %415 = math.exp %414 : vector<8x32xf32>
    %cst_101 = arith.constant 1.000000e+00 : f32
    %416 = vector.broadcast %cst_101 : f32 to vector<8x32xf32>
    %417 = arith.addf %416, %415 : vector<8x32xf32>
    %418 = arith.divf %416, %417 : vector<8x32xf32>
    %419 = vector.extract_strided_slice %372 {offsets = [0, 64], sizes = [8, 32], strides = [1, 1]} : vector<8x96xf32> to vector<8x32xf32>
    %420 = vector.extract_strided_slice %402 {offsets = [0, 64], sizes = [8, 32], strides = [1, 1]} : vector<8x96xf32> to vector<8x32xf32>
    %421 = arith.mulf %410, %420 : vector<8x32xf32>
    %422 = arith.addf %419, %421 : vector<8x32xf32>
    %423 = math.tanh %422 : vector<8x32xf32>
    %cst_102 = arith.constant 1.000000e+00 : f32
    %424 = vector.broadcast %cst_102 : f32 to vector<8x32xf32>
    %425 = arith.subf %424, %418 : vector<8x32xf32>
    %426 = arith.mulf %425, %423 : vector<8x32xf32>
    %427 = arith.mulf %418, %359 : vector<8x32xf32>
    %428 = arith.addf %426, %427 : vector<8x32xf32>
    %429 = arith.index_cast %365 : i32 to index
    %c0_103 = arith.constant 0 : index
    %430 = vector.load %arg8[%429, %c0_103] : memref<64x64xf32, #tpu.memory_space<vmem>>, vector<8x32xf32>
    tpu.vector_store %arg8[%429, %c0_103], %400 {strides = array<i32>} : memref<64x64xf32, #tpu.memory_space<vmem>>, vector<8x32xf32>,
    %431 = arith.index_cast %368 : i32 to index
    %c32_104 = arith.constant 32 : index
    %432 = vector.load %arg8[%431, %c32_104] : memref<64x64xf32, #tpu.memory_space<vmem>>, vector<8x32xf32>
    tpu.vector_store %arg8[%431, %c32_104], %428 {strides = array<i32>} : memref<64x64xf32, #tpu.memory_space<vmem>>, vector<8x32xf32>,
    %c6_i32 = arith.constant 6 : i32
    %c8_i32_105 = arith.constant 8 : i32
    %433 = arith.muli %c6_i32, %c8_i32_105 : i32
    %434 = tpu.assume_multiple %433, 8 : i32
    %c7_i32_106 = arith.constant 7 : i32
    %435 = arith.subi %c7_i32_106, %c6_i32 : i32
    %c8_i32_107 = arith.constant 8 : i32
    %436 = arith.muli %435, %c8_i32_107 : i32
    %437 = tpu.assume_multiple %436, 8 : i32
    %438 = arith.index_cast %434 : i32 to index
    %c0_108 = arith.constant 0 : index
    %439 = vector.load %arg9[%438, %c0_108] : memref<64x96xf32, #tpu.memory_space<vmem>>, vector<8x96xf32>
    %440 = arith.index_cast %437 : i32 to index
    %c0_109 = arith.constant 0 : index
    %441 = vector.load %arg10[%440, %c0_109] : memref<64x96xf32, #tpu.memory_space<vmem>>, vector<8x96xf32>
    %cst_110 = arith.constant dense<0.000000e+00> : vector<8x96xf32>
    %442 = tpu.matmul %400, %10, %cst_110 {dimension_numbers = #tpu.dot_dimension_numbers<[1], [0], [0], [1], [0, 0, 1, 1], [], []>} : vector<8x32xf32>, vector<32x96xf32>, vector<8x96xf32> -> vector<8x96xf32>
    %443 = arith.addf %442, %14 : vector<8x96xf32>
    %444 = vector.extract_strided_slice %439 {offsets = [0, 0], sizes = [8, 32], strides = [1, 1]} : vector<8x96xf32> to vector<8x32xf32>
    %445 = vector.extract_strided_slice %443 {offsets = [0, 0], sizes = [8, 32], strides = [1, 1]} : vector<8x96xf32> to vector<8x32xf32>
    %446 = arith.addf %444, %445 : vector<8x32xf32>
    %447 = arith.negf %446 : vector<8x32xf32>
    %448 = math.exp %447 : vector<8x32xf32>
    %cst_111 = arith.constant 1.000000e+00 : f32
    %449 = vector.broadcast %cst_111 : f32 to vector<8x32xf32>
    %450 = arith.addf %449, %448 : vector<8x32xf32>
    %451 = arith.divf %449, %450 : vector<8x32xf32>
    %452 = vector.extract_strided_slice %439 {offsets = [0, 32], sizes = [8, 32], strides = [1, 1]} : vector<8x96xf32> to vector<8x32xf32>
    %453 = vector.extract_strided_slice %443 {offsets = [0, 32], sizes = [8, 32], strides = [1, 1]} : vector<8x96xf32> to vector<8x32xf32>
    %454 = arith.addf %452, %453 : vector<8x32xf32>
    %455 = arith.negf %454 : vector<8x32xf32>
    %456 = math.exp %455 : vector<8x32xf32>
    %cst_112 = arith.constant 1.000000e+00 : f32
    %457 = vector.broadcast %cst_112 : f32 to vector<8x32xf32>
    %458 = arith.addf %457, %456 : vector<8x32xf32>
    %459 = arith.divf %457, %458 : vector<8x32xf32>
    %460 = vector.extract_strided_slice %439 {offsets = [0, 64], sizes = [8, 32], strides = [1, 1]} : vector<8x96xf32> to vector<8x32xf32>
    %461 = vector.extract_strided_slice %443 {offsets = [0, 64], sizes = [8, 32], strides = [1, 1]} : vector<8x96xf32> to vector<8x32xf32>
    %462 = arith.mulf %451, %461 : vector<8x32xf32>
    %463 = arith.addf %460, %462 : vector<8x32xf32>
    %464 = math.tanh %463 : vector<8x32xf32>
    %cst_113 = arith.constant 1.000000e+00 : f32
    %465 = vector.broadcast %cst_113 : f32 to vector<8x32xf32>
    %466 = arith.subf %465, %459 : vector<8x32xf32>
    %467 = arith.mulf %466, %464 : vector<8x32xf32>
    %468 = arith.mulf %459, %400 : vector<8x32xf32>
    %469 = arith.addf %467, %468 : vector<8x32xf32>
    %cst_114 = arith.constant dense<0.000000e+00> : vector<8x96xf32>
    %470 = tpu.matmul %428, %11, %cst_114 {dimension_numbers = #tpu.dot_dimension_numbers<[1], [0], [0], [1], [0, 0, 1, 1], [], []>} : vector<8x32xf32>, vector<32x96xf32>, vector<8x96xf32> -> vector<8x96xf32>
    %471 = arith.addf %470, %17 : vector<8x96xf32>
    %472 = vector.extract_strided_slice %441 {offsets = [0, 0], sizes = [8, 32], strides = [1, 1]} : vector<8x96xf32> to vector<8x32xf32>
    %473 = vector.extract_strided_slice %471 {offsets = [0, 0], sizes = [8, 32], strides = [1, 1]} : vector<8x96xf32> to vector<8x32xf32>
    %474 = arith.addf %472, %473 : vector<8x32xf32>
    %475 = arith.negf %474 : vector<8x32xf32>
    %476 = math.exp %475 : vector<8x32xf32>
    %cst_115 = arith.constant 1.000000e+00 : f32
    %477 = vector.broadcast %cst_115 : f32 to vector<8x32xf32>
    %478 = arith.addf %477, %476 : vector<8x32xf32>
    %479 = arith.divf %477, %478 : vector<8x32xf32>
    %480 = vector.extract_strided_slice %441 {offsets = [0, 32], sizes = [8, 32], strides = [1, 1]} : vector<8x96xf32> to vector<8x32xf32>
    %481 = vector.extract_strided_slice %471 {offsets = [0, 32], sizes = [8, 32], strides = [1, 1]} : vector<8x96xf32> to vector<8x32xf32>
    %482 = arith.addf %480, %481 : vector<8x32xf32>
    %483 = arith.negf %482 : vector<8x32xf32>
    %484 = math.exp %483 : vector<8x32xf32>
    %cst_116 = arith.constant 1.000000e+00 : f32
    %485 = vector.broadcast %cst_116 : f32 to vector<8x32xf32>
    %486 = arith.addf %485, %484 : vector<8x32xf32>
    %487 = arith.divf %485, %486 : vector<8x32xf32>
    %488 = vector.extract_strided_slice %441 {offsets = [0, 64], sizes = [8, 32], strides = [1, 1]} : vector<8x96xf32> to vector<8x32xf32>
    %489 = vector.extract_strided_slice %471 {offsets = [0, 64], sizes = [8, 32], strides = [1, 1]} : vector<8x96xf32> to vector<8x32xf32>
    %490 = arith.mulf %479, %489 : vector<8x32xf32>
    %491 = arith.addf %488, %490 : vector<8x32xf32>
    %492 = math.tanh %491 : vector<8x32xf32>
    %cst_117 = arith.constant 1.000000e+00 : f32
    %493 = vector.broadcast %cst_117 : f32 to vector<8x32xf32>
    %494 = arith.subf %493, %487 : vector<8x32xf32>
    %495 = arith.mulf %494, %492 : vector<8x32xf32>
    %496 = arith.mulf %487, %428 : vector<8x32xf32>
    %497 = arith.addf %495, %496 : vector<8x32xf32>
    %498 = arith.index_cast %434 : i32 to index
    %c0_118 = arith.constant 0 : index
    %499 = vector.load %arg8[%498, %c0_118] : memref<64x64xf32, #tpu.memory_space<vmem>>, vector<8x32xf32>
    tpu.vector_store %arg8[%498, %c0_118], %469 {strides = array<i32>} : memref<64x64xf32, #tpu.memory_space<vmem>>, vector<8x32xf32>,
    %500 = arith.index_cast %437 : i32 to index
    %c32_119 = arith.constant 32 : index
    %501 = vector.load %arg8[%500, %c32_119] : memref<64x64xf32, #tpu.memory_space<vmem>>, vector<8x32xf32>
    tpu.vector_store %arg8[%500, %c32_119], %497 {strides = array<i32>} : memref<64x64xf32, #tpu.memory_space<vmem>>, vector<8x32xf32>,
    %c7_i32_120 = arith.constant 7 : i32
    %c8_i32_121 = arith.constant 8 : i32
    %502 = arith.muli %c7_i32_120, %c8_i32_121 : i32
    %503 = tpu.assume_multiple %502, 8 : i32
    %c7_i32_122 = arith.constant 7 : i32
    %504 = arith.subi %c7_i32_122, %c7_i32_120 : i32
    %c8_i32_123 = arith.constant 8 : i32
    %505 = arith.muli %504, %c8_i32_123 : i32
    %506 = tpu.assume_multiple %505, 8 : i32
    %507 = arith.index_cast %503 : i32 to index
    %c0_124 = arith.constant 0 : index
    %508 = vector.load %arg9[%507, %c0_124] : memref<64x96xf32, #tpu.memory_space<vmem>>, vector<8x96xf32>
    %509 = arith.index_cast %506 : i32 to index
    %c0_125 = arith.constant 0 : index
    %510 = vector.load %arg10[%509, %c0_125] : memref<64x96xf32, #tpu.memory_space<vmem>>, vector<8x96xf32>
    %cst_126 = arith.constant dense<0.000000e+00> : vector<8x96xf32>
    %511 = tpu.matmul %469, %10, %cst_126 {dimension_numbers = #tpu.dot_dimension_numbers<[1], [0], [0], [1], [0, 0, 1, 1], [], []>} : vector<8x32xf32>, vector<32x96xf32>, vector<8x96xf32> -> vector<8x96xf32>
    %512 = arith.addf %511, %14 : vector<8x96xf32>
    %513 = vector.extract_strided_slice %508 {offsets = [0, 0], sizes = [8, 32], strides = [1, 1]} : vector<8x96xf32> to vector<8x32xf32>
    %514 = vector.extract_strided_slice %512 {offsets = [0, 0], sizes = [8, 32], strides = [1, 1]} : vector<8x96xf32> to vector<8x32xf32>
    %515 = arith.addf %513, %514 : vector<8x32xf32>
    %516 = arith.negf %515 : vector<8x32xf32>
    %517 = math.exp %516 : vector<8x32xf32>
    %cst_127 = arith.constant 1.000000e+00 : f32
    %518 = vector.broadcast %cst_127 : f32 to vector<8x32xf32>
    %519 = arith.addf %518, %517 : vector<8x32xf32>
    %520 = arith.divf %518, %519 : vector<8x32xf32>
    %521 = vector.extract_strided_slice %508 {offsets = [0, 32], sizes = [8, 32], strides = [1, 1]} : vector<8x96xf32> to vector<8x32xf32>
    %522 = vector.extract_strided_slice %512 {offsets = [0, 32], sizes = [8, 32], strides = [1, 1]} : vector<8x96xf32> to vector<8x32xf32>
    %523 = arith.addf %521, %522 : vector<8x32xf32>
    %524 = arith.negf %523 : vector<8x32xf32>
    %525 = math.exp %524 : vector<8x32xf32>
    %cst_128 = arith.constant 1.000000e+00 : f32
    %526 = vector.broadcast %cst_128 : f32 to vector<8x32xf32>
    %527 = arith.addf %526, %525 : vector<8x32xf32>
    %528 = arith.divf %526, %527 : vector<8x32xf32>
    %529 = vector.extract_strided_slice %508 {offsets = [0, 64], sizes = [8, 32], strides = [1, 1]} : vector<8x96xf32> to vector<8x32xf32>
    %530 = vector.extract_strided_slice %512 {offsets = [0, 64], sizes = [8, 32], strides = [1, 1]} : vector<8x96xf32> to vector<8x32xf32>
    %531 = arith.mulf %520, %530 : vector<8x32xf32>
    %532 = arith.addf %529, %531 : vector<8x32xf32>
    %533 = math.tanh %532 : vector<8x32xf32>
    %cst_129 = arith.constant 1.000000e+00 : f32
    %534 = vector.broadcast %cst_129 : f32 to vector<8x32xf32>
    %535 = arith.subf %534, %528 : vector<8x32xf32>
    %536 = arith.mulf %535, %533 : vector<8x32xf32>
    %537 = arith.mulf %528, %469 : vector<8x32xf32>
    %538 = arith.addf %536, %537 : vector<8x32xf32>
    %cst_130 = arith.constant dense<0.000000e+00> : vector<8x96xf32>
    %539 = tpu.matmul %497, %11, %cst_130 {dimension_numbers = #tpu.dot_dimension_numbers<[1], [0], [0], [1], [0, 0, 1, 1], [], []>} : vector<8x32xf32>, vector<32x96xf32>, vector<8x96xf32> -> vector<8x96xf32>
    %540 = arith.addf %539, %17 : vector<8x96xf32>
    %541 = vector.extract_strided_slice %510 {offsets = [0, 0], sizes = [8, 32], strides = [1, 1]} : vector<8x96xf32> to vector<8x32xf32>
    %542 = vector.extract_strided_slice %540 {offsets = [0, 0], sizes = [8, 32], strides = [1, 1]} : vector<8x96xf32> to vector<8x32xf32>
    %543 = arith.addf %541, %542 : vector<8x32xf32>
    %544 = arith.negf %543 : vector<8x32xf32>
    %545 = math.exp %544 : vector<8x32xf32>
    %cst_131 = arith.constant 1.000000e+00 : f32
    %546 = vector.broadcast %cst_131 : f32 to vector<8x32xf32>
    %547 = arith.addf %546, %545 : vector<8x32xf32>
    %548 = arith.divf %546, %547 : vector<8x32xf32>
    %549 = vector.extract_strided_slice %510 {offsets = [0, 32], sizes = [8, 32], strides = [1, 1]} : vector<8x96xf32> to vector<8x32xf32>
    %550 = vector.extract_strided_slice %540 {offsets = [0, 32], sizes = [8, 32], strides = [1, 1]} : vector<8x96xf32> to vector<8x32xf32>
    %551 = arith.addf %549, %550 : vector<8x32xf32>
    %552 = arith.negf %551 : vector<8x32xf32>
    %553 = math.exp %552 : vector<8x32xf32>
    %cst_132 = arith.constant 1.000000e+00 : f32
    %554 = vector.broadcast %cst_132 : f32 to vector<8x32xf32>
    %555 = arith.addf %554, %553 : vector<8x32xf32>
    %556 = arith.divf %554, %555 : vector<8x32xf32>
    %557 = vector.extract_strided_slice %510 {offsets = [0, 64], sizes = [8, 32], strides = [1, 1]} : vector<8x96xf32> to vector<8x32xf32>
    %558 = vector.extract_strided_slice %540 {offsets = [0, 64], sizes = [8, 32], strides = [1, 1]} : vector<8x96xf32> to vector<8x32xf32>
    %559 = arith.mulf %548, %558 : vector<8x32xf32>
    %560 = arith.addf %557, %559 : vector<8x32xf32>
    %561 = math.tanh %560 : vector<8x32xf32>
    %cst_133 = arith.constant 1.000000e+00 : f32
    %562 = vector.broadcast %cst_133 : f32 to vector<8x32xf32>
    %563 = arith.subf %562, %556 : vector<8x32xf32>
    %564 = arith.mulf %563, %561 : vector<8x32xf32>
    %565 = arith.mulf %556, %497 : vector<8x32xf32>
    %566 = arith.addf %564, %565 : vector<8x32xf32>
    %567 = arith.index_cast %503 : i32 to index
    %c0_134 = arith.constant 0 : index
    %568 = vector.load %arg8[%567, %c0_134] : memref<64x64xf32, #tpu.memory_space<vmem>>, vector<8x32xf32>
    tpu.vector_store %arg8[%567, %c0_134], %538 {strides = array<i32>} : memref<64x64xf32, #tpu.memory_space<vmem>>, vector<8x32xf32>,
    %569 = arith.index_cast %506 : i32 to index
    %c32_135 = arith.constant 32 : index
    %570 = vector.load %arg8[%569, %c32_135] : memref<64x64xf32, #tpu.memory_space<vmem>>, vector<8x32xf32>
    tpu.vector_store %arg8[%569, %c32_135], %566 {strides = array<i32>} : memref<64x64xf32, #tpu.memory_space<vmem>>, vector<8x32xf32>,
    %c8_i32_136 = arith.constant 8 : i32
    return
  }
  func.func @transform_0(%arg0: i32) -> (i32, i32) {
    %c0_i32 = arith.constant 0 : i32
    %c0_i32_0 = arith.constant 0 : i32
    %c0_i32_1 = arith.constant 0 : i32
    return %c0_i32, %c0_i32_0 : i32, i32
  }
  func.func @transform_1(%arg0: i32) -> (i32, i32) {
    %c0_i32 = arith.constant 0 : i32
    %c0_i32_0 = arith.constant 0 : i32
    %c0_i32_1 = arith.constant 0 : i32
    return %c0_i32, %c0_i32_0 : i32, i32
  }
  func.func @transform_2(%arg0: i32) -> (i32, i32) {
    %c0_i32 = arith.constant 0 : i32
    %c0_i32_0 = arith.constant 0 : i32
    %c0_i32_1 = arith.constant 0 : i32
    return %c0_i32, %c0_i32_0 : i32, i32
  }
  func.func @transform_3(%arg0: i32) -> (i32, i32) {
    %c0_i32 = arith.constant 0 : i32
    %c0_i32_0 = arith.constant 0 : i32
    %c0_i32_1 = arith.constant 0 : i32
    return %c0_i32, %c0_i32_0 : i32, i32
  }
  func.func @transform_4(%arg0: i32) -> (i32, i32) {
    %c0_i32 = arith.constant 0 : i32
    %c0_i32_0 = arith.constant 0 : i32
    %c0_i32_1 = arith.constant 0 : i32
    return %c0_i32, %c0_i32_0 : i32, i32
  }
  func.func @transform_5(%arg0: i32) -> (i32, i32) {
    %c0_i32 = arith.constant 0 : i32
    %c0_i32_0 = arith.constant 0 : i32
    %c0_i32_1 = arith.constant 0 : i32
    return %c0_i32, %c0_i32_0 : i32, i32
  }
  func.func @transform_6(%arg0: i32) -> (i32, i32) {
    %c0_i32 = arith.constant 0 : i32
    %c0_i32_0 = arith.constant 0 : i32
    %c0_i32_1 = arith.constant 0 : i32
    return %c0_i32, %c0_i32_0 : i32, i32
  }
  func.func @transform_7(%arg0: i32) -> (i32, i32) {
    %c0_i32 = arith.constant 0 : i32
    %c0_i32_0 = arith.constant 0 : i32
    %c0_i32_1 = arith.constant 0 : i32
    return %c0_i32, %c0_i32_0 : i32, i32
  }
}

</mosaic_0001>

<llo_original>
// kernel: bigru_forward.3
$region0: #{bigru_forward.3}
  #allocation0 [shape = 'u32[]', space=smem, size = 0x4, offset = 0x4, fixed_abs, tag = 'smem constant byte address 0x4 - core index']
  #allocation1 [shape = 'u32[144,128]{1,0:T(1,128)}', space=vmem, size = 0x12000, scoped, tag = 'internal scratch']
  #allocation2 [shape = 'f32[64,96]{1,0:T(8,128)}', space=vmem, size = 0x8000, scoped, tag = 'scratch operand']
  #allocation3 [shape = 'f32[64,96]{1,0:T(8,128)}', space=vmem, size = 0x8000, scoped, tag = 'scratch operand']
  %s0 = inlined_call_operand.vmem [shape: f32[64,64], index: 0, kind: input, shape index: {}]
  %s1 = inlined_call_operand.vmem [shape: f32[64,192], index: 1, kind: input, shape index: {}]
  %s2 = inlined_call_operand.vmem [shape: f32[1,192], index: 2, kind: input, shape index: {}]
  %s3 = inlined_call_operand.vmem [shape: f32[32,96], index: 3, kind: input, shape index: {}]
  %s4 = inlined_call_operand.vmem [shape: f32[32,96], index: 4, kind: input, shape index: {}]
  %s5 = inlined_call_operand.vmem [shape: f32[1,96], index: 5, kind: input, shape index: {}]
  %s6 = inlined_call_operand.vmem [shape: f32[1,96], index: 6, kind: input, shape index: {}]
  %s7 = inlined_call_operand.vmem [shape: f32[64,64], index: 7, kind: output, shape index: {}]
  %s8 = sld [smem:[#allocation0]]
  $region38: #{bigru_forward.3} parent=0
    _
  %s10 = ssub.s32 1, %s8
  %s11 = scalar_select 0, %s10, %s8
  // Predicated region
  $region2: #{bigru_forward.3} parent=0 // pred_check
    _
  $region3: #{bigru_forward.3} parent=0 // pred_check_branch
    %13 = sbr.rel (0) target = $region5
  $region4: #{bigru_forward.3} parent=0 // pred_region
    _
  $region5: #{bigru_forward.3} parent=0 // pred_fallthru
    _
  // Predicated region
  $region6: #{bigru_forward.3} parent=0 // pred_check
    _
  $region7: #{bigru_forward.3} parent=0 // pred_check_branch
    %15 = sbr.rel (0) target = $region9
  $region8: #{bigru_forward.3} parent=0 // pred_region
    _
  $region9: #{bigru_forward.3} parent=0 // pred_fallthru
    _
  // Predicated region
  $region10: #{bigru_forward.3} parent=0 // pred_check
    _
  $region11: #{bigru_forward.3} parent=0 // pred_check_branch
    %17 = sbr.rel (0) target = $region13
  $region12: #{bigru_forward.3} parent=0 // pred_region
    _
  $region13: #{bigru_forward.3} parent=0 // pred_fallthru
    _
  // Predicated region
  $region14: #{bigru_forward.3} parent=0 // pred_check
    _
  $region15: #{bigru_forward.3} parent=0 // pred_check_branch
    %19 = sbr.rel (0) target = $region17
  $region16: #{bigru_forward.3} parent=0 // pred_region
    _
  $region17: #{bigru_forward.3} parent=0 // pred_fallthru
    _
  // Predicated region
  $region18: #{bigru_forward.3} parent=0 // pred_check
    _
  $region19: #{bigru_forward.3} parent=0 // pred_check_branch
    %21 = sbr.rel (0) target = $region21
  $region20: #{bigru_forward.3} parent=0 // pred_region
    _
  $region21: #{bigru_forward.3} parent=0 // pred_fallthru
    _
  // Predicated region
  $region22: #{bigru_forward.3} parent=0 // pred_check
    _
  $region23: #{bigru_forward.3} parent=0 // pred_check_branch
    %23 = sbr.rel (0) target = $region25
  $region24: #{bigru_forward.3} parent=0 // pred_region
    _
  $region25: #{bigru_forward.3} parent=0 // pred_fallthru
    _
  // Predicated region
  $region26: #{bigru_forward.3} parent=0 // pred_check
    _
  $region27: #{bigru_forward.3} parent=0 // pred_check_branch
    %25 = sbr.rel (0) target = $region29
  $region28: #{bigru_forward.3} parent=0 // pred_region
    _
  $region29: #{bigru_forward.3} parent=0 // pred_fallthru
    _
  %v26 = vld [vmem:[%s0] sm:$0xff]
  %v27 = vld [vmem:[%s0 + $0x8] sm:$0xff]
  %v28 = vld [vmem:[%s0 + $0x10] sm:$0xff]
  %v29 = vld [vmem:[%s0 + $0x18] sm:$0xff]
  %v30 = vld [vmem:[%s0 + $0x20] sm:$0xff]
  %v31 = vld [vmem:[%s0 + $0x28] sm:$0xff]
  %v32 = vld [vmem:[%s0 + $0x30] sm:$0xff]
  %v33 = vld [vmem:[%s0 + $0x38] sm:$0xff]
  %v34 = vld [vmem:[%s1] sm:$0xff]
  %v35 = vld [vmem:[%s1 + $0x8] sm:$0xff]
  %v36 = vld [vmem:[%s1 + $0x10] sm:$0xff]
  %v37 = vld [vmem:[%s1 + $0x18] sm:$0xff]
  %v38 = vld [vmem:[%s1 + $0x20] sm:$0xff]
  %v39 = vld [vmem:[%s1 + $0x28] sm:$0xff]
  %v40 = vld [vmem:[%s1 + $0x30] sm:$0xff]
  %v41 = vld [vmem:[%s1 + $0x38] sm:$0xff]
  %v42 = vld [vmem:[%s1 + $0x40] sm:$0xff]
  %v43 = vld [vmem:[%s1 + $0x48] sm:$0xff]
  %v44 = vld [vmem:[%s1 + $0x50] sm:$0xff]
  %v45 = vld [vmem:[%s1 + $0x58] sm:$0xff]
  %v46 = vld [vmem:[%s1 + $0x60] sm:$0xff]
  %v47 = vld [vmem:[%s1 + $0x68] sm:$0xff]
  %v48 = vld [vmem:[%s1 + $0x70] sm:$0xff]
  %v49 = vld [vmem:[%s1 + $0x78] sm:$0xff]
  %v50 = vld [vmem:[%s2] sm:$0x3]
  %v52 = vlaneseq
  %v53 = vshrl.u32 %v52, 7
  %v54 = vsub.s32 0, %v53
  %v55 = vrot.slane %v50, %v54
  %v56 = vlaneseq
  %v57 = vshrl.u32 %v56, 7
  %v58 = vsub.s32 1, %v57
  %v59 = vrot.slane %v50, %v58
  %vm62 = vcmask 523264
  %v64 = vsel %vm62, %v26, 0
  %v67 = vsel %vm62, %v27, 0
  %v70 = vsel %vm62, %v28, 0
  %v73 = vsel %vm62, %v29, 0
  %v76 = vsel %vm62, %v30, 0
  %v79 = vsel %vm62, %v31, 0
  %v82 = vsel %vm62, %v32, 0
  %v85 = vsel %vm62, %v33, 0
  %87 = vmatprep.subr.mxu0 %v35
  %88 = vmatpush1.msra.mxu0 %v34
  %89 = vmatprep.subr.mxu0 %v37
  %90 = vmatpush1.msra.mxu0 %v36
  %91 = vmatprep.subr.mxu0 %v39
  %92 = vmatpush1.msra.mxu0 %v38
  %93 = vmatprep.subr.mxu0 %v41
  %94 = vmatpush1.msra.mxu0 %v40
  %95 = vmatprep.subr.mxu0 %v43
  %96 = vmatpush1.msra.mxu0 %v42
  %97 = vmatprep.subr.mxu0 %v45
  %98 = vmatpush1.msra.mxu0 %v44
  %99 = vmatprep.subr.mxu0 %v47
  %100 = vmatpush1.msra.mxu0 %v46
  %101 = vmatprep.subr.mxu0 %v49
  %102 = vmatpush1.msra.mxu0 %v48
  %103 = vmatprep.subr.mxu0 0.0
  %104 = vmatpush1.msra.mxu0 0.0
  %105 = vmatprep.subr.mxu0 0.0
  %106 = vmatpush1.msra.mxu0 0.0
  %107 = vmatprep.subr.mxu0 0.0
  %108 = vmatpush1.msra.mxu0 0.0
  %109 = vmatprep.subr.mxu0 0.0
  %110 = vmatpush1.msra.mxu0 0.0
  %111 = vmatprep.subr.mxu0 0.0
  %112 = vmatpush1.msra.mxu0 0.0
  %113 = vmatprep.subr.mxu0 0.0
  %114 = vmatpush1.msra.mxu0 0.0
  %115 = vmatprep.subr.mxu0 0.0
  %116 = vmatpush1.msra.mxu0 0.0
  %117 = vmatprep.subr.mxu0 0.0
  %118 = vmatpush1.msra.mxu0 0.0
  %119 = vmatprep.subr.mxu0 0.0
  %120 = vmatpush1.msra.mxu0 0.0
  %121 = vmatprep.subr.mxu0 0.0
  %122 = vmatpush1.msra.mxu0 0.0
  %123 = vmatprep.subr.mxu0 0.0
  %124 = vmatpush1.msra.mxu0 0.0
  %125 = vmatprep.subr.mxu0 0.0
  %126 = vmatpush1.msra.mxu0 0.0
  %127 = vmatprep.subr.mxu0 0.0
  %128 = vmatpush1.msra.mxu0 0.0
  %129 = vmatprep.subr.mxu0 0.0
  %130 = vmatpush1.msra.mxu0 0.0
  %131 = vmatprep.subr.mxu0 0.0
  %132 = vmatpush1.msra.mxu0 0.0
  %133 = vmatprep.subr.mxu0 0.0
  %134 = vmatpush1.msra.mxu0 0.0
  %135 = vmatprep.subr.mxu0 0.0
  %136 = vmatpush1.msra.mxu0 0.0
  %137 = vmatprep.subr.mxu0 0.0
  %138 = vmatpush1.msra.mxu0 0.0
  %139 = vmatprep.subr.mxu0 0.0
  %140 = vmatpush1.msra.mxu0 0.0
  %141 = vmatprep.subr.mxu0 0.0
  %142 = vmatpush1.msra.mxu0 0.0
  %143 = vmatprep.subr.mxu0 0.0
  %144 = vmatpush1.msra.mxu0 0.0
  %145 = vmatprep.subr.mxu0 0.0
  %146 = vmatpush1.msra.mxu0 0.0
  %147 = vmatprep.subr.mxu0 0.0
  %148 = vmatpush1.msra.mxu0 0.0
  %149 = vmatprep.subr.mxu0 0.0
  %150 = vmatpush1.msra.mxu0 0.0
  %151 = vmatprep.mubr.f32.mxu0 0.0
  %152 = vmatmul.mubr.f32.gmra.mrb[0].mxu0 %v64
  %v153 = vpop.f32.mrb[0].mxu0
  %v154 = vadd.f32 %v55, %v153
  %v155 = vpop.f32.mrb[0].mxu0
  %v156 = vadd.f32 %v59, %v155
  %157 = vmatprep.mubr.f32.mxu0 0.0
  %158 = vmatmul.mubr.f32.gmra.mrb[0].mxu0 %v67
  %v159 = vpop.f32.mrb[0].mxu0
  %v160 = vadd.f32 %v55, %v159
  %v161 = vpop.f32.mrb[0].mxu0
  %v162 = vadd.f32 %v59, %v161
  %163 = vmatprep.mubr.f32.mxu0 0.0
  %164 = vmatmul.mubr.f32.gmra.mrb[0].mxu0 %v70
  %v165 = vpop.f32.mrb[0].mxu0
  %v166 = vadd.f32 %v55, %v165
  %v167 = vpop.f32.mrb[0].mxu0
  %v168 = vadd.f32 %v59, %v167
  %169 = vmatprep.mubr.f32.mxu0 0.0
  %170 = vmatmul.mubr.f32.gmra.mrb[0].mxu0 %v73
  %v171 = vpop.f32.mrb[0].mxu0
  %v172 = vadd.f32 %v55, %v171
  %v173 = vpop.f32.mrb[0].mxu0
  %v174 = vadd.f32 %v59, %v173
  %175 = vmatprep.mubr.f32.mxu0 0.0
  %176 = vmatmul.mubr.f32.gmra.mrb[0].mxu0 %v76
  %v177 = vpop.f32.mrb[0].mxu0
  %v178 = vadd.f32 %v55, %v177
  %v179 = vpop.f32.mrb[0].mxu0
  %v180 = vadd.f32 %v59, %v179
  %181 = vmatprep.mubr.f32.mxu0 0.0
  %182 = vmatmul.mubr.f32.gmra.mrb[0].mxu0 %v79
  %v183 = vpop.f32.mrb[0].mxu0
  %v184 = vadd.f32 %v55, %v183
  %v185 = vpop.f32.mrb[0].mxu0
  %v186 = vadd.f32 %v59, %v185
  %187 = vmatprep.mubr.f32.mxu0 0.0
  %188 = vmatmul.mubr.f32.gmra.mrb[0].mxu0 %v82
  %v189 = vpop.f32.mrb[0].mxu0
  %v190 = vadd.f32 %v55, %v189
  %v191 = vpop.f32.mrb[0].mxu0
  %v192 = vadd.f32 %v59, %v191
  %193 = vmatprep.mubr.f32.mxu0 0.0
  %194 = vmatmul.mubr.f32.gmra.mrb[0].mxu0 %v85
  %v195 = vpop.f32.mrb[0].mxu0
  %v196 = vadd.f32 %v55, %v195
  %v197 = vpop.f32.mrb[0].mxu0
  %v198 = vadd.f32 %v59, %v197
  %199 = vdwg.mxu0
  %vm200 = vcmask 785408
  %201 = vst.msk [vmem:[#allocation2] sm:$0xff] %vm200, %v154
  %202 = vst.msk [vmem:[#allocation2 + $0x8] sm:$0xff] %vm200, %v160
  %203 = vst.msk [vmem:[#allocation2 + $0x10] sm:$0xff] %vm200, %v166
  %204 = vst.msk [vmem:[#allocation2 + $0x18] sm:$0xff] %vm200, %v172
  %205 = vst.msk [vmem:[#allocation2 + $0x20] sm:$0xff] %vm200, %v178
  %206 = vst.msk [vmem:[#allocation2 + $0x28] sm:$0xff] %vm200, %v184
  %207 = vst.msk [vmem:[#allocation2 + $0x30] sm:$0xff] %vm200, %v190
  %208 = vst.msk [vmem:[#allocation2 + $0x38] sm:$0xff] %vm200, %v196
  %225 = vrot.lane.b32.xlu0 %v154, 32
  %v226 = vpop.permute.xlu0 %225
  %227 = vrot.lane.b32.xlu0 %v156, 32
  %v228 = vpop.permute.xlu0 %227
  %229 = vrot.lane.b32.xlu0 %v160, 32
  %v230 = vpop.permute.xlu0 %229
  %231 = vrot.lane.b32.xlu0 %v162, 32
  %v232 = vpop.permute.xlu0 %231
  %233 = vrot.lane.b32.xlu0 %v166, 32
  %v234 = vpop.permute.xlu0 %233
  %235 = vrot.lane.b32.xlu0 %v168, 32
  %v236 = vpop.permute.xlu0 %235
  %237 = vrot.lane.b32.xlu0 %v172, 32
  %v238 = vpop.permute.xlu0 %237
  %239 = vrot.lane.b32.xlu0 %v174, 32
  %v240 = vpop.permute.xlu0 %239
  %241 = vrot.lane.b32.xlu0 %v178, 32
  %v242 = vpop.permute.xlu0 %241
  %243 = vrot.lane.b32.xlu0 %v180, 32
  %v244 = vpop.permute.xlu0 %243
  %245 = vrot.lane.b32.xlu0 %v184, 32
  %v246 = vpop.permute.xlu0 %245
  %247 = vrot.lane.b32.xlu0 %v186, 32
  %v248 = vpop.permute.xlu0 %247
  %249 = vrot.lane.b32.xlu0 %v190, 32
  %v250 = vpop.permute.xlu0 %249
  %251 = vrot.lane.b32.xlu0 %v192, 32
  %v252 = vpop.permute.xlu0 %251
  %253 = vrot.lane.b32.xlu0 %v196, 32
  %v254 = vpop.permute.xlu0 %253
  %255 = vrot.lane.b32.xlu0 %v198, 32
  %v256 = vpop.permute.xlu0 %255
  %vm257 = vcmask 261120
  %v258 = vsel %vm257, %v226, %v228
  %v259 = vsel %vm257, %v230, %v232
  %v260 = vsel %vm257, %v234, %v236
  %v261 = vsel %vm257, %v238, %v240
  %v262 = vsel %vm257, %v242, %v244
  %v263 = vsel %vm257, %v246, %v248
  %v264 = vsel %vm257, %v250, %v252
  %v265 = vsel %vm257, %v254, %v256
  %274 = vst.msk [vmem:[#allocation3] sm:$0xff] %vm200, %v258
  %275 = vst.msk [vmem:[#allocation3 + $0x8] sm:$0xff] %vm200, %v259
  %276 = vst.msk [vmem:[#allocation3 + $0x10] sm:$0xff] %vm200, %v260
  %277 = vst.msk [vmem:[#allocation3 + $0x18] sm:$0xff] %vm200, %v261
  %278 = vst.msk [vmem:[#allocation3 + $0x20] sm:$0xff] %vm200, %v262
  %279 = vst.msk [vmem:[#allocation3 + $0x28] sm:$0xff] %vm200, %v263
  %280 = vst.msk [vmem:[#allocation3 + $0x30] sm:$0xff] %vm200, %v264
  %281 = vst.msk [vmem:[#allocation3 + $0x38] sm:$0xff] %vm200, %v265
  %v282 = vld [vmem:[%s3] sm:$0xff]
  %v283 = vld [vmem:[%s3 + $0x8] sm:$0xff]
  %v284 = vld [vmem:[%s3 + $0x10] sm:$0xff]
  %v285 = vld [vmem:[%s3 + $0x18] sm:$0xff]
  %v286 = vld [vmem:[%s4] sm:$0xff]
  %v287 = vld [vmem:[%s4 + $0x8] sm:$0xff]
  %v288 = vld [vmem:[%s4 + $0x10] sm:$0xff]
  %v289 = vld [vmem:[%s4 + $0x18] sm:$0xff]
  %v290 = vld [vmem:[%s5] sm:$0x1]
  %v292 = vlaneseq
  %v293 = vshrl.u32 %v292, 7
  %v294 = vsub.s32 0, %v293
  %v295 = vrot.slane %v290, %v294
  %v297 = vld [vmem:[%s6] sm:$0x1]
  %v299 = vlaneseq
  %v300 = vshrl.u32 %v299, 7
  %v301 = vsub.s32 0, %v300
  %v302 = vrot.slane %v297, %v301
  %v304 = vld [vmem:[#allocation2] sm:$0xff]
  %s305 = scalar_lea.vmem [#allocation3], 56
  %v306 = vld [vmem:[%s305] sm:$0xff]
  %v308 = vsel %vm257, 0.0, 0
  %310 = vmatprep.subr.mxu0 0.0
  %311 = vmatpush1.msra.mxu0 %v282
  %312 = vmatprep.subr.mxu0 0.0
  %313 = vmatpush1.msra.mxu0 %v283
  %314 = vmatprep.subr.mxu0 0.0
  %315 = vmatpush1.msra.mxu0 %v284
  %316 = vmatprep.subr.mxu0 0.0
  %317 = vmatpush1.msra.mxu0 %v285
  %318 = vmatprep.subr.mxu0 0.0
  %319 = vmatpush1.msra.mxu0 0.0
  %320 = vmatprep.subr.mxu0 0.0
  %321 = vmatpush1.msra.mxu0 0.0
  %322 = vmatprep.subr.mxu0 0.0
  %323 = vmatpush1.msra.mxu0 0.0
  %324 = vmatprep.subr.mxu0 0.0
  %325 = vmatpush1.msra.mxu0 0.0
  %326 = vmatprep.subr.mxu0 0.0
  %327 = vmatpush1.msra.mxu0 0.0
  %328 = vmatprep.subr.mxu0 0.0
  %329 = vmatpush1.msra.mxu0 0.0
  %330 = vmatprep.subr.mxu0 0.0
  %331 = vmatpush1.msra.mxu0 0.0
  %332 = vmatprep.subr.mxu0 0.0
  %333 = vmatpush1.msra.mxu0 0.0
  %334 = vmatprep.subr.mxu0 0.0
  %335 = vmatpush1.msra.mxu0 0.0
  %336 = vmatprep.subr.mxu0 0.0
  %337 = vmatpush1.msra.mxu0 0.0
  %338 = vmatprep.subr.mxu0 0.0
  %339 = vmatpush1.msra.mxu0 0.0
  %340 = vmatprep.subr.mxu0 0.0
  %341 = vmatpush1.msra.mxu0 0.0
  %342 = vmatprep.subr.mxu0 0.0
  %343 = vmatpush1.msra.mxu0 0.0
  %344 = vmatprep.subr.mxu0 0.0
  %345 = vmatpush1.msra.mxu0 0.0
  %346 = vmatprep.subr.mxu0 0.0
  %347 = vmatpush1.msra.mxu0 0.0
  %348 = vmatprep.subr.mxu0 0.0
  %349 = vmatpush1.msra.mxu0 0.0
  %350 = vmatprep.subr.mxu0 0.0
  %351 = vmatpush1.msra.mxu0 0.0
  %352 = vmatprep.subr.mxu0 0.0
  %353 = vmatpush1.msra.mxu0 0.0
  %354 = vmatprep.subr.mxu0 0.0
  %355 = vmatpush1.msra.mxu0 0.0
  %356 = vmatprep.subr.mxu0 0.0
  %357 = vmatpush1.msra.mxu0 0.0
  %358 = vmatprep.subr.mxu0 0.0
  %359 = vmatpush1.msra.mxu0 0.0
  %360 = vmatprep.subr.mxu0 0.0
  %361 = vmatpush1.msra.mxu0 0.0
  %362 = vmatprep.subr.mxu0 0.0
  %363 = vmatpush1.msra.mxu0 0.0
  %364 = vmatprep.subr.mxu0 0.0
  %365 = vmatpush1.msra.mxu0 0.0
  %366 = vmatprep.subr.mxu0 0.0
  %367 = vmatpush1.msra.mxu0 0.0
  %368 = vmatprep.subr.mxu0 0.0
  %369 = vmatpush1.msra.mxu0 0.0
  %370 = vmatprep.subr.mxu0 0.0
  %371 = vmatpush1.msra.mxu0 0.0
  %372 = vmatprep.subr.mxu0 0.0
  %373 = vmatpush1.msra.mxu0 0.0
  %374 = vmatprep.mubr.f32.mxu0 0.0
  %375 = vmatmul.mubr.f32.gmra.mrb[0].mxu0 %v308
  %v376 = vpop.f32.mrb[0].mxu0
  %v377 = vadd.f32 %v295, %v376
  %v378 = vpop.f32.mrb[0].mxu0
  %379 = vdwg.mxu0
  %v380 = vadd.f32 %v304, %v377
  %v381 = vxor.u32 %v380, 2147483648
  %v382 = vmul.f32 %v381, 1.442695
  %v383 = vpow.pop %v382
  %v384 = vadd.f32 %v383, 1.0
  %v385 = vrcp.pop %v384
  %v386 = vmul.f32 1.0, %v385
  %388 = vrot.lane.b32.xlu0 %v377, 64
  %v389 = vpop.permute.xlu0 %388
  %v391 = vmul.f32 %v386, %v389
  %393 = vrot.lane.b32.xlu0 %v391, 64
  %v394 = vpop.permute.xlu0 %393
  %v396 = vadd.f32 %v304, %v394
  %v397 = vtanh.pop %v396
  %v398 = vsub.f32 1.0, %v386
  %400 = vrot.lane.b32.xlu0 %v397, 96
  %v401 = vpop.permute.xlu0 %400
  %v403 = vmul.f32 %v398, %v401
  %v404 = vmul.f32 %v386, 0.0
  %v405 = vadd.f32 %v403, %v404
  %406 = vmatprep.subr.mxu0 0.0
  %407 = vmatpush1.msra.mxu0 %v286
  %408 = vmatprep.subr.mxu0 0.0
  %409 = vmatpush1.msra.mxu0 %v287
  %410 = vmatprep.subr.mxu0 0.0
  %411 = vmatpush1.msra.mxu0 %v288
  %412 = vmatprep.subr.mxu0 0.0
  %413 = vmatpush1.msra.mxu0 %v289
  %414 = vmatprep.subr.mxu0 0.0
  %415 = vmatpush1.msra.mxu0 0.0
  %416 = vmatprep.subr.mxu0 0.0
  %417 = vmatpush1.msra.mxu0 0.0
  %418 = vmatprep.subr.mxu0 0.0
  %419 = vmatpush1.msra.mxu0 0.0
  %420 = vmatprep.subr.mxu0 0.0
  %421 = vmatpush1.msra.mxu0 0.0
  %422 = vmatprep.subr.mxu0 0.0
  %423 = vmatpush1.msra.mxu0 0.0
  %424 = vmatprep.subr.mxu0 0.0
  %425 = vmatpush1.msra.mxu0 0.0
  %426 = vmatprep.subr.mxu0 0.0
  %427 = vmatpush1.msra.mxu0 0.0
  %428 = vmatprep.subr.mxu0 0.0
  %429 = vmatpush1.msra.mxu0 0.0
  %430 = vmatprep.subr.mxu0 0.0
  %431 = vmatpush1.msra.mxu0 0.0
  %432 = vmatprep.subr.mxu0 0.0
  %433 = vmatpush1.msra.mxu0 0.0
  %434 = vmatprep.subr.mxu0 0.0
  %435 = vmatpush1.msra.mxu0 0.0
  %436 = vmatprep.subr.mxu0 0.0
  %437 = vmatpush1.msra.mxu0 0.0
  %438 = vmatprep.subr.mxu0 0.0
  %439 = vmatpush1.msra.mxu0 0.0
  %440 = vmatprep.subr.mxu0 0.0
  %441 = vmatpush1.msra.mxu0 0.0
  %442 = vmatprep.subr.mxu0 0.0
  %443 = vmatpush1.msra.mxu0 0.0
  %444 = vmatprep.subr.mxu0 0.0
  %445 = vmatpush1.msra.mxu0 0.0
  %446 = vmatprep.subr.mxu0 0.0
  %447 = vmatpush1.msra.mxu0 0.0
  %448 = vmatprep.subr.mxu0 0.0
  %449 = vmatpush1.msra.mxu0 0.0
  %450 = vmatprep.subr.mxu0 0.0
  %451 = vmatpush1.msra.mxu0 0.0
  %452 = vmatprep.subr.mxu0 0.0
  %453 = vmatpush1.msra.mxu0 0.0
  %454 = vmatprep.subr.mxu0 0.0
  %455 = vmatpush1.msra.mxu0 0.0
  %456 = vmatprep.subr.mxu0 0.0
  %457 = vmatpush1.msra.mxu0 0.0
  %458 = vmatprep.subr.mxu0 0.0
  %459 = vmatpush1.msra.mxu0 0.0
  %460 = vmatprep.subr.mxu0 0.0
  %461 = vmatpush1.msra.mxu0 0.0
  %462 = vmatprep.subr.mxu0 0.0
  %463 = vmatpush1.msra.mxu0 0.0
  %464 = vmatprep.subr.mxu0 0.0
  %465 = vmatpush1.msra.mxu0 0.0
  %466 = vmatprep.subr.mxu0 0.0
  %467 = vmatpush1.msra.mxu0 0.0
  %468 = vmatprep.subr.mxu0 0.0
  %469 = vmatpush1.msra.mxu0 0.0
  %470 = vmatprep.mubr.f32.mxu0 0.0
  %471 = vmatmul.mubr.f32.gmra.mrb[0].mxu0 %v308
  %v472 = vpop.f32.mrb[0].mxu0
  %v473 = vadd.f32 %v302, %v472
  %v474 = vpop.f32.mrb[0].mxu0
  %475 = vdwg.mxu0
  %v476 = vadd.f32 %v306, %v473
  %v477 = vxor.u32 %v476, 2147483648
  %v478 = vmul.f32 %v477, 1.442695
  %v479 = vpow.pop %v478
  %v480 = vadd.f32 %v479, 1.0
  %v481 = vrcp.pop %v480
  %v482 = vmul.f32 1.0, %v481
  %484 = vrot.lane.b32.xlu0 %v473, 64
  %v485 = vpop.permute.xlu0 %484
  %v487 = vmul.f32 %v482, %v485
  %489 = vrot.lane.b32.xlu0 %v487, 64
  %v490 = vpop.permute.xlu0 %489
  %v492 = vadd.f32 %v306, %v490
  %v493 = vtanh.pop %v492
  %v494 = vsub.f32 1.0, %v482
  %496 = vrot.lane.b32.xlu0 %v493, 96
  %v497 = vpop.permute.xlu0 %496
  %v499 = vmul.f32 %v494, %v497
  %v500 = vmul.f32 %v482, 0.0
  %v501 = vadd.f32 %v499, %v500
  %503 = vrot.lane.b32.xlu0 %v405, 96
  %v504 = vpop.permute.xlu0 %503
  %506 = vst.msk [vmem:[%s7] sm:$0xff] %vm257, %v504
  %s507 = scalar_lea.vmem %s7, 56
  %vm508 = vcmask 523520
  %509 = vst.msk [vmem:[%s507] sm:$0xff] %vm508, %v501
  %s510 = scalar_lea.vmem [#allocation2], 8
  %v511 = vld [vmem:[%s510] sm:$0xff]
  %s512 = scalar_lea.vmem [#allocation3], 48
  %v513 = vld [vmem:[%s512] sm:$0xff]
  %v514 = vsel %vm257, %v504, 0
  %516 = vmatprep.subr.mxu0 0.0
  %517 = vmatpush1.msra.mxu0 %v282
  %518 = vmatprep.subr.mxu0 0.0
  %519 = vmatpush1.msra.mxu0 %v283
  %520 = vmatprep.subr.mxu0 0.0
  %521 = vmatpush1.msra.mxu0 %v284
  %522 = vmatprep.subr.mxu0 0.0
  %523 = vmatpush1.msra.mxu0 %v285
  %524 = vmatprep.subr.mxu0 0.0
  %525 = vmatpush1.msra.mxu0 0.0
  %526 = vmatprep.subr.mxu0 0.0
  %527 = vmatpush1.msra.mxu0 0.0
  %528 = vmatprep.subr.mxu0 0.0
  %529 = vmatpush1.msra.mxu0 0.0
  %530 = vmatprep.subr.mxu0 0.0
  %531 = vmatpush1.msra.mxu0 0.0
  %532 = vmatprep.subr.mxu0 0.0
  %533 = vmatpush1.msra.mxu0 0.0
  %534 = vmatprep.subr.mxu0 0.0
  %535 = vmatpush1.msra.mxu0 0.0
  %536 = vmatprep.subr.mxu0 0.0
  %537 = vmatpush1.msra.mxu0 0.0
  %538 = vmatprep.subr.mxu0 0.0
  %539 = vmatpush1.msra.mxu0 0.0
  %540 = vmatprep.subr.mxu0 0.0
  %541 = vmatpush1.msra.mxu0 0.0
  %542 = vmatprep.subr.mxu0 0.0
  %543 = vmatpush1.msra.mxu0 0.0
  %544 = vmatprep.subr.mxu0 0.0
  %545 = vmatpush1.msra.mxu0 0.0
  %546 = vmatprep.subr.mxu0 0.0
  %547 = vmatpush1.msra.mxu0 0.0
  %548 = vmatprep.subr.mxu0 0.0
  %549 = vmatpush1.msra.mxu0 0.0
  %550 = vmatprep.subr.mxu0 0.0
  %551 = vmatpush1.msra.mxu0 0.0
  %552 = vmatprep.subr.mxu0 0.0
  %553 = vmatpush1.msra.mxu0 0.0
  %554 = vmatprep.subr.mxu0 0.0
  %555 = vmatpush1.msra.mxu0 0.0
  %556 = vmatprep.subr.mxu0 0.0
  %557 = vmatpush1.msra.mxu0 0.0
  %558 = vmatprep.subr.mxu0 0.0
  %559 = vmatpush1.msra.mxu0 0.0
  %560 = vmatprep.subr.mxu0 0.0
  %561 = vmatpush1.msra.mxu0 0.0
  %562 = vmatprep.subr.mxu0 0.0
  %563 = vmatpush1.msra.mxu0 0.0
  %564 = vmatprep.subr.mxu0 0.0
  %565 = vmatpush1.msra.mxu0 0.0
  %566 = vmatprep.subr.mxu0 0.0
  %567 = vmatpush1.msra.mxu0 0.0
  %568 = vmatprep.subr.mxu0 0.0
  %569 = vmatpush1.msra.mxu0 0.0
  %570 = vmatprep.subr.mxu0 0.0
  %571 = vmatpush1.msra.mxu0 0.0
  %572 = vmatprep.subr.mxu0 0.0
  %573 = vmatpush1.msra.mxu0 0.0
  %574 = vmatprep.subr.mxu0 0.0
  %575 = vmatpush1.msra.mxu0 0.0
  %576 = vmatprep.subr.mxu0 0.0
  %577 = vmatpush1.msra.mxu0 0.0
  %578 = vmatprep.subr.mxu0 0.0
  %579 = vmatpush1.msra.mxu0 0.0
  %580 = vmatprep.mubr.f32.mxu0 0.0
  %581 = vmatmul.mubr.f32.gmra.mrb[0].mxu0 %v514
  %v582 = vpop.f32.mrb[0].mxu0
  %v583 = vadd.f32 %v295, %v582
  %v584 = vpop.f32.mrb[0].mxu0
  %585 = vdwg.mxu0
  %v586 = vadd.f32 %v511, %v583
  %v587 = vxor.u32 %v586, 2147483648
  %v588 = vmul.f32 %v587, 1.442695
  %v589 = vpow.pop %v588
  %v590 = vadd.f32 %v589, 1.0
  %v591 = vrcp.pop %v590
  %v592 = vmul.f32 1.0, %v591
  %594 = vrot.lane.b32.xlu0 %v583, 64
  %v595 = vpop.permute.xlu0 %594
  %v597 = vmul.f32 %v592, %v595
  %599 = vrot.lane.b32.xlu0 %v597, 64
  %v600 = vpop.permute.xlu0 %599
  %v602 = vadd.f32 %v511, %v600
  %v603 = vtanh.pop %v602
  %v604 = vsub.f32 1.0, %v592
  %606 = vrot.lane.b32.xlu0 %v603, 96
  %v607 = vpop.permute.xlu0 %606
  %v609 = vmul.f32 %v604, %v607
  %v610 = vmul.f32 %v592, %v405
  %v611 = vadd.f32 %v609, %v610
  %613 = vrot.lane.b32.xlu0 %v501, 96
  %v614 = vpop.permute.xlu0 %613
  %v615 = vsel %vm257, %v614, 0
  %617 = vmatprep.subr.mxu0 0.0
  %618 = vmatpush1.msra.mxu0 %v286
  %619 = vmatprep.subr.mxu0 0.0
  %620 = vmatpush1.msra.mxu0 %v287
  %621 = vmatprep.subr.mxu0 0.0
  %622 = vmatpush1.msra.mxu0 %v288
  %623 = vmatprep.subr.mxu0 0.0
  %624 = vmatpush1.msra.mxu0 %v289
  %625 = vmatprep.subr.mxu0 0.0
  %626 = vmatpush1.msra.mxu0 0.0
  %627 = vmatprep.subr.mxu0 0.0
  %628 = vmatpush1.msra.mxu0 0.0
  %629 = vmatprep.subr.mxu0 0.0
  %630 = vmatpush1.msra.mxu0 0.0
  %631 = vmatprep.subr.mxu0 0.0
  %632 = vmatpush1.msra.mxu0 0.0
  %633 = vmatprep.subr.mxu0 0.0
  %634 = vmatpush1.msra.mxu0 0.0
  %635 = vmatprep.subr.mxu0 0.0
  %636 = vmatpush1.msra.mxu0 0.0
  %637 = vmatprep.subr.mxu0 0.0
  %638 = vmatpush1.msra.mxu0 0.0
  %639 = vmatprep.subr.mxu0 0.0
  %640 = vmatpush1.msra.mxu0 0.0
  %641 = vmatprep.subr.mxu0 0.0
  %642 = vmatpush1.msra.mxu0 0.0
  %643 = vmatprep.subr.mxu0 0.0
  %644 = vmatpush1.msra.mxu0 0.0
  %645 = vmatprep.subr.mxu0 0.0
  %646 = vmatpush1.msra.mxu0 0.0
  %647 = vmatprep.subr.mxu0 0.0
  %648 = vmatpush1.msra.mxu0 0.0
  %649 = vmatprep.subr.mxu0 0.0
  %650 = vmatpush1.msra.mxu0 0.0
  %651 = vmatprep.subr.mxu0 0.0
  %652 = vmatpush1.msra.mxu0 0.0
  %653 = vmatprep.subr.mxu0 0.0
  %654 = vmatpush1.msra.mxu0 0.0
  %655 = vmatprep.subr.mxu0 0.0
  %656 = vmatpush1.msra.mxu0 0.0
  %657 = vmatprep.subr.mxu0 0.0
  %658 = vmatpush1.msra.mxu0 0.0
  %659 = vmatprep.subr.mxu0 0.0
  %660 = vmatpush1.msra.mxu0 0.0
  %661 = vmatprep.subr.mxu0 0.0
  %662 = vmatpush1.msra.mxu0 0.0
  %663 = vmatprep.subr.mxu0 0.0
  %664 = vmatpush1.msra.mxu0 0.0
  %665 = vmatprep.subr.mxu0 0.0
  %666 = vmatpush1.msra.mxu0 0.0
  %667 = vmatprep.subr.mxu0 0.0
  %668 = vmatpush1.msra.mxu0 0.0
  %669 = vmatprep.subr.mxu0 0.0
  %670 = vmatpush1.msra.mxu0 0.0
  %671 = vmatprep.subr.mxu0 0.0
  %672 = vmatpush1.msra.mxu0 0.0
  %673 = vmatprep.subr.mxu0 0.0
  %674 = vmatpush1.msra.mxu0 0.0
  %675 = vmatprep.subr.mxu0 0.0
  %676 = vmatpush1.msra.mxu0 0.0
  %677 = vmatprep.subr.mxu0 0.0
  %678 = vmatpush1.msra.mxu0 0.0
  %679 = vmatprep.subr.mxu0 0.0
  %680 = vmatpush1.msra.mxu0 0.0
  %681 = vmatprep.mubr.f32.mxu0 0.0
  %682 = vmatmul.mubr.f32.gmra.mrb[0].mxu0 %v615
  %v683 = vpop.f32.mrb[0].mxu0
  %v684 = vadd.f32 %v302, %v683
  %v685 = vpop.f32.mrb[0].mxu0
  %686 = vdwg.mxu0
  %v687 = vadd.f32 %v513, %v684
  %v688 = vxor.u32 %v687, 2147483648
  %v689 = vmul.f32 %v688, 1.442695
  %v690 = vpow.pop %v689
  %v691 = vadd.f32 %v690, 1.0
  %v692 = vrcp.pop %v691
  %v693 = vmul.f32 1.0, %v692
  %695 = vrot.lane.b32.xlu0 %v684, 64
  %v696 = vpop.permute.xlu0 %695
  %v698 = vmul.f32 %v693, %v696
  %700 = vrot.lane.b32.xlu0 %v698, 64
  %v701 = vpop.permute.xlu0 %700
  %v703 = vadd.f32 %v513, %v701
  %v704 = vtanh.pop %v703
  %v705 = vsub.f32 1.0, %v693
  %707 = vrot.lane.b32.xlu0 %v704, 96
  %v708 = vpop.permute.xlu0 %707
  %v710 = vmul.f32 %v705, %v708
  %v711 = vmul.f32 %v693, %v501
  %v712 = vadd.f32 %v710, %v711
  %714 = vrot.lane.b32.xlu0 %v611, 96
  %v715 = vpop.permute.xlu0 %714
  %s717 = scalar_lea.vmem %s7, 8
  %718 = vst.msk [vmem:[%s717] sm:$0xff] %vm257, %v715
  %s719 = scalar_lea.vmem %s7, 48
  %720 = vst.msk [vmem:[%s719] sm:$0xff] %vm508, %v712
  %s721 = scalar_lea.vmem [#allocation2], 16
  %v722 = vld [vmem:[%s721] sm:$0xff]
  %s723 = scalar_lea.vmem [#allocation3], 40
  %v724 = vld [vmem:[%s723] sm:$0xff]
  %v725 = vsel %vm257, %v715, 0
  %727 = vmatprep.subr.mxu0 0.0
  %728 = vmatpush1.msra.mxu0 %v282
  %729 = vmatprep.subr.mxu0 0.0
  %730 = vmatpush1.msra.mxu0 %v283
  %731 = vmatprep.subr.mxu0 0.0
  %732 = vmatpush1.msra.mxu0 %v284
  %733 = vmatprep.subr.mxu0 0.0
  %734 = vmatpush1.msra.mxu0 %v285
  %735 = vmatprep.subr.mxu0 0.0
  %736 = vmatpush1.msra.mxu0 0.0
  %737 = vmatprep.subr.mxu0 0.0
  %738 = vmatpush1.msra.mxu0 0.0
  %739 = vmatprep.subr.mxu0 0.0
  %740 = vmatpush1.msra.mxu0 0.0
  %741 = vmatprep.subr.mxu0 0.0
  %742 = vmatpush1.msra.mxu0 0.0
  %743 = vmatprep.subr.mxu0 0.0
  %744 = vmatpush1.msra.mxu0 0.0
  %745 = vmatprep.subr.mxu0 0.0
  %746 = vmatpush1.msra.mxu0 0.0
  %747 = vmatprep.subr.mxu0 0.0
  %748 = vmatpush1.msra.mxu0 0.0
  %749 = vmatprep.subr.mxu0 0.0
  %750 = vmatpush1.msra.mxu0 0.0
  %751 = vmatprep.subr.mxu0 0.0
  %752 = vmatpush1.msra.mxu0 0.0
  %753 = vmatprep.subr.mxu0 0.0
  %754 = vmatpush1.msra.mxu0 0.0
  %755 = vmatprep.subr.mxu0 0.0
  %756 = vmatpush1.msra.mxu0 0.0
  %757 = vmatprep.subr.mxu0 0.0
  %758 = vmatpush1.msra.mxu0 0.0
  %759 = vmatprep.subr.mxu0 0.0
  %760 = vmatpush1.msra.mxu0 0.0
  %761 = vmatprep.subr.mxu0 0.0
  %762 = vmatpush1.msra.mxu0 0.0
  %763 = vmatprep.subr.mxu0 0.0
  %764 = vmatpush1.msra.mxu0 0.0
  %765 = vmatprep.subr.mxu0 0.0
  %766 = vmatpush1.msra.mxu0 0.0
  %767 = vmatprep.subr.mxu0 0.0
  %768 = vmatpush1.msra.mxu0 0.0
  %769 = vmatprep.subr.mxu0 0.0
  %770 = vmatpush1.msra.mxu0 0.0
  %771 = vmatprep.subr.mxu0 0.0
  %772 = vmatpush1.msra.mxu0 0.0
  %773 = vmatprep.subr.mxu0 0.0
  %774 = vmatpush1.msra.mxu0 0.0
  %775 = vmatprep.subr.mxu0 0.0
  %776 = vmatpush1.msra.mxu0 0.0
  %777 = vmatprep.subr.mxu0 0.0
  %778 = vmatpush1.msra.mxu0 0.0
  %779 = vmatprep.subr.mxu0 0.0
  %780 = vmatpush1.msra.mxu0 0.0
  %781 = vmatprep.subr.mxu0 0.0
  %782 = vmatpush1.msra.mxu0 0.0
  %783 = vmatprep.subr.mxu0 0.0
  %784 = vmatpush1.msra.mxu0 0.0
  %785 = vmatprep.subr.mxu0 0.0
  %786 = vmatpush1.msra.mxu0 0.0
  %787 = vmatprep.subr.mxu0 0.0
  %788 = vmatpush1.msra.mxu0 0.0
  %789 = vmatprep.subr.mxu0 0.0
  %790 = vmatpush1.msra.mxu0 0.0
  %791 = vmatprep.mubr.f32.mxu0 0.0
  %792 = vmatmul.mubr.f32.gmra.mrb[0].mxu0 %v725
  %v793 = vpop.f32.mrb[0].mxu0
  %v794 = vadd.f32 %v295, %v793
  %v795 = vpop.f32.mrb[0].mxu0
  %796 = vdwg.mxu0
  %v797 = vadd.f32 %v722, %v794
  %v798 = vxor.u32 %v797, 2147483648
  %v799 = vmul.f32 %v798, 1.442695
  %v800 = vpow.pop %v799
  %v801 = vadd.f32 %v800, 1.0
  %v802 = vrcp.pop %v801
  %v803 = vmul.f32 1.0, %v802
  %805 = vrot.lane.b32.xlu0 %v794, 64
  %v806 = vpop.permute.xlu0 %805
  %v808 = vmul.f32 %v803, %v806
  %810 = vrot.lane.b32.xlu0 %v808, 64
  %v811 = vpop.permute.xlu0 %810
  %v813 = vadd.f32 %v722, %v811
  %v814 = vtanh.pop %v813
  %v815 = vsub.f32 1.0, %v803
  %817 = vrot.lane.b32.xlu0 %v814, 96
  %v818 = vpop.permute.xlu0 %817
  %v820 = vmul.f32 %v815, %v818
  %v821 = vmul.f32 %v803, %v611
  %v822 = vadd.f32 %v820, %v821
  %824 = vrot.lane.b32.xlu0 %v712, 96
  %v825 = vpop.permute.xlu0 %824
  %v826 = vsel %vm257, %v825, 0
  %828 = vmatprep.subr.mxu0 0.0
  %829 = vmatpush1.msra.mxu0 %v286
  %830 = vmatprep.subr.mxu0 0.0
  %831 = vmatpush1.msra.mxu0 %v287
  %832 = vmatprep.subr.mxu0 0.0
  %833 = vmatpush1.msra.mxu0 %v288
  %834 = vmatprep.subr.mxu0 0.0
  %835 = vmatpush1.msra.mxu0 %v289
  %836 = vmatprep.subr.mxu0 0.0
  %837 = vmatpush1.msra.mxu0 0.0
  %838 = vmatprep.subr.mxu0 0.0
  %839 = vmatpush1.msra.mxu0 0.0
  %840 = vmatprep.subr.mxu0 0.0
  %841 = vmatpush1.msra.mxu0 0.0
  %842 = vmatprep.subr.mxu0 0.0
  %843 = vmatpush1.msra.mxu0 0.0
  %844 = vmatprep.subr.mxu0 0.0
  %845 = vmatpush1.msra.mxu0 0.0
  %846 = vmatprep.subr.mxu0 0.0
  %847 = vmatpush1.msra.mxu0 0.0
  %848 = vmatprep.subr.mxu0 0.0
  %849 = vmatpush1.msra.mxu0 0.0
  %850 = vmatprep.subr.mxu0 0.0
  %851 = vmatpush1.msra.mxu0 0.0
  %852 = vmatprep.subr.mxu0 0.0
  %853 = vmatpush1.msra.mxu0 0.0
  %854 = vmatprep.subr.mxu0 0.0
  %855 = vmatpush1.msra.mxu0 0.0
  %856 = vmatprep.subr.mxu0 0.0
  %857 = vmatpush1.msra.mxu0 0.0
  %858 = vmatprep.subr.mxu0 0.0
  %859 = vmatpush1.msra.mxu0 0.0
  %860 = vmatprep.subr.mxu0 0.0
  %861 = vmatpush1.msra.mxu0 0.0
  %862 = vmatprep.subr.mxu0 0.0
  %863 = vmatpush1.msra.mxu0 0.0
  %864 = vmatprep.subr.mxu0 0.0
  %865 = vmatpush1.msra.mxu0 0.0
  %866 = vmatprep.subr.mxu0 0.0
  %867 = vmatpush1.msra.mxu0 0.0
  %868 = vmatprep.subr.mxu0 0.0
  %869 = vmatpush1.msra.mxu0 0.0
  %870 = vmatprep.subr.mxu0 0.0
  %871 = vmatpush1.msra.mxu0 0.0
  %872 = vmatprep.subr.mxu0 0.0
  %873 = vmatpush1.msra.mxu0 0.0
  %874 = vmatprep.subr.mxu0 0.0
  %875 = vmatpush1.msra.mxu0 0.0
  %876 = vmatprep.subr.mxu0 0.0
  %877 = vmatpush1.msra.mxu0 0.0
  %878 = vmatprep.subr.mxu0 0.0
  %879 = vmatpush1.msra.mxu0 0.0
  %880 = vmatprep.subr.mxu0 0.0
  %881 = vmatpush1.msra.mxu0 0.0
  %882 = vmatprep.subr.mxu0 0.0
  %883 = vmatpush1.msra.mxu0 0.0
  %884 = vmatprep.subr.mxu0 0.0
  %885 = vmatpush1.msra.mxu0 0.0
  %886 = vmatprep.subr.mxu0 0.0
  %887 = vmatpush1.msra.mxu0 0.0
  %888 = vmatprep.subr.mxu0 0.0
  %889 = vmatpush1.msra.mxu0 0.0
  %890 = vmatprep.subr.mxu0 0.0
  %891 = vmatpush1.msra.mxu0 0.0
  %892 = vmatprep.mubr.f32.mxu0 0.0
  %893 = vmatmul.mubr.f32.gmra.mrb[0].mxu0 %v826
  %v894 = vpop.f32.mrb[0].mxu0
  %v895 = vadd.f32 %v302, %v894
  %v896 = vpop.f32.mrb[0].mxu0
  %897 = vdwg.mxu0
  %v898 = vadd.f32 %v724, %v895
  %v899 = vxor.u32 %v898, 2147483648
  %v900 = vmul.f32 %v899, 1.442695
  %v901 = vpow.pop %v900
  %v902 = vadd.f32 %v901, 1.0
  %v903 = vrcp.pop %v902
  %v904 = vmul.f32 1.0, %v903
  %906 = vrot.lane.b32.xlu0 %v895, 64
  %v907 = vpop.permute.xlu0 %906
  %v909 = vmul.f32 %v904, %v907
  %911 = vrot.lane.b32.xlu0 %v909, 64
  %v912 = vpop.permute.xlu0 %911
  %v914 = vadd.f32 %v724, %v912
  %v915 = vtanh.pop %v914
  %v916 = vsub.f32 1.0, %v904
  %918 = vrot.lane.b32.xlu0 %v915, 96
  %v919 = vpop.permute.xlu0 %918
  %v921 = vmul.f32 %v916, %v919
  %v922 = vmul.f32 %v904, %v712
  %v923 = vadd.f32 %v921, %v922
  %925 = vrot.lane.b32.xlu0 %v822, 96
  %v926 = vpop.permute.xlu0 %925
  %s928 = scalar_lea.vmem %s7, 16
  %929 = vst.msk [vmem:[%s928] sm:$0xff] %vm257, %v926
  %s930 = scalar_lea.vmem %s7, 40
  %931 = vst.msk [vmem:[%s930] sm:$0xff] %vm508, %v923
  %s932 = scalar_lea.vmem [#allocation2], 24
  %v933 = vld [vmem:[%s932] sm:$0xff]
  %s934 = scalar_lea.vmem [#allocation3], 32
  %v935 = vld [vmem:[%s934] sm:$0xff]
  %v936 = vsel %vm257, %v926, 0
  %938 = vmatprep.subr.mxu0 0.0
  %939 = vmatpush1.msra.mxu0 %v282
  %940 = vmatprep.subr.mxu0 0.0
  %941 = vmatpush1.msra.mxu0 %v283
  %942 = vmatprep.subr.mxu0 0.0
  %943 = vmatpush1.msra.mxu0 %v284
  %944 = vmatprep.subr.mxu0 0.0
  %945 = vmatpush1.msra.mxu0 %v285
  %946 = vmatprep.subr.mxu0 0.0
  %947 = vmatpush1.msra.mxu0 0.0
  %948 = vmatprep.subr.mxu0 0.0
  %949 = vmatpush1.msra.mxu0 0.0
  %950 = vmatprep.subr.mxu0 0.0
  %951 = vmatpush1.msra.mxu0 0.0
  %952 = vmatprep.subr.mxu0 0.0
  %953 = vmatpush1.msra.mxu0 0.0
  %954 = vmatprep.subr.mxu0 0.0
  %955 = vmatpush1.msra.mxu0 0.0
  %956 = vmatprep.subr.mxu0 0.0
  %957 = vmatpush1.msra.mxu0 0.0
  %958 = vmatprep.subr.mxu0 0.0
  %959 = vmatpush1.msra.mxu0 0.0
  %960 = vmatprep.subr.mxu0 0.0
  %961 = vmatpush1.msra.mxu0 0.0
  %962 = vmatprep.subr.mxu0 0.0
  %963 = vmatpush1.msra.mxu0 0.0
  %964 = vmatprep.subr.mxu0 0.0
  %965 = vmatpush1.msra.mxu0 0.0
  %966 = vmatprep.subr.mxu0 0.0
  %967 = vmatpush1.msra.mxu0 0.0
  %968 = vmatprep.subr.mxu0 0.0
  %969 = vmatpush1.msra.mxu0 0.0
  %970 = vmatprep.subr.mxu0 0.0
  %971 = vmatpush1.msra.mxu0 0.0
  %972 = vmatprep.subr.mxu0 0.0
  %973 = vmatpush1.msra.mxu0 0.0
  %974 = vmatprep.subr.mxu0 0.0
  %975 = vmatpush1.msra.mxu0 0.0
  %976 = vmatprep.subr.mxu0 0.0
  %977 = vmatpush1.msra.mxu0 0.0
  %978 = vmatprep.subr.mxu0 0.0
  %979 = vmatpush1.msra.mxu0 0.0
  %980 = vmatprep.subr.mxu0 0.0
  %981 = vmatpush1.msra.mxu0 0.0
  %982 = vmatprep.subr.mxu0 0.0
  %983 = vmatpush1.msra.mxu0 0.0
  %984 = vmatprep.subr.mxu0 0.0
  %985 = vmatpush1.msra.mxu0 0.0
  %986 = vmatprep.subr.mxu0 0.0
  %987 = vmatpush1.msra.mxu0 0.0
  %988 = vmatprep.subr.mxu0 0.0
  %989 = vmatpush1.msra.mxu0 0.0
  %990 = vmatprep.subr.mxu0 0.0
  %991 = vmatpush1.msra.mxu0 0.0
  %992 = vmatprep.subr.mxu0 0.0
  %993 = vmatpush1.msra.mxu0 0.0
  %994 = vmatprep.subr.mxu0 0.0
  %995 = vmatpush1.msra.mxu0 0.0
  %996 = vmatprep.subr.mxu0 0.0
  %997 = vmatpush1.msra.mxu0 0.0
  %998 = vmatprep.subr.mxu0 0.0
  %999 = vmatpush1.msra.mxu0 0.0
  %1000 = vmatprep.subr.mxu0 0.0
  %1001 = vmatpush1.msra.mxu0 0.0
  %1002 = vmatprep.mubr.f32.mxu0 0.0
  %1003 = vmatmul.mubr.f32.gmra.mrb[0].mxu0 %v936
  %v1004 = vpop.f32.mrb[0].mxu0
  %v1005 = vadd.f32 %v295, %v1004
  %v1006 = vpop.f32.mrb[0].mxu0
  %1007 = vdwg.mxu0
  %v1008 = vadd.f32 %v933, %v1005
  %v1009 = vxor.u32 %v1008, 2147483648
  %v1010 = vmul.f32 %v1009, 1.442695
  %v1011 = vpow.pop %v1010
  %v1012 = vadd.f32 %v1011, 1.0
  %v1013 = vrcp.pop %v1012
  %v1014 = vmul.f32 1.0, %v1013
  %1016 = vrot.lane.b32.xlu0 %v1005, 64
  %v1017 = vpop.permute.xlu0 %1016
  %v1019 = vmul.f32 %v1014, %v1017
  %1021 = vrot.lane.b32.xlu0 %v1019, 64
  %v1022 = vpop.permute.xlu0 %1021
  %v1024 = vadd.f32 %v933, %v1022
  %v1025 = vtanh.pop %v1024
  %v1026 = vsub.f32 1.0, %v1014
  %1028 = vrot.lane.b32.xlu0 %v1025, 96
  %v1029 = vpop.permute.xlu0 %1028
  %v1031 = vmul.f32 %v1026, %v1029
  %v1032 = vmul.f32 %v1014, %v822
  %v1033 = vadd.f32 %v1031, %v1032
  %1035 = vrot.lane.b32.xlu0 %v923, 96
  %v1036 = vpop.permute.xlu0 %1035
  %v1037 = vsel %vm257, %v1036, 0
  %1039 = vmatprep.subr.mxu0 0.0
  %1040 = vmatpush1.msra.mxu0 %v286
  %1041 = vmatprep.subr.mxu0 0.0
  %1042 = vmatpush1.msra.mxu0 %v287
  %1043 = vmatprep.subr.mxu0 0.0
  %1044 = vmatpush1.msra.mxu0 %v288
  %1045 = vmatprep.subr.mxu0 0.0
  %1046 = vmatpush1.msra.mxu0 %v289
  %1047 = vmatprep.subr.mxu0 0.0
  %1048 = vmatpush1.msra.mxu0 0.0
  %1049 = vmatprep.subr.mxu0 0.0
  %1050 = vmatpush1.msra.mxu0 0.0
  %1051 = vmatprep.subr.mxu0 0.0
  %1052 = vmatpush1.msra.mxu0 0.0
  %1053 = vmatprep.subr.mxu0 0.0
  %1054 = vmatpush1.msra.mxu0 0.0
  %1055 = vmatprep.subr.mxu0 0.0
  %1056 = vmatpush1.msra.mxu0 0.0
  %1057 = vmatprep.subr.mxu0 0.0
  %1058 = vmatpush1.msra.mxu0 0.0
  %1059 = vmatprep.subr.mxu0 0.0
  %1060 = vmatpush1.msra.mxu0 0.0
  %1061 = vmatprep.subr.mxu0 0.0
  %1062 = vmatpush1.msra.mxu0 0.0
  %1063 = vmatprep.subr.mxu0 0.0
  %1064 = vmatpush1.msra.mxu0 0.0
  %1065 = vmatprep.subr.mxu0 0.0
  %1066 = vmatpush1.msra.mxu0 0.0
  %1067 = vmatprep.subr.mxu0 0.0
  %1068 = vmatpush1.msra.mxu0 0.0
  %1069 = vmatprep.subr.mxu0 0.0
  %1070 = vmatpush1.msra.mxu0 0.0
  %1071 = vmatprep.subr.mxu0 0.0
  %1072 = vmatpush1.msra.mxu0 0.0
  %1073 = vmatprep.subr.mxu0 0.0
  %1074 = vmatpush1.msra.mxu0 0.0
  %1075 = vmatprep.subr.mxu0 0.0
  %1076 = vmatpush1.msra.mxu0 0.0
  %1077 = vmatprep.subr.mxu0 0.0
  %1078 = vmatpush1.msra.mxu0 0.0
  %1079 = vmatprep.subr.mxu0 0.0
  %1080 = vmatpush1.msra.mxu0 0.0
  %1081 = vmatprep.subr.mxu0 0.0
  %1082 = vmatpush1.msra.mxu0 0.0
  %1083 = vmatprep.subr.mxu0 0.0
  %1084 = vmatpush1.msra.mxu0 0.0
  %1085 = vmatprep.subr.mxu0 0.0
  %1086 = vmatpush1.msra.mxu0 0.0
  %1087 = vmatprep.subr.mxu0 0.0
  %1088 = vmatpush1.msra.mxu0 0.0
  %1089 = vmatprep.subr.mxu0 0.0
  %1090 = vmatpush1.msra.mxu0 0.0
  %1091 = vmatprep.subr.mxu0 0.0
  %1092 = vmatpush1.msra.mxu0 0.0
  %1093 = vmatprep.subr.mxu0 0.0
  %1094 = vmatpush1.msra.mxu0 0.0
  %1095 = vmatprep.subr.mxu0 0.0
  %1096 = vmatpush1.msra.mxu0 0.0
  %1097 = vmatprep.subr.mxu0 0.0
  %1098 = vmatpush1.msra.mxu0 0.0
  %1099 = vmatprep.subr.mxu0 0.0
  %1100 = vmatpush1.msra.mxu0 0.0
  %1101 = vmatprep.subr.mxu0 0.0
  %1102 = vmatpush1.msra.mxu0 0.0
  %1103 = vmatprep.mubr.f32.mxu0 0.0
  %1104 = vmatmul.mubr.f32.gmra.mrb[0].mxu0 %v1037
  %v1105 = vpop.f32.mrb[0].mxu0
  %v1106 = vadd.f32 %v302, %v1105
  %v1107 = vpop.f32.mrb[0].mxu0
  %1108 = vdwg.mxu0
  %v1109 = vadd.f32 %v935, %v1106
  %v1110 = vxor.u32 %v1109, 2147483648
  %v1111 = vmul.f32 %v1110, 1.442695
  %v1112 = vpow.pop %v1111
  %v1113 = vadd.f32 %v1112, 1.0
  %v1114 = vrcp.pop %v1113
  %v1115 = vmul.f32 1.0, %v1114
  %1117 = vrot.lane.b32.xlu0 %v1106, 64
  %v1118 = vpop.permute.xlu0 %1117
  %v1120 = vmul.f32 %v1115, %v1118
  %1122 = vrot.lane.b32.xlu0 %v1120, 64
  %v1123 = vpop.permute.xlu0 %1122
  %v1125 = vadd.f32 %v935, %v1123
  %v1126 = vtanh.pop %v1125
  %v1127 = vsub.f32 1.0, %v1115
  %1129 = vrot.lane.b32.xlu0 %v1126, 96
  %v1130 = vpop.permute.xlu0 %1129
  %v1132 = vmul.f32 %v1127, %v1130
  %v1133 = vmul.f32 %v1115, %v923
  %v1134 = vadd.f32 %v1132, %v1133
  %1136 = vrot.lane.b32.xlu0 %v1033, 96
  %v1137 = vpop.permute.xlu0 %1136
  %s1139 = scalar_lea.vmem %s7, 24
  %1140 = vst.msk [vmem:[%s1139] sm:$0xff] %vm257, %v1137
  %s1141 = scalar_lea.vmem %s7, 32
  %1142 = vst.msk [vmem:[%s1141] sm:$0xff] %vm508, %v1134
  %s1143 = scalar_lea.vmem [#allocation2], 32
  %v1144 = vld [vmem:[%s1143] sm:$0xff]
  %s1145 = scalar_lea.vmem [#allocation3], 24
  %v1146 = vld [vmem:[%s1145] sm:$0xff]
  %v1147 = vsel %vm257, %v1137, 0
  %1149 = vmatprep.subr.mxu0 0.0
  %1150 = vmatpush1.msra.mxu0 %v282
  %1151 = vmatprep.subr.mxu0 0.0
  %1152 = vmatpush1.msra.mxu0 %v283
  %1153 = vmatprep.subr.mxu0 0.0
  %1154 = vmatpush1.msra.mxu0 %v284
  %1155 = vmatprep.subr.mxu0 0.0
  %1156 = vmatpush1.msra.mxu0 %v285
  %1157 = vmatprep.subr.mxu0 0.0
  %1158 = vmatpush1.msra.mxu0 0.0
  %1159 = vmatprep.subr.mxu0 0.0
  %1160 = vmatpush1.msra.mxu0 0.0
  %1161 = vmatprep.subr.mxu0 0.0
  %1162 = vmatpush1.msra.mxu0 0.0
  %1163 = vmatprep.subr.mxu0 0.0
  %1164 = vmatpush1.msra.mxu0 0.0
  %1165 = vmatprep.subr.mxu0 0.0
  %1166 = vmatpush1.msra.mxu0 0.0
  %1167 = vmatprep.subr.mxu0 0.0
  %1168 = vmatpush1.msra.mxu0 0.0
  %1169 = vmatprep.subr.mxu0 0.0
  %1170 = vmatpush1.msra.mxu0 0.0
  %1171 = vmatprep.subr.mxu0 0.0
  %1172 = vmatpush1.msra.mxu0 0.0
  %1173 = vmatprep.subr.mxu0 0.0
  %1174 = vmatpush1.msra.mxu0 0.0
  %1175 = vmatprep.subr.mxu0 0.0
  %1176 = vmatpush1.msra.mxu0 0.0
  %1177 = vmatprep.subr.mxu0 0.0
  %1178 = vmatpush1.msra.mxu0 0.0
  %1179 = vmatprep.subr.mxu0 0.0
  %1180 = vmatpush1.msra.mxu0 0.0
  %1181 = vmatprep.subr.mxu0 0.0
  %1182 = vmatpush1.msra.mxu0 0.0
  %1183 = vmatprep.subr.mxu0 0.0
  %1184 = vmatpush1.msra.mxu0 0.0
  %1185 = vmatprep.subr.mxu0 0.0
  %1186 = vmatpush1.msra.mxu0 0.0
  %1187 = vmatprep.subr.mxu0 0.0
  %1188 = vmatpush1.msra.mxu0 0.0
  %1189 = vmatprep.subr.mxu0 0.0
  %1190 = vmatpush1.msra.mxu0 0.0
  %1191 = vmatprep.subr.mxu0 0.0
  %1192 = vmatpush1.msra.mxu0 0.0
  %1193 = vmatprep.subr.mxu0 0.0
  %1194 = vmatpush1.msra.mxu0 0.0
  %1195 = vmatprep.subr.mxu0 0.0
  %1196 = vmatpush1.msra.mxu0 0.0
  %1197 = vmatprep.subr.mxu0 0.0
  %1198 = vmatpush1.msra.mxu0 0.0
  %1199 = vmatprep.subr.mxu0 0.0
  %1200 = vmatpush1.msra.mxu0 0.0
  %1201 = vmatprep.subr.mxu0 0.0
  %1202 = vmatpush1.msra.mxu0 0.0
  %1203 = vmatprep.subr.mxu0 0.0
  %1204 = vmatpush1.msra.mxu0 0.0
  %1205 = vmatprep.subr.mxu0 0.0
  %1206 = vmatpush1.msra.mxu0 0.0
  %1207 = vmatprep.subr.mxu0 0.0
  %1208 = vmatpush1.msra.mxu0 0.0
  %1209 = vmatprep.subr.mxu0 0.0
  %1210 = vmatpush1.msra.mxu0 0.0
  %1211 = vmatprep.subr.mxu0 0.0
  %1212 = vmatpush1.msra.mxu0 0.0
  %1213 = vmatprep.mubr.f32.mxu0 0.0
  %1214 = vmatmul.mubr.f32.gmra.mrb[0].mxu0 %v1147
  %v1215 = vpop.f32.mrb[0].mxu0
  %v1216 = vadd.f32 %v295, %v1215
  %v1217 = vpop.f32.mrb[0].mxu0
  %1218 = vdwg.mxu0
  %v1219 = vadd.f32 %v1144, %v1216
  %v1220 = vxor.u32 %v1219, 2147483648
  %v1221 = vmul.f32 %v1220, 1.442695
  %v1222 = vpow.pop %v1221
  %v1223 = vadd.f32 %v1222, 1.0
  %v1224 = vrcp.pop %v1223
  %v1225 = vmul.f32 1.0, %v1224
  %1227 = vrot.lane.b32.xlu0 %v1216, 64
  %v1228 = vpop.permute.xlu0 %1227
  %v1230 = vmul.f32 %v1225, %v1228
  %1232 = vrot.lane.b32.xlu0 %v1230, 64
  %v1233 = vpop.permute.xlu0 %1232
  %v1235 = vadd.f32 %v1144, %v1233
  %v1236 = vtanh.pop %v1235
  %v1237 = vsub.f32 1.0, %v1225
  %1239 = vrot.lane.b32.xlu0 %v1236, 96
  %v1240 = vpop.permute.xlu0 %1239
  %v1242 = vmul.f32 %v1237, %v1240
  %v1243 = vmul.f32 %v1225, %v1033
  %v1244 = vadd.f32 %v1242, %v1243
  %1246 = vrot.lane.b32.xlu0 %v1134, 96
  %v1247 = vpop.permute.xlu0 %1246
  %v1248 = vsel %vm257, %v1247, 0
  %1250 = vmatprep.subr.mxu0 0.0
  %1251 = vmatpush1.msra.mxu0 %v286
  %1252 = vmatprep.subr.mxu0 0.0
  %1253 = vmatpush1.msra.mxu0 %v287
  %1254 = vmatprep.subr.mxu0 0.0
  %1255 = vmatpush1.msra.mxu0 %v288
  %1256 = vmatprep.subr.mxu0 0.0
  %1257 = vmatpush1.msra.mxu0 %v289
  %1258 = vmatprep.subr.mxu0 0.0
  %1259 = vmatpush1.msra.mxu0 0.0
  %1260 = vmatprep.subr.mxu0 0.0
  %1261 = vmatpush1.msra.mxu0 0.0
  %1262 = vmatprep.subr.mxu0 0.0
  %1263 = vmatpush1.msra.mxu0 0.0
  %1264 = vmatprep.subr.mxu0 0.0
  %1265 = vmatpush1.msra.mxu0 0.0
  %1266 = vmatprep.subr.mxu0 0.0
  %1267 = vmatpush1.msra.mxu0 0.0
  %1268 = vmatprep.subr.mxu0 0.0
  %1269 = vmatpush1.msra.mxu0 0.0
  %1270 = vmatprep.subr.mxu0 0.0
  %1271 = vmatpush1.msra.mxu0 0.0
  %1272 = vmatprep.subr.mxu0 0.0
  %1273 = vmatpush1.msra.mxu0 0.0
  %1274 = vmatprep.subr.mxu0 0.0
  %1275 = vmatpush1.msra.mxu0 0.0
  %1276 = vmatprep.subr.mxu0 0.0
  %1277 = vmatpush1.msra.mxu0 0.0
  %1278 = vmatprep.subr.mxu0 0.0
  %1279 = vmatpush1.msra.mxu0 0.0
  %1280 = vmatprep.subr.mxu0 0.0
  %1281 = vmatpush1.msra.mxu0 0.0
  %1282 = vmatprep.subr.mxu0 0.0
  %1283 = vmatpush1.msra.mxu0 0.0
  %1284 = vmatprep.subr.mxu0 0.0
  %1285 = vmatpush1.msra.mxu0 0.0
  %1286 = vmatprep.subr.mxu0 0.0
  %1287 = vmatpush1.msra.mxu0 0.0
  %1288 = vmatprep.subr.mxu0 0.0
  %1289 = vmatpush1.msra.mxu0 0.0
  %1290 = vmatprep.subr.mxu0 0.0
  %1291 = vmatpush1.msra.mxu0 0.0
  %1292 = vmatprep.subr.mxu0 0.0
  %1293 = vmatpush1.msra.mxu0 0.0
  %1294 = vmatprep.subr.mxu0 0.0
  %1295 = vmatpush1.msra.mxu0 0.0
  %1296 = vmatprep.subr.mxu0 0.0
  %1297 = vmatpush1.msra.mxu0 0.0
  %1298 = vmatprep.subr.mxu0 0.0
  %1299 = vmatpush1.msra.mxu0 0.0
  %1300 = vmatprep.subr.mxu0 0.0
  %1301 = vmatpush1.msra.mxu0 0.0
  %1302 = vmatprep.subr.mxu0 0.0
  %1303 = vmatpush1.msra.mxu0 0.0
  %1304 = vmatprep.subr.mxu0 0.0
  %1305 = vmatpush1.msra.mxu0 0.0
  %1306 = vmatprep.subr.mxu0 0.0
  %1307 = vmatpush1.msra.mxu0 0.0
  %1308 = vmatprep.subr.mxu0 0.0
  %1309 = vmatpush1.msra.mxu0 0.0
  %1310 = vmatprep.subr.mxu0 0.0
  %1311 = vmatpush1.msra.mxu0 0.0
  %1312 = vmatprep.subr.mxu0 0.0
  %1313 = vmatpush1.msra.mxu0 0.0
  %1314 = vmatprep.mubr.f32.mxu0 0.0
  %1315 = vmatmul.mubr.f32.gmra.mrb[0].mxu0 %v1248
  %v1316 = vpop.f32.mrb[0].mxu0
  %v1317 = vadd.f32 %v302, %v1316
  %v1318 = vpop.f32.mrb[0].mxu0
  %1319 = vdwg.mxu0
  %v1320 = vadd.f32 %v1146, %v1317
  %v1321 = vxor.u32 %v1320, 2147483648
  %v1322 = vmul.f32 %v1321, 1.442695
  %v1323 = vpow.pop %v1322
  %v1324 = vadd.f32 %v1323, 1.0
  %v1325 = vrcp.pop %v1324
  %v1326 = vmul.f32 1.0, %v1325
  %1328 = vrot.lane.b32.xlu0 %v1317, 64
  %v1329 = vpop.permute.xlu0 %1328
  %v1331 = vmul.f32 %v1326, %v1329
  %1333 = vrot.lane.b32.xlu0 %v1331, 64
  %v1334 = vpop.permute.xlu0 %1333
  %v1336 = vadd.f32 %v1146, %v1334
  %v1337 = vtanh.pop %v1336
  %v1338 = vsub.f32 1.0, %v1326
  %1340 = vrot.lane.b32.xlu0 %v1337, 96
  %v1341 = vpop.permute.xlu0 %1340
  %v1343 = vmul.f32 %v1338, %v1341
  %v1344 = vmul.f32 %v1326, %v1134
  %v1345 = vadd.f32 %v1343, %v1344
  %1347 = vrot.lane.b32.xlu0 %v1244, 96
  %v1348 = vpop.permute.xlu0 %1347
  %1350 = vst.msk [vmem:[%s1141] sm:$0xff] %vm257, %v1348
  %1351 = vst.msk [vmem:[%s1139] sm:$0xff] %vm508, %v1345
  %s1352 = scalar_lea.vmem [#allocation2], 40
  %v1353 = vld [vmem:[%s1352] sm:$0xff]
  %s1354 = scalar_lea.vmem [#allocation3], 16
  %v1355 = vld [vmem:[%s1354] sm:$0xff]
  %v1356 = vsel %vm257, %v1348, 0
  %1358 = vmatprep.subr.mxu0 0.0
  %1359 = vmatpush1.msra.mxu0 %v282
  %1360 = vmatprep.subr.mxu0 0.0
  %1361 = vmatpush1.msra.mxu0 %v283
  %1362 = vmatprep.subr.mxu0 0.0
  %1363 = vmatpush1.msra.mxu0 %v284
  %1364 = vmatprep.subr.mxu0 0.0
  %1365 = vmatpush1.msra.mxu0 %v285
  %1366 = vmatprep.subr.mxu0 0.0
  %1367 = vmatpush1.msra.mxu0 0.0
  %1368 = vmatprep.subr.mxu0 0.0
  %1369 = vmatpush1.msra.mxu0 0.0
  %1370 = vmatprep.subr.mxu0 0.0
  %1371 = vmatpush1.msra.mxu0 0.0
  %1372 = vmatprep.subr.mxu0 0.0
  %1373 = vmatpush1.msra.mxu0 0.0
  %1374 = vmatprep.subr.mxu0 0.0
  %1375 = vmatpush1.msra.mxu0 0.0
  %1376 = vmatprep.subr.mxu0 0.0
  %1377 = vmatpush1.msra.mxu0 0.0
  %1378 = vmatprep.subr.mxu0 0.0
  %1379 = vmatpush1.msra.mxu0 0.0
  %1380 = vmatprep.subr.mxu0 0.0
  %1381 = vmatpush1.msra.mxu0 0.0
  %1382 = vmatprep.subr.mxu0 0.0
  %1383 = vmatpush1.msra.mxu0 0.0
  %1384 = vmatprep.subr.mxu0 0.0
  %1385 = vmatpush1.msra.mxu0 0.0
  %1386 = vmatprep.subr.mxu0 0.0
  %1387 = vmatpush1.msra.mxu0 0.0
  %1388 = vmatprep.subr.mxu0 0.0
  %1389 = vmatpush1.msra.mxu0 0.0
  %1390 = vmatprep.subr.mxu0 0.0
  %1391 = vmatpush1.msra.mxu0 0.0
  %1392 = vmatprep.subr.mxu0 0.0
  %1393 = vmatpush1.msra.mxu0 0.0
  %1394 = vmatprep.subr.mxu0 0.0
  %1395 = vmatpush1.msra.mxu0 0.0
  %1396 = vmatprep.subr.mxu0 0.0
  %1397 = vmatpush1.msra.mxu0 0.0
  %1398 = vmatprep.subr.mxu0 0.0
  %1399 = vmatpush1.msra.mxu0 0.0
  %1400 = vmatprep.subr.mxu0 0.0
  %1401 = vmatpush1.msra.mxu0 0.0
  %1402 = vmatprep.subr.mxu0 0.0
  %1403 = vmatpush1.msra.mxu0 0.0
  %1404 = vmatprep.subr.mxu0 0.0
  %1405 = vmatpush1.msra.mxu0 0.0
  %1406 = vmatprep.subr.mxu0 0.0
  %1407 = vmatpush1.msra.mxu0 0.0
  %1408 = vmatprep.subr.mxu0 0.0
  %1409 = vmatpush1.msra.mxu0 0.0
  %1410 = vmatprep.subr.mxu0 0.0
  %1411 = vmatpush1.msra.mxu0 0.0
  %1412 = vmatprep.subr.mxu0 0.0
  %1413 = vmatpush1.msra.mxu0 0.0
  %1414 = vmatprep.subr.mxu0 0.0
  %1415 = vmatpush1.msra.mxu0 0.0
  %1416 = vmatprep.subr.mxu0 0.0
  %1417 = vmatpush1.msra.mxu0 0.0
  %1418 = vmatprep.subr.mxu0 0.0
  %1419 = vmatpush1.msra.mxu0 0.0
  %1420 = vmatprep.subr.mxu0 0.0
  %1421 = vmatpush1.msra.mxu0 0.0
  %1422 = vmatprep.mubr.f32.mxu0 0.0
  %1423 = vmatmul.mubr.f32.gmra.mrb[0].mxu0 %v1356
  %v1424 = vpop.f32.mrb[0].mxu0
  %v1425 = vadd.f32 %v295, %v1424
  %v1426 = vpop.f32.mrb[0].mxu0
  %1427 = vdwg.mxu0
  %v1428 = vadd.f32 %v1353, %v1425
  %v1429 = vxor.u32 %v1428, 2147483648
  %v1430 = vmul.f32 %v1429, 1.442695
  %v1431 = vpow.pop %v1430
  %v1432 = vadd.f32 %v1431, 1.0
  %v1433 = vrcp.pop %v1432
  %v1434 = vmul.f32 1.0, %v1433
  %1436 = vrot.lane.b32.xlu0 %v1425, 64
  %v1437 = vpop.permute.xlu0 %1436
  %v1439 = vmul.f32 %v1434, %v1437
  %1441 = vrot.lane.b32.xlu0 %v1439, 64
  %v1442 = vpop.permute.xlu0 %1441
  %v1444 = vadd.f32 %v1353, %v1442
  %v1445 = vtanh.pop %v1444
  %v1446 = vsub.f32 1.0, %v1434
  %1448 = vrot.lane.b32.xlu0 %v1445, 96
  %v1449 = vpop.permute.xlu0 %1448
  %v1451 = vmul.f32 %v1446, %v1449
  %v1452 = vmul.f32 %v1434, %v1244
  %v1453 = vadd.f32 %v1451, %v1452
  %1455 = vrot.lane.b32.xlu0 %v1345, 96
  %v1456 = vpop.permute.xlu0 %1455
  %v1457 = vsel %vm257, %v1456, 0
  %1459 = vmatprep.subr.mxu0 0.0
  %1460 = vmatpush1.msra.mxu0 %v286
  %1461 = vmatprep.subr.mxu0 0.0
  %1462 = vmatpush1.msra.mxu0 %v287
  %1463 = vmatprep.subr.mxu0 0.0
  %1464 = vmatpush1.msra.mxu0 %v288
  %1465 = vmatprep.subr.mxu0 0.0
  %1466 = vmatpush1.msra.mxu0 %v289
  %1467 = vmatprep.subr.mxu0 0.0
  %1468 = vmatpush1.msra.mxu0 0.0
  %1469 = vmatprep.subr.mxu0 0.0
  %1470 = vmatpush1.msra.mxu0 0.0
  %1471 = vmatprep.subr.mxu0 0.0
  %1472 = vmatpush1.msra.mxu0 0.0
  %1473 = vmatprep.subr.mxu0 0.0
  %1474 = vmatpush1.msra.mxu0 0.0
  %1475 = vmatprep.subr.mxu0 0.0
  %1476 = vmatpush1.msra.mxu0 0.0
  %1477 = vmatprep.subr.mxu0 0.0
  %1478 = vmatpush1.msra.mxu0 0.0
  %1479 = vmatprep.subr.mxu0 0.0
  %1480 = vmatpush1.msra.mxu0 0.0
  %1481 = vmatprep.subr.mxu0 0.0
  %1482 = vmatpush1.msra.mxu0 0.0
  %1483 = vmatprep.subr.mxu0 0.0
  %1484 = vmatpush1.msra.mxu0 0.0
  %1485 = vmatprep.subr.mxu0 0.0
  %1486 = vmatpush1.msra.mxu0 0.0
  %1487 = vmatprep.subr.mxu0 0.0
  %1488 = vmatpush1.msra.mxu0 0.0
  %1489 = vmatprep.subr.mxu0 0.0
  %1490 = vmatpush1.msra.mxu0 0.0
  %1491 = vmatprep.subr.mxu0 0.0
  %1492 = vmatpush1.msra.mxu0 0.0
  %1493 = vmatprep.subr.mxu0 0.0
  %1494 = vmatpush1.msra.mxu0 0.0
  %1495 = vmatprep.subr.mxu0 0.0
  %1496 = vmatpush1.msra.mxu0 0.0
  %1497 = vmatprep.subr.mxu0 0.0
  %1498 = vmatpush1.msra.mxu0 0.0
  %1499 = vmatprep.subr.mxu0 0.0
  %1500 = vmatpush1.msra.mxu0 0.0
  %1501 = vmatprep.subr.mxu0 0.0
  %1502 = vmatpush1.msra.mxu0 0.0
  %1503 = vmatprep.subr.mxu0 0.0
  %1504 = vmatpush1.msra.mxu0 0.0
  %1505 = vmatprep.subr.mxu0 0.0
  %1506 = vmatpush1.msra.mxu0 0.0
  %1507 = vmatprep.subr.mxu0 0.0
  %1508 = vmatpush1.msra.mxu0 0.0
  %1509 = vmatprep.subr.mxu0 0.0
  %1510 = vmatpush1.msra.mxu0 0.0
  %1511 = vmatprep.subr.mxu0 0.0
  %1512 = vmatpush1.msra.mxu0 0.0
  %1513 = vmatprep.subr.mxu0 0.0
  %1514 = vmatpush1.msra.mxu0 0.0
  %1515 = vmatprep.subr.mxu0 0.0
  %1516 = vmatpush1.msra.mxu0 0.0
  %1517 = vmatprep.subr.mxu0 0.0
  %1518 = vmatpush1.msra.mxu0 0.0
  %1519 = vmatprep.subr.mxu0 0.0
  %1520 = vmatpush1.msra.mxu0 0.0
  %1521 = vmatprep.subr.mxu0 0.0
  %1522 = vmatpush1.msra.mxu0 0.0
  %1523 = vmatprep.mubr.f32.mxu0 0.0
  %1524 = vmatmul.mubr.f32.gmra.mrb[0].mxu0 %v1457
  %v1525 = vpop.f32.mrb[0].mxu0
  %v1526 = vadd.f32 %v302, %v1525
  %v1527 = vpop.f32.mrb[0].mxu0
  %1528 = vdwg.mxu0
  %v1529 = vadd.f32 %v1355, %v1526
  %v1530 = vxor.u32 %v1529, 2147483648
  %v1531 = vmul.f32 %v1530, 1.442695
  %v1532 = vpow.pop %v1531
  %v1533 = vadd.f32 %v1532, 1.0
  %v1534 = vrcp.pop %v1533
  %v1535 = vmul.f32 1.0, %v1534
  %1537 = vrot.lane.b32.xlu0 %v1526, 64
  %v1538 = vpop.permute.xlu0 %1537
  %v1540 = vmul.f32 %v1535, %v1538
  %1542 = vrot.lane.b32.xlu0 %v1540, 64
  %v1543 = vpop.permute.xlu0 %1542
  %v1545 = vadd.f32 %v1355, %v1543
  %v1546 = vtanh.pop %v1545
  %v1547 = vsub.f32 1.0, %v1535
  %1549 = vrot.lane.b32.xlu0 %v1546, 96
  %v1550 = vpop.permute.xlu0 %1549
  %v1552 = vmul.f32 %v1547, %v1550
  %v1553 = vmul.f32 %v1535, %v1345
  %v1554 = vadd.f32 %v1552, %v1553
  %1556 = vrot.lane.b32.xlu0 %v1453, 96
  %v1557 = vpop.permute.xlu0 %1556
  %1559 = vst.msk [vmem:[%s930] sm:$0xff] %vm257, %v1557
  %1560 = vst.msk [vmem:[%s928] sm:$0xff] %vm508, %v1554
  %s1561 = scalar_lea.vmem [#allocation2], 48
  %v1562 = vld [vmem:[%s1561] sm:$0xff]
  %s1563 = scalar_lea.vmem [#allocation3], 8
  %v1564 = vld [vmem:[%s1563] sm:$0xff]
  %v1565 = vsel %vm257, %v1557, 0
  %1567 = vmatprep.subr.mxu0 0.0
  %1568 = vmatpush1.msra.mxu0 %v282
  %1569 = vmatprep.subr.mxu0 0.0
  %1570 = vmatpush1.msra.mxu0 %v283
  %1571 = vmatprep.subr.mxu0 0.0
  %1572 = vmatpush1.msra.mxu0 %v284
  %1573 = vmatprep.subr.mxu0 0.0
  %1574 = vmatpush1.msra.mxu0 %v285
  %1575 = vmatprep.subr.mxu0 0.0
  %1576 = vmatpush1.msra.mxu0 0.0
  %1577 = vmatprep.subr.mxu0 0.0
  %1578 = vmatpush1.msra.mxu0 0.0
  %1579 = vmatprep.subr.mxu0 0.0
  %1580 = vmatpush1.msra.mxu0 0.0
  %1581 = vmatprep.subr.mxu0 0.0
  %1582 = vmatpush1.msra.mxu0 0.0
  %1583 = vmatprep.subr.mxu0 0.0
  %1584 = vmatpush1.msra.mxu0 0.0
  %1585 = vmatprep.subr.mxu0 0.0
  %1586 = vmatpush1.msra.mxu0 0.0
  %1587 = vmatprep.subr.mxu0 0.0
  %1588 = vmatpush1.msra.mxu0 0.0
  %1589 = vmatprep.subr.mxu0 0.0
  %1590 = vmatpush1.msra.mxu0 0.0
  %1591 = vmatprep.subr.mxu0 0.0
  %1592 = vmatpush1.msra.mxu0 0.0
  %1593 = vmatprep.subr.mxu0 0.0
  %1594 = vmatpush1.msra.mxu0 0.0
  %1595 = vmatprep.subr.mxu0 0.0
  %1596 = vmatpush1.msra.mxu0 0.0
  %1597 = vmatprep.subr.mxu0 0.0
  %1598 = vmatpush1.msra.mxu0 0.0
  %1599 = vmatprep.subr.mxu0 0.0
  %1600 = vmatpush1.msra.mxu0 0.0
  %1601 = vmatprep.subr.mxu0 0.0
  %1602 = vmatpush1.msra.mxu0 0.0
  %1603 = vmatprep.subr.mxu0 0.0
  %1604 = vmatpush1.msra.mxu0 0.0
  %1605 = vmatprep.subr.mxu0 0.0
  %1606 = vmatpush1.msra.mxu0 0.0
  %1607 = vmatprep.subr.mxu0 0.0
  %1608 = vmatpush1.msra.mxu0 0.0
  %1609 = vmatprep.subr.mxu0 0.0
  %1610 = vmatpush1.msra.mxu0 0.0
  %1611 = vmatprep.subr.mxu0 0.0
  %1612 = vmatpush1.msra.mxu0 0.0
  %1613 = vmatprep.subr.mxu0 0.0
  %1614 = vmatpush1.msra.mxu0 0.0
  %1615 = vmatprep.subr.mxu0 0.0
  %1616 = vmatpush1.msra.mxu0 0.0
  %1617 = vmatprep.subr.mxu0 0.0
  %1618 = vmatpush1.msra.mxu0 0.0
  %1619 = vmatprep.subr.mxu0 0.0
  %1620 = vmatpush1.msra.mxu0 0.0
  %1621 = vmatprep.subr.mxu0 0.0
  %1622 = vmatpush1.msra.mxu0 0.0
  %1623 = vmatprep.subr.mxu0 0.0
  %1624 = vmatpush1.msra.mxu0 0.0
  %1625 = vmatprep.subr.mxu0 0.0
  %1626 = vmatpush1.msra.mxu0 0.0
  %1627 = vmatprep.subr.mxu0 0.0
  %1628 = vmatpush1.msra.mxu0 0.0
  %1629 = vmatprep.subr.mxu0 0.0
  %1630 = vmatpush1.msra.mxu0 0.0
  %1631 = vmatprep.mubr.f32.mxu0 0.0
  %1632 = vmatmul.mubr.f32.gmra.mrb[0].mxu0 %v1565
  %v1633 = vpop.f32.mrb[0].mxu0
  %v1634 = vadd.f32 %v295, %v1633
  %v1635 = vpop.f32.mrb[0].mxu0
  %1636 = vdwg.mxu0
  %v1637 = vadd.f32 %v1562, %v1634
  %v1638 = vxor.u32 %v1637, 2147483648
  %v1639 = vmul.f32 %v1638, 1.442695
  %v1640 = vpow.pop %v1639
  %v1641 = vadd.f32 %v1640, 1.0
  %v1642 = vrcp.pop %v1641
  %v1643 = vmul.f32 1.0, %v1642
  %1645 = vrot.lane.b32.xlu0 %v1634, 64
  %v1646 = vpop.permute.xlu0 %1645
  %v1648 = vmul.f32 %v1643, %v1646
  %1650 = vrot.lane.b32.xlu0 %v1648, 64
  %v1651 = vpop.permute.xlu0 %1650
  %v1653 = vadd.f32 %v1562, %v1651
  %v1654 = vtanh.pop %v1653
  %v1655 = vsub.f32 1.0, %v1643
  %1657 = vrot.lane.b32.xlu0 %v1654, 96
  %v1658 = vpop.permute.xlu0 %1657
  %v1660 = vmul.f32 %v1655, %v1658
  %v1661 = vmul.f32 %v1643, %v1453
  %v1662 = vadd.f32 %v1660, %v1661
  %1664 = vrot.lane.b32.xlu0 %v1554, 96
  %v1665 = vpop.permute.xlu0 %1664
  %v1666 = vsel %vm257, %v1665, 0
  %1668 = vmatprep.subr.mxu0 0.0
  %1669 = vmatpush1.msra.mxu0 %v286
  %1670 = vmatprep.subr.mxu0 0.0
  %1671 = vmatpush1.msra.mxu0 %v287
  %1672 = vmatprep.subr.mxu0 0.0
  %1673 = vmatpush1.msra.mxu0 %v288
  %1674 = vmatprep.subr.mxu0 0.0
  %1675 = vmatpush1.msra.mxu0 %v289
  %1676 = vmatprep.subr.mxu0 0.0
  %1677 = vmatpush1.msra.mxu0 0.0
  %1678 = vmatprep.subr.mxu0 0.0
  %1679 = vmatpush1.msra.mxu0 0.0
  %1680 = vmatprep.subr.mxu0 0.0
  %1681 = vmatpush1.msra.mxu0 0.0
  %1682 = vmatprep.subr.mxu0 0.0
  %1683 = vmatpush1.msra.mxu0 0.0
  %1684 = vmatprep.subr.mxu0 0.0
  %1685 = vmatpush1.msra.mxu0 0.0
  %1686 = vmatprep.subr.mxu0 0.0
  %1687 = vmatpush1.msra.mxu0 0.0
  %1688 = vmatprep.subr.mxu0 0.0
  %1689 = vmatpush1.msra.mxu0 0.0
  %1690 = vmatprep.subr.mxu0 0.0
  %1691 = vmatpush1.msra.mxu0 0.0
  %1692 = vmatprep.subr.mxu0 0.0
  %1693 = vmatpush1.msra.mxu0 0.0
  %1694 = vmatprep.subr.mxu0 0.0
  %1695 = vmatpush1.msra.mxu0 0.0
  %1696 = vmatprep.subr.mxu0 0.0
  %1697 = vmatpush1.msra.mxu0 0.0
  %1698 = vmatprep.subr.mxu0 0.0
  %1699 = vmatpush1.msra.mxu0 0.0
  %1700 = vmatprep.subr.mxu0 0.0
  %1701 = vmatpush1.msra.mxu0 0.0
  %1702 = vmatprep.subr.mxu0 0.0
  %1703 = vmatpush1.msra.mxu0 0.0
  %1704 = vmatprep.subr.mxu0 0.0
  %1705 = vmatpush1.msra.mxu0 0.0
  %1706 = vmatprep.subr.mxu0 0.0
  %1707 = vmatpush1.msra.mxu0 0.0
  %1708 = vmatprep.subr.mxu0 0.0
  %1709 = vmatpush1.msra.mxu0 0.0
  %1710 = vmatprep.subr.mxu0 0.0
  %1711 = vmatpush1.msra.mxu0 0.0
  %1712 = vmatprep.subr.mxu0 0.0
  %1713 = vmatpush1.msra.mxu0 0.0
  %1714 = vmatprep.subr.mxu0 0.0
  %1715 = vmatpush1.msra.mxu0 0.0
  %1716 = vmatprep.subr.mxu0 0.0
  %1717 = vmatpush1.msra.mxu0 0.0
  %1718 = vmatprep.subr.mxu0 0.0
  %1719 = vmatpush1.msra.mxu0 0.0
  %1720 = vmatprep.subr.mxu0 0.0
  %1721 = vmatpush1.msra.mxu0 0.0
  %1722 = vmatprep.subr.mxu0 0.0
  %1723 = vmatpush1.msra.mxu0 0.0
  %1724 = vmatprep.subr.mxu0 0.0
  %1725 = vmatpush1.msra.mxu0 0.0
  %1726 = vmatprep.subr.mxu0 0.0
  %1727 = vmatpush1.msra.mxu0 0.0
  %1728 = vmatprep.subr.mxu0 0.0
  %1729 = vmatpush1.msra.mxu0 0.0
  %1730 = vmatprep.subr.mxu0 0.0
  %1731 = vmatpush1.msra.mxu0 0.0
  %1732 = vmatprep.mubr.f32.mxu0 0.0
  %1733 = vmatmul.mubr.f32.gmra.mrb[0].mxu0 %v1666
  %v1734 = vpop.f32.mrb[0].mxu0
  %v1735 = vadd.f32 %v302, %v1734
  %v1736 = vpop.f32.mrb[0].mxu0
  %1737 = vdwg.mxu0
  %v1738 = vadd.f32 %v1564, %v1735
  %v1739 = vxor.u32 %v1738, 2147483648
  %v1740 = vmul.f32 %v1739, 1.442695
  %v1741 = vpow.pop %v1740
  %v1742 = vadd.f32 %v1741, 1.0
  %v1743 = vrcp.pop %v1742
  %v1744 = vmul.f32 1.0, %v1743
  %1746 = vrot.lane.b32.xlu0 %v1735, 64
  %v1747 = vpop.permute.xlu0 %1746
  %v1749 = vmul.f32 %v1744, %v1747
  %1751 = vrot.lane.b32.xlu0 %v1749, 64
  %v1752 = vpop.permute.xlu0 %1751
  %v1754 = vadd.f32 %v1564, %v1752
  %v1755 = vtanh.pop %v1754
  %v1756 = vsub.f32 1.0, %v1744
  %1758 = vrot.lane.b32.xlu0 %v1755, 96
  %v1759 = vpop.permute.xlu0 %1758
  %v1761 = vmul.f32 %v1756, %v1759
  %v1762 = vmul.f32 %v1744, %v1554
  %v1763 = vadd.f32 %v1761, %v1762
  %1765 = vrot.lane.b32.xlu0 %v1662, 96
  %v1766 = vpop.permute.xlu0 %1765
  %1768 = vst.msk [vmem:[%s719] sm:$0xff] %vm257, %v1766
  %1769 = vst.msk [vmem:[%s717] sm:$0xff] %vm508, %v1763
  %s1770 = scalar_lea.vmem [#allocation2], 56
  %v1771 = vld [vmem:[%s1770] sm:$0xff]
  %v1772 = vld [vmem:[#allocation3] sm:$0xff]
  %v1773 = vsel %vm257, %v1766, 0
  %1775 = vmatprep.subr.mxu0 0.0
  %1776 = vmatpush1.msra.mxu0 %v282
  %1777 = vmatprep.subr.mxu0 0.0
  %1778 = vmatpush1.msra.mxu0 %v283
  %1779 = vmatprep.subr.mxu0 0.0
  %1780 = vmatpush1.msra.mxu0 %v284
  %1781 = vmatprep.subr.mxu0 0.0
  %1782 = vmatpush1.msra.mxu0 %v285
  %1783 = vmatprep.subr.mxu0 0.0
  %1784 = vmatpush1.msra.mxu0 0.0
  %1785 = vmatprep.subr.mxu0 0.0
  %1786 = vmatpush1.msra.mxu0 0.0
  %1787 = vmatprep.subr.mxu0 0.0
  %1788 = vmatpush1.msra.mxu0 0.0
  %1789 = vmatprep.subr.mxu0 0.0
  %1790 = vmatpush1.msra.mxu0 0.0
  %1791 = vmatprep.subr.mxu0 0.0
  %1792 = vmatpush1.msra.mxu0 0.0
  %1793 = vmatprep.subr.mxu0 0.0
  %1794 = vmatpush1.msra.mxu0 0.0
  %1795 = vmatprep.subr.mxu0 0.0
  %1796 = vmatpush1.msra.mxu0 0.0
  %1797 = vmatprep.subr.mxu0 0.0
  %1798 = vmatpush1.msra.mxu0 0.0
  %1799 = vmatprep.subr.mxu0 0.0
  %1800 = vmatpush1.msra.mxu0 0.0
  %1801 = vmatprep.subr.mxu0 0.0
  %1802 = vmatpush1.msra.mxu0 0.0
  %1803 = vmatprep.subr.mxu0 0.0
  %1804 = vmatpush1.msra.mxu0 0.0
  %1805 = vmatprep.subr.mxu0 0.0
  %1806 = vmatpush1.msra.mxu0 0.0
  %1807 = vmatprep.subr.mxu0 0.0
  %1808 = vmatpush1.msra.mxu0 0.0
  %1809 = vmatprep.subr.mxu0 0.0
  %1810 = vmatpush1.msra.mxu0 0.0
  %1811 = vmatprep.subr.mxu0 0.0
  %1812 = vmatpush1.msra.mxu0 0.0
  %1813 = vmatprep.subr.mxu0 0.0
  %1814 = vmatpush1.msra.mxu0 0.0
  %1815 = vmatprep.subr.mxu0 0.0
  %1816 = vmatpush1.msra.mxu0 0.0
  %1817 = vmatprep.subr.mxu0 0.0
  %1818 = vmatpush1.msra.mxu0 0.0
  %1819 = vmatprep.subr.mxu0 0.0
  %1820 = vmatpush1.msra.mxu0 0.0
  %1821 = vmatprep.subr.mxu0 0.0
  %1822 = vmatpush1.msra.mxu0 0.0
  %1823 = vmatprep.subr.mxu0 0.0
  %1824 = vmatpush1.msra.mxu0 0.0
  %1825 = vmatprep.subr.mxu0 0.0
  %1826 = vmatpush1.msra.mxu0 0.0
  %1827 = vmatprep.subr.mxu0 0.0
  %1828 = vmatpush1.msra.mxu0 0.0
  %1829 = vmatprep.subr.mxu0 0.0
  %1830 = vmatpush1.msra.mxu0 0.0
  %1831 = vmatprep.subr.mxu0 0.0
  %1832 = vmatpush1.msra.mxu0 0.0
  %1833 = vmatprep.subr.mxu0 0.0
  %1834 = vmatpush1.msra.mxu0 0.0
  %1835 = vmatprep.subr.mxu0 0.0
  %1836 = vmatpush1.msra.mxu0 0.0
  %1837 = vmatprep.subr.mxu0 0.0
  %1838 = vmatpush1.msra.mxu0 0.0
  %1839 = vmatprep.mubr.f32.mxu0 0.0
  %1840 = vmatmul.mubr.f32.gmra.mrb[0].mxu0 %v1773
  %v1841 = vpop.f32.mrb[0].mxu0
  %v1842 = vadd.f32 %v295, %v1841
  %v1843 = vpop.f32.mrb[0].mxu0
  %1844 = vdwg.mxu0
  %v1845 = vadd.f32 %v1771, %v1842
  %v1846 = vxor.u32 %v1845, 2147483648
  %v1847 = vmul.f32 %v1846, 1.442695
  %v1848 = vpow.pop %v1847
  %v1849 = vadd.f32 %v1848, 1.0
  %v1850 = vrcp.pop %v1849
  %v1851 = vmul.f32 1.0, %v1850
  %1853 = vrot.lane.b32.xlu0 %v1842, 64
  %v1854 = vpop.permute.xlu0 %1853
  %v1856 = vmul.f32 %v1851, %v1854
  %1858 = vrot.lane.b32.xlu0 %v1856, 64
  %v1859 = vpop.permute.xlu0 %1858
  %v1861 = vadd.f32 %v1771, %v1859
  %v1862 = vtanh.pop %v1861
  %v1863 = vsub.f32 1.0, %v1851
  %1865 = vrot.lane.b32.xlu0 %v1862, 96
  %v1866 = vpop.permute.xlu0 %1865
  %v1868 = vmul.f32 %v1863, %v1866
  %v1869 = vmul.f32 %v1851, %v1662
  %v1870 = vadd.f32 %v1868, %v1869
  %1872 = vrot.lane.b32.xlu0 %v1763, 96
  %v1873 = vpop.permute.xlu0 %1872
  %v1874 = vsel %vm257, %v1873, 0
  %1876 = vmatprep.subr.mxu0 0.0
  %1877 = vmatpush1.msra.mxu0 %v286
  %1878 = vmatprep.subr.mxu0 0.0
  %1879 = vmatpush1.msra.mxu0 %v287
  %1880 = vmatprep.subr.mxu0 0.0
  %1881 = vmatpush1.msra.mxu0 %v288
  %1882 = vmatprep.subr.mxu0 0.0
  %1883 = vmatpush1.msra.mxu0 %v289
  %1884 = vmatprep.subr.mxu0 0.0
  %1885 = vmatpush1.msra.mxu0 0.0
  %1886 = vmatprep.subr.mxu0 0.0
  %1887 = vmatpush1.msra.mxu0 0.0
  %1888 = vmatprep.subr.mxu0 0.0
  %1889 = vmatpush1.msra.mxu0 0.0
  %1890 = vmatprep.subr.mxu0 0.0
  %1891 = vmatpush1.msra.mxu0 0.0
  %1892 = vmatprep.subr.mxu0 0.0
  %1893 = vmatpush1.msra.mxu0 0.0
  %1894 = vmatprep.subr.mxu0 0.0
  %1895 = vmatpush1.msra.mxu0 0.0
  %1896 = vmatprep.subr.mxu0 0.0
  %1897 = vmatpush1.msra.mxu0 0.0
  %1898 = vmatprep.subr.mxu0 0.0
  %1899 = vmatpush1.msra.mxu0 0.0
  %1900 = vmatprep.subr.mxu0 0.0
  %1901 = vmatpush1.msra.mxu0 0.0
  %1902 = vmatprep.subr.mxu0 0.0
  %1903 = vmatpush1.msra.mxu0 0.0
  %1904 = vmatprep.subr.mxu0 0.0
  %1905 = vmatpush1.msra.mxu0 0.0
  %1906 = vmatprep.subr.mxu0 0.0
  %1907 = vmatpush1.msra.mxu0 0.0
  %1908 = vmatprep.subr.mxu0 0.0
  %1909 = vmatpush1.msra.mxu0 0.0
  %1910 = vmatprep.subr.mxu0 0.0
  %1911 = vmatpush1.msra.mxu0 0.0
  %1912 = vmatprep.subr.mxu0 0.0
  %1913 = vmatpush1.msra.mxu0 0.0
  %1914 = vmatprep.subr.mxu0 0.0
  %1915 = vmatpush1.msra.mxu0 0.0
  %1916 = vmatprep.subr.mxu0 0.0
  %1917 = vmatpush1.msra.mxu0 0.0
  %1918 = vmatprep.subr.mxu0 0.0
  %1919 = vmatpush1.msra.mxu0 0.0
  %1920 = vmatprep.subr.mxu0 0.0
  %1921 = vmatpush1.msra.mxu0 0.0
  %1922 = vmatprep.subr.mxu0 0.0
  %1923 = vmatpush1.msra.mxu0 0.0
  %1924 = vmatprep.subr.mxu0 0.0
  %1925 = vmatpush1.msra.mxu0 0.0
  %1926 = vmatprep.subr.mxu0 0.0
  %1927 = vmatpush1.msra.mxu0 0.0
  %1928 = vmatprep.subr.mxu0 0.0
  %1929 = vmatpush1.msra.mxu0 0.0
  %1930 = vmatprep.subr.mxu0 0.0
  %1931 = vmatpush1.msra.mxu0 0.0
  %1932 = vmatprep.subr.mxu0 0.0
  %1933 = vmatpush1.msra.mxu0 0.0
  %1934 = vmatprep.subr.mxu0 0.0
  %1935 = vmatpush1.msra.mxu0 0.0
  %1936 = vmatprep.subr.mxu0 0.0
  %1937 = vmatpush1.msra.mxu0 0.0
  %1938 = vmatprep.subr.mxu0 0.0
  %1939 = vmatpush1.msra.mxu0 0.0
  %1940 = vmatprep.mubr.f32.mxu0 0.0
  %1941 = vmatmul.mubr.f32.gmra.mrb[0].mxu0 %v1874
  %v1942 = vpop.f32.mrb[0].mxu0
  %v1943 = vadd.f32 %v302, %v1942
  %v1944 = vpop.f32.mrb[0].mxu0
  %1945 = vdwg.mxu0
  %v1946 = vadd.f32 %v1772, %v1943
  %v1947 = vxor.u32 %v1946, 2147483648
  %v1948 = vmul.f32 %v1947, 1.442695
  %v1949 = vpow.pop %v1948
  %v1950 = vadd.f32 %v1949, 1.0
  %v1951 = vrcp.pop %v1950
  %v1952 = vmul.f32 1.0, %v1951
  %1954 = vrot.lane.b32.xlu0 %v1943, 64
  %v1955 = vpop.permute.xlu0 %1954
  %v1957 = vmul.f32 %v1952, %v1955
  %1959 = vrot.lane.b32.xlu0 %v1957, 64
  %v1960 = vpop.permute.xlu0 %1959
  %v1962 = vadd.f32 %v1772, %v1960
  %v1963 = vtanh.pop %v1962
  %v1964 = vsub.f32 1.0, %v1952
  %1966 = vrot.lane.b32.xlu0 %v1963, 96
  %v1967 = vpop.permute.xlu0 %1966
  %v1969 = vmul.f32 %v1964, %v1967
  %v1970 = vmul.f32 %v1952, %v1763
  %v1971 = vadd.f32 %v1969, %v1970
  %1973 = vrot.lane.b32.xlu0 %v1870, 96
  %v1974 = vpop.permute.xlu0 %1973
  %1976 = vst.msk [vmem:[%s507] sm:$0xff] %vm257, %v1974
  %1977 = vst.msk [vmem:[%s7] sm:$0xff] %vm508, %v1971
  // Predicated region
  $region30: #{bigru_forward.3} parent=0 // pred_check
    _
  $region31: #{bigru_forward.3} parent=0 // pred_check_branch
    %1979 = sbr.rel (0) target = $region33
  $region32: #{bigru_forward.3} parent=0 // pred_region
    _
  $region33: #{bigru_forward.3} parent=0 // pred_fallthru
    _
  // Predicated region
  $region34: #{bigru_forward.3} parent=0 // pred_check
    _
  $region35: #{bigru_forward.3} parent=0 // pred_check_branch
    %1981 = sbr.rel (0) target = $region37
  $region36: #{bigru_forward.3} parent=0 // pred_region
    _
  $region37: #{bigru_forward.3} parent=0 // pred_fallthru
    _

// kernel: bigru_forward.2
$region0: #{bigru_forward.2}
  #allocation0 [shape = 'u32[]', space=smem, size = 0x4, offset = 0x4, fixed_abs, tag = 'smem constant byte address 0x4 - core index']
  #allocation1 [shape = 'u32[144,128]{1,0:T(1,128)}', space=vmem, size = 0x12000, scoped, tag = 'internal scratch']
  #allocation2 [shape = 'f32[64,96]{1,0:T(8,128)}', space=vmem, size = 0x8000, scoped, tag = 'scratch operand']
  #allocation3 [shape = 'f32[64,96]{1,0:T(8,128)}', space=vmem, size = 0x8000, scoped, tag = 'scratch operand']
  %s0 = inlined_call_operand.vmem [shape: f32[64,16], index: 0, kind: input, shape index: {}]
  %s1 = inlined_call_operand.vmem [shape: f32[16,192], index: 1, kind: input, shape index: {}]
  %s2 = inlined_call_operand.vmem [shape: f32[1,192], index: 2, kind: input, shape index: {}]
  %s3 = inlined_call_operand.vmem [shape: f32[32,96], index: 3, kind: input, shape index: {}]
  %s4 = inlined_call_operand.vmem [shape: f32[32,96], index: 4, kind: input, shape index: {}]
  %s5 = inlined_call_operand.vmem [shape: f32[1,96], index: 5, kind: input, shape index: {}]
  %s6 = inlined_call_operand.vmem [shape: f32[1,96], index: 6, kind: input, shape index: {}]
  %s7 = inlined_call_operand.vmem [shape: f32[64,64], index: 7, kind: output, shape index: {}]
  %s8 = sld [smem:[#allocation0]]
  $region38: #{bigru_forward.2} parent=0
    _
  %s10 = ssub.s32 1, %s8
  %s11 = scalar_select 0, %s10, %s8
  // Predicated region
  $region2: #{bigru_forward.2} parent=0 // pred_check
    _
  $region3: #{bigru_forward.2} parent=0 // pred_check_branch
    %13 = sbr.rel (0) target = $region5
  $region4: #{bigru_forward.2} parent=0 // pred_region
    _
  $region5: #{bigru_forward.2} parent=0 // pred_fallthru
    _
  // Predicated region
  $region6: #{bigru_forward.2} parent=0 // pred_check
    _
  $region7: #{bigru_forward.2} parent=0 // pred_check_branch
    %15 = sbr.rel (0) target = $region9
  $region8: #{bigru_forward.2} parent=0 // pred_region
    _
  $region9: #{bigru_forward.2} parent=0 // pred_fallthru
    _
  // Predicated region
  $region10: #{bigru_forward.2} parent=0 // pred_check
    _
  $region11: #{bigru_forward.2} parent=0 // pred_check_branch
    %17 = sbr.rel (0) target = $region13
  $region12: #{bigru_forward.2} parent=0 // pred_region
    _
  $region13: #{bigru_forward.2} parent=0 // pred_fallthru
    _
  // Predicated region
  $region14: #{bigru_forward.2} parent=0 // pred_check
    _
  $region15: #{bigru_forward.2} parent=0 // pred_check_branch
    %19 = sbr.rel (0) target = $region17
  $region16: #{bigru_forward.2} parent=0 // pred_region
    _
  $region17: #{bigru_forward.2} parent=0 // pred_fallthru
    _
  // Predicated region
  $region18: #{bigru_forward.2} parent=0 // pred_check
    _
  $region19: #{bigru_forward.2} parent=0 // pred_check_branch
    %21 = sbr.rel (0) target = $region21
  $region20: #{bigru_forward.2} parent=0 // pred_region
    _
  $region21: #{bigru_forward.2} parent=0 // pred_fallthru
    _
  // Predicated region
  $region22: #{bigru_forward.2} parent=0 // pred_check
    _
  $region23: #{bigru_forward.2} parent=0 // pred_check_branch
    %23 = sbr.rel (0) target = $region25
  $region24: #{bigru_forward.2} parent=0 // pred_region
    _
  $region25: #{bigru_forward.2} parent=0 // pred_fallthru
    _
  // Predicated region
  $region26: #{bigru_forward.2} parent=0 // pred_check
    _
  $region27: #{bigru_forward.2} parent=0 // pred_check_branch
    %25 = sbr.rel (0) target = $region29
  $region28: #{bigru_forward.2} parent=0 // pred_region
    _
  $region29: #{bigru_forward.2} parent=0 // pred_fallthru
    _
  %v26 = vld [vmem:[%s0] sm:$0xff]
  %v27 = vld [vmem:[%s0 + $0x8] sm:$0xff]
  %v28 = vld [vmem:[%s0 + $0x10] sm:$0xff]
  %v29 = vld [vmem:[%s0 + $0x18] sm:$0xff]
  %v30 = vld [vmem:[%s0 + $0x20] sm:$0xff]
  %v31 = vld [vmem:[%s0 + $0x28] sm:$0xff]
  %v32 = vld [vmem:[%s0 + $0x30] sm:$0xff]
  %v33 = vld [vmem:[%s0 + $0x38] sm:$0xff]
  %v34 = vld [vmem:[%s1] sm:$0xff]
  %v35 = vld [vmem:[%s1 + $0x8] sm:$0xff]
  %v36 = vld [vmem:[%s1 + $0x10] sm:$0xff]
  %v37 = vld [vmem:[%s1 + $0x18] sm:$0xff]
  %v38 = vld [vmem:[%s2] sm:$0x3]
  %v40 = vlaneseq
  %v41 = vshrl.u32 %v40, 7
  %v42 = vsub.s32 0, %v41
  %v43 = vrot.slane %v38, %v42
  %v44 = vlaneseq
  %v45 = vshrl.u32 %v44, 7
  %v46 = vsub.s32 1, %v45
  %v47 = vrot.slane %v38, %v46
  %vm50 = vcmask 130048
  %v52 = vsel %vm50, %v26, 0
  %v55 = vsel %vm50, %v27, 0
  %v58 = vsel %vm50, %v28, 0
  %v61 = vsel %vm50, %v29, 0
  %v64 = vsel %vm50, %v30, 0
  %v67 = vsel %vm50, %v31, 0
  %v70 = vsel %vm50, %v32, 0
  %v73 = vsel %vm50, %v33, 0
  %75 = vmatprep.subr.mxu0 %v35
  %76 = vmatpush1.msra.mxu0 %v34
  %77 = vmatprep.subr.mxu0 %v37
  %78 = vmatpush1.msra.mxu0 %v36
  %79 = vmatprep.subr.mxu0 0.0
  %80 = vmatpush1.msra.mxu0 0.0
  %81 = vmatprep.subr.mxu0 0.0
  %82 = vmatpush1.msra.mxu0 0.0
  %83 = vmatprep.subr.mxu0 0.0
  %84 = vmatpush1.msra.mxu0 0.0
  %85 = vmatprep.subr.mxu0 0.0
  %86 = vmatpush1.msra.mxu0 0.0
  %87 = vmatprep.subr.mxu0 0.0
  %88 = vmatpush1.msra.mxu0 0.0
  %89 = vmatprep.subr.mxu0 0.0
  %90 = vmatpush1.msra.mxu0 0.0
  %91 = vmatprep.subr.mxu0 0.0
  %92 = vmatpush1.msra.mxu0 0.0
  %93 = vmatprep.subr.mxu0 0.0
  %94 = vmatpush1.msra.mxu0 0.0
  %95 = vmatprep.subr.mxu0 0.0
  %96 = vmatpush1.msra.mxu0 0.0
  %97 = vmatprep.subr.mxu0 0.0
  %98 = vmatpush1.msra.mxu0 0.0
  %99 = vmatprep.subr.mxu0 0.0
  %100 = vmatpush1.msra.mxu0 0.0
  %101 = vmatprep.subr.mxu0 0.0
  %102 = vmatpush1.msra.mxu0 0.0
  %103 = vmatprep.subr.mxu0 0.0
  %104 = vmatpush1.msra.mxu0 0.0
  %105 = vmatprep.subr.mxu0 0.0
  %106 = vmatpush1.msra.mxu0 0.0
  %107 = vmatprep.subr.mxu0 0.0
  %108 = vmatpush1.msra.mxu0 0.0
  %109 = vmatprep.subr.mxu0 0.0
  %110 = vmatpush1.msra.mxu0 0.0
  %111 = vmatprep.subr.mxu0 0.0
  %112 = vmatpush1.msra.mxu0 0.0
  %113 = vmatprep.subr.mxu0 0.0
  %114 = vmatpush1.msra.mxu0 0.0
  %115 = vmatprep.subr.mxu0 0.0
  %116 = vmatpush1.msra.mxu0 0.0
  %117 = vmatprep.subr.mxu0 0.0
  %118 = vmatpush1.msra.mxu0 0.0
  %119 = vmatprep.subr.mxu0 0.0
  %120 = vmatpush1.msra.mxu0 0.0
  %121 = vmatprep.subr.mxu0 0.0
  %122 = vmatpush1.msra.mxu0 0.0
  %123 = vmatprep.subr.mxu0 0.0
  %124 = vmatpush1.msra.mxu0 0.0
  %125 = vmatprep.subr.mxu0 0.0
  %126 = vmatpush1.msra.mxu0 0.0
  %127 = vmatprep.subr.mxu0 0.0
  %128 = vmatpush1.msra.mxu0 0.0
  %129 = vmatprep.subr.mxu0 0.0
  %130 = vmatpush1.msra.mxu0 0.0
  %131 = vmatprep.subr.mxu0 0.0
  %132 = vmatpush1.msra.mxu0 0.0
  %133 = vmatprep.subr.mxu0 0.0
  %134 = vmatpush1.msra.mxu0 0.0
  %135 = vmatprep.subr.mxu0 0.0
  %136 = vmatpush1.msra.mxu0 0.0
  %137 = vmatprep.subr.mxu0 0.0
  %138 = vmatpush1.msra.mxu0 0.0
  %139 = vmatprep.mubr.f32.mxu0 0.0
  %140 = vmatmul.mubr.f32.gmra.mrb[0].mxu0 %v52
  %v141 = vpop.f32.mrb[0].mxu0
  %v142 = vadd.f32 %v43, %v141
  %v143 = vpop.f32.mrb[0].mxu0
  %v144 = vadd.f32 %v47, %v143
  %145 = vmatprep.mubr.f32.mxu0 0.0
  %146 = vmatmul.mubr.f32.gmra.mrb[0].mxu0 %v55
  %v147 = vpop.f32.mrb[0].mxu0
  %v148 = vadd.f32 %v43, %v147
  %v149 = vpop.f32.mrb[0].mxu0
  %v150 = vadd.f32 %v47, %v149
  %151 = vmatprep.mubr.f32.mxu0 0.0
  %152 = vmatmul.mubr.f32.gmra.mrb[0].mxu0 %v58
  %v153 = vpop.f32.mrb[0].mxu0
  %v154 = vadd.f32 %v43, %v153
  %v155 = vpop.f32.mrb[0].mxu0
  %v156 = vadd.f32 %v47, %v155
  %157 = vmatprep.mubr.f32.mxu0 0.0
  %158 = vmatmul.mubr.f32.gmra.mrb[0].mxu0 %v61
  %v159 = vpop.f32.mrb[0].mxu0
  %v160 = vadd.f32 %v43, %v159
  %v161 = vpop.f32.mrb[0].mxu0
  %v162 = vadd.f32 %v47, %v161
  %163 = vmatprep.mubr.f32.mxu0 0.0
  %164 = vmatmul.mubr.f32.gmra.mrb[0].mxu0 %v64
  %v165 = vpop.f32.mrb[0].mxu0
  %v166 = vadd.f32 %v43, %v165
  %v167 = vpop.f32.mrb[0].mxu0
  %v168 = vadd.f32 %v47, %v167
  %169 = vmatprep.mubr.f32.mxu0 0.0
  %170 = vmatmul.mubr.f32.gmra.mrb[0].mxu0 %v67
  %v171 = vpop.f32.mrb[0].mxu0
  %v172 = vadd.f32 %v43, %v171
  %v173 = vpop.f32.mrb[0].mxu0
  %v174 = vadd.f32 %v47, %v173
  %175 = vmatprep.mubr.f32.mxu0 0.0
  %176 = vmatmul.mubr.f32.gmra.mrb[0].mxu0 %v70
  %v177 = vpop.f32.mrb[0].mxu0
  %v178 = vadd.f32 %v43, %v177
  %v179 = vpop.f32.mrb[0].mxu0
  %v180 = vadd.f32 %v47, %v179
  %181 = vmatprep.mubr.f32.mxu0 0.0
  %182 = vmatmul.mubr.f32.gmra.mrb[0].mxu0 %v73
  %v183 = vpop.f32.mrb[0].mxu0
  %v184 = vadd.f32 %v43, %v183
  %v185 = vpop.f32.mrb[0].mxu0
  %v186 = vadd.f32 %v47, %v185
  %187 = vdwg.mxu0
  %vm188 = vcmask 785408
  %189 = vst.msk [vmem:[#allocation2] sm:$0xff] %vm188, %v142
  %190 = vst.msk [vmem:[#allocation2 + $0x8] sm:$0xff] %vm188, %v148
  %191 = vst.msk [vmem:[#allocation2 + $0x10] sm:$0xff] %vm188, %v154
  %192 = vst.msk [vmem:[#allocation2 + $0x18] sm:$0xff] %vm188, %v160
  %193 = vst.msk [vmem:[#allocation2 + $0x20] sm:$0xff] %vm188, %v166
  %194 = vst.msk [vmem:[#allocation2 + $0x28] sm:$0xff] %vm188, %v172
  %195 = vst.msk [vmem:[#allocation2 + $0x30] sm:$0xff] %vm188, %v178
  %196 = vst.msk [vmem:[#allocation2 + $0x38] sm:$0xff] %vm188, %v184
  %213 = vrot.lane.b32.xlu0 %v142, 32
  %v214 = vpop.permute.xlu0 %213
  %215 = vrot.lane.b32.xlu0 %v144, 32
  %v216 = vpop.permute.xlu0 %215
  %217 = vrot.lane.b32.xlu0 %v148, 32
  %v218 = vpop.permute.xlu0 %217
  %219 = vrot.lane.b32.xlu0 %v150, 32
  %v220 = vpop.permute.xlu0 %219
  %221 = vrot.lane.b32.xlu0 %v154, 32
  %v222 = vpop.permute.xlu0 %221
  %223 = vrot.lane.b32.xlu0 %v156, 32
  %v224 = vpop.permute.xlu0 %223
  %225 = vrot.lane.b32.xlu0 %v160, 32
  %v226 = vpop.permute.xlu0 %225
  %227 = vrot.lane.b32.xlu0 %v162, 32
  %v228 = vpop.permute.xlu0 %227
  %229 = vrot.lane.b32.xlu0 %v166, 32
  %v230 = vpop.permute.xlu0 %229
  %231 = vrot.lane.b32.xlu0 %v168, 32
  %v232 = vpop.permute.xlu0 %231
  %233 = vrot.lane.b32.xlu0 %v172, 32
  %v234 = vpop.permute.xlu0 %233
  %235 = vrot.lane.b32.xlu0 %v174, 32
  %v236 = vpop.permute.xlu0 %235
  %237 = vrot.lane.b32.xlu0 %v178, 32
  %v238 = vpop.permute.xlu0 %237
  %239 = vrot.lane.b32.xlu0 %v180, 32
  %v240 = vpop.permute.xlu0 %239
  %241 = vrot.lane.b32.xlu0 %v184, 32
  %v242 = vpop.permute.xlu0 %241
  %243 = vrot.lane.b32.xlu0 %v186, 32
  %v244 = vpop.permute.xlu0 %243
  %vm245 = vcmask 261120
  %v246 = vsel %vm245, %v214, %v216
  %v247 = vsel %vm245, %v218, %v220
  %v248 = vsel %vm245, %v222, %v224
  %v249 = vsel %vm245, %v226, %v228
  %v250 = vsel %vm245, %v230, %v232
  %v251 = vsel %vm245, %v234, %v236
  %v252 = vsel %vm245, %v238, %v240
  %v253 = vsel %vm245, %v242, %v244
  %262 = vst.msk [vmem:[#allocation3] sm:$0xff] %vm188, %v246
  %263 = vst.msk [vmem:[#allocation3 + $0x8] sm:$0xff] %vm188, %v247
  %264 = vst.msk [vmem:[#allocation3 + $0x10] sm:$0xff] %vm188, %v248
  %265 = vst.msk [vmem:[#allocation3 + $0x18] sm:$0xff] %vm188, %v249
  %266 = vst.msk [vmem:[#allocation3 + $0x20] sm:$0xff] %vm188, %v250
  %267 = vst.msk [vmem:[#allocation3 + $0x28] sm:$0xff] %vm188, %v251
  %268 = vst.msk [vmem:[#allocation3 + $0x30] sm:$0xff] %vm188, %v252
  %269 = vst.msk [vmem:[#allocation3 + $0x38] sm:$0xff] %vm188, %v253
  %v270 = vld [vmem:[%s3] sm:$0xff]
  %v271 = vld [vmem:[%s3 + $0x8] sm:$0xff]
  %v272 = vld [vmem:[%s3 + $0x10] sm:$0xff]
  %v273 = vld [vmem:[%s3 + $0x18] sm:$0xff]
  %v274 = vld [vmem:[%s4] sm:$0xff]
  %v275 = vld [vmem:[%s4 + $0x8] sm:$0xff]
  %v276 = vld [vmem:[%s4 + $0x10] sm:$0xff]
  %v277 = vld [vmem:[%s4 + $0x18] sm:$0xff]
  %v278 = vld [vmem:[%s5] sm:$0x1]
  %v280 = vlaneseq
  %v281 = vshrl.u32 %v280, 7
  %v282 = vsub.s32 0, %v281
  %v283 = vrot.slane %v278, %v282
  %v285 = vld [vmem:[%s6] sm:$0x1]
  %v287 = vlaneseq
  %v288 = vshrl.u32 %v287, 7
  %v289 = vsub.s32 0, %v288
  %v290 = vrot.slane %v285, %v289
  %v292 = vld [vmem:[#allocation2] sm:$0xff]
  %s293 = scalar_lea.vmem [#allocation3], 56
  %v294 = vld [vmem:[%s293] sm:$0xff]
  %v296 = vsel %vm245, 0.0, 0
  %298 = vmatprep.subr.mxu0 0.0
  %299 = vmatpush1.msra.mxu0 %v270
  %300 = vmatprep.subr.mxu0 0.0
  %301 = vmatpush1.msra.mxu0 %v271
  %302 = vmatprep.subr.mxu0 0.0
  %303 = vmatpush1.msra.mxu0 %v272
  %304 = vmatprep.subr.mxu0 0.0
  %305 = vmatpush1.msra.mxu0 %v273
  %306 = vmatprep.subr.mxu0 0.0
  %307 = vmatpush1.msra.mxu0 0.0
  %308 = vmatprep.subr.mxu0 0.0
  %309 = vmatpush1.msra.mxu0 0.0
  %310 = vmatprep.subr.mxu0 0.0
  %311 = vmatpush1.msra.mxu0 0.0
  %312 = vmatprep.subr.mxu0 0.0
  %313 = vmatpush1.msra.mxu0 0.0
  %314 = vmatprep.subr.mxu0 0.0
  %315 = vmatpush1.msra.mxu0 0.0
  %316 = vmatprep.subr.mxu0 0.0
  %317 = vmatpush1.msra.mxu0 0.0
  %318 = vmatprep.subr.mxu0 0.0
  %319 = vmatpush1.msra.mxu0 0.0
  %320 = vmatprep.subr.mxu0 0.0
  %321 = vmatpush1.msra.mxu0 0.0
  %322 = vmatprep.subr.mxu0 0.0
  %323 = vmatpush1.msra.mxu0 0.0
  %324 = vmatprep.subr.mxu0 0.0
  %325 = vmatpush1.msra.mxu0 0.0
  %326 = vmatprep.subr.mxu0 0.0
  %327 = vmatpush1.msra.mxu0 0.0
  %328 = vmatprep.subr.mxu0 0.0
  %329 = vmatpush1.msra.mxu0 0.0
  %330 = vmatprep.subr.mxu0 0.0
  %331 = vmatpush1.msra.mxu0 0.0
  %332 = vmatprep.subr.mxu0 0.0
  %333 = vmatpush1.msra.mxu0 0.0
  %334 = vmatprep.subr.mxu0 0.0
  %335 = vmatpush1.msra.mxu0 0.0
  %336 = vmatprep.subr.mxu0 0.0
  %337 = vmatpush1.msra.mxu0 0.0
  %338 = vmatprep.subr.mxu0 0.0
  %339 = vmatpush1.msra.mxu0 0.0
  %340 = vmatprep.subr.mxu0 0.0
  %341 = vmatpush1.msra.mxu0 0.0
  %342 = vmatprep.subr.mxu0 0.0
  %343 = vmatpush1.msra.mxu0 0.0
  %344 = vmatprep.subr.mxu0 0.0
  %345 = vmatpush1.msra.mxu0 0.0
  %346 = vmatprep.subr.mxu0 0.0
  %347 = vmatpush1.msra.mxu0 0.0
  %348 = vmatprep.subr.mxu0 0.0
  %349 = vmatpush1.msra.mxu0 0.0
  %350 = vmatprep.subr.mxu0 0.0
  %351 = vmatpush1.msra.mxu0 0.0
  %352 = vmatprep.subr.mxu0 0.0
  %353 = vmatpush1.msra.mxu0 0.0
  %354 = vmatprep.subr.mxu0 0.0
  %355 = vmatpush1.msra.mxu0 0.0
  %356 = vmatprep.subr.mxu0 0.0
  %357 = vmatpush1.msra.mxu0 0.0
  %358 = vmatprep.subr.mxu0 0.0
  %359 = vmatpush1.msra.mxu0 0.0
  %360 = vmatprep.subr.mxu0 0.0
  %361 = vmatpush1.msra.mxu0 0.0
  %362 = vmatprep.mubr.f32.mxu0 0.0
  %363 = vmatmul.mubr.f32.gmra.mrb[0].mxu0 %v296
  %v364 = vpop.f32.mrb[0].mxu0
  %v365 = vadd.f32 %v283, %v364
  %v366 = vpop.f32.mrb[0].mxu0
  %367 = vdwg.mxu0
  %v368 = vadd.f32 %v292, %v365
  %v369 = vxor.u32 %v368, 2147483648
  %v370 = vmul.f32 %v369, 1.442695
  %v371 = vpow.pop %v370
  %v372 = vadd.f32 %v371, 1.0
  %v373 = vrcp.pop %v372
  %v374 = vmul.f32 1.0, %v373
  %376 = vrot.lane.b32.xlu0 %v365, 64
  %v377 = vpop.permute.xlu0 %376
  %v379 = vmul.f32 %v374, %v377
  %381 = vrot.lane.b32.xlu0 %v379, 64
  %v382 = vpop.permute.xlu0 %381
  %v384 = vadd.f32 %v292, %v382
  %v385 = vtanh.pop %v384
  %v386 = vsub.f32 1.0, %v374
  %388 = vrot.lane.b32.xlu0 %v385, 96
  %v389 = vpop.permute.xlu0 %388
  %v391 = vmul.f32 %v386, %v389
  %v392 = vmul.f32 %v374, 0.0
  %v393 = vadd.f32 %v391, %v392
  %394 = vmatprep.subr.mxu0 0.0
  %395 = vmatpush1.msra.mxu0 %v274
  %396 = vmatprep.subr.mxu0 0.0
  %397 = vmatpush1.msra.mxu0 %v275
  %398 = vmatprep.subr.mxu0 0.0
  %399 = vmatpush1.msra.mxu0 %v276
  %400 = vmatprep.subr.mxu0 0.0
  %401 = vmatpush1.msra.mxu0 %v277
  %402 = vmatprep.subr.mxu0 0.0
  %403 = vmatpush1.msra.mxu0 0.0
  %404 = vmatprep.subr.mxu0 0.0
  %405 = vmatpush1.msra.mxu0 0.0
  %406 = vmatprep.subr.mxu0 0.0
  %407 = vmatpush1.msra.mxu0 0.0
  %408 = vmatprep.subr.mxu0 0.0
  %409 = vmatpush1.msra.mxu0 0.0
  %410 = vmatprep.subr.mxu0 0.0
  %411 = vmatpush1.msra.mxu0 0.0
  %412 = vmatprep.subr.mxu0 0.0
  %413 = vmatpush1.msra.mxu0 0.0
  %414 = vmatprep.subr.mxu0 0.0
  %415 = vmatpush1.msra.mxu0 0.0
  %416 = vmatprep.subr.mxu0 0.0
  %417 = vmatpush1.msra.mxu0 0.0
  %418 = vmatprep.subr.mxu0 0.0
  %419 = vmatpush1.msra.mxu0 0.0
  %420 = vmatprep.subr.mxu0 0.0
  %421 = vmatpush1.msra.mxu0 0.0
  %422 = vmatprep.subr.mxu0 0.0
  %423 = vmatpush1.msra.mxu0 0.0
  %424 = vmatprep.subr.mxu0 0.0
  %425 = vmatpush1.msra.mxu0 0.0
  %426 = vmatprep.subr.mxu0 0.0
  %427 = vmatpush1.msra.mxu0 0.0
  %428 = vmatprep.subr.mxu0 0.0
  %429 = vmatpush1.msra.mxu0 0.0
  %430 = vmatprep.subr.mxu0 0.0
  %431 = vmatpush1.msra.mxu0 0.0
  %432 = vmatprep.subr.mxu0 0.0
  %433 = vmatpush1.msra.mxu0 0.0
  %434 = vmatprep.subr.mxu0 0.0
  %435 = vmatpush1.msra.mxu0 0.0
  %436 = vmatprep.subr.mxu0 0.0
  %437 = vmatpush1.msra.mxu0 0.0
  %438 = vmatprep.subr.mxu0 0.0
  %439 = vmatpush1.msra.mxu0 0.0
  %440 = vmatprep.subr.mxu0 0.0
  %441 = vmatpush1.msra.mxu0 0.0
  %442 = vmatprep.subr.mxu0 0.0
  %443 = vmatpush1.msra.mxu0 0.0
  %444 = vmatprep.subr.mxu0 0.0
  %445 = vmatpush1.msra.mxu0 0.0
  %446 = vmatprep.subr.mxu0 0.0
  %447 = vmatpush1.msra.mxu0 0.0
  %448 = vmatprep.subr.mxu0 0.0
  %449 = vmatpush1.msra.mxu0 0.0
  %450 = vmatprep.subr.mxu0 0.0
  %451 = vmatpush1.msra.mxu0 0.0
  %452 = vmatprep.subr.mxu0 0.0
  %453 = vmatpush1.msra.mxu0 0.0
  %454 = vmatprep.subr.mxu0 0.0
  %455 = vmatpush1.msra.mxu0 0.0
  %456 = vmatprep.subr.mxu0 0.0
  %457 = vmatpush1.msra.mxu0 0.0
  %458 = vmatprep.mubr.f32.mxu0 0.0
  %459 = vmatmul.mubr.f32.gmra.mrb[0].mxu0 %v296
  %v460 = vpop.f32.mrb[0].mxu0
  %v461 = vadd.f32 %v290, %v460
  %v462 = vpop.f32.mrb[0].mxu0
  %463 = vdwg.mxu0
  %v464 = vadd.f32 %v294, %v461
  %v465 = vxor.u32 %v464, 2147483648
  %v466 = vmul.f32 %v465, 1.442695
  %v467 = vpow.pop %v466
  %v468 = vadd.f32 %v467, 1.0
  %v469 = vrcp.pop %v468
  %v470 = vmul.f32 1.0, %v469
  %472 = vrot.lane.b32.xlu0 %v461, 64
  %v473 = vpop.permute.xlu0 %472
  %v475 = vmul.f32 %v470, %v473
  %477 = vrot.lane.b32.xlu0 %v475, 64
  %v478 = vpop.permute.xlu0 %477
  %v480 = vadd.f32 %v294, %v478
  %v481 = vtanh.pop %v480
  %v482 = vsub.f32 1.0, %v470
  %484 = vrot.lane.b32.xlu0 %v481, 96
  %v485 = vpop.permute.xlu0 %484
  %v487 = vmul.f32 %v482, %v485
  %v488 = vmul.f32 %v470, 0.0
  %v489 = vadd.f32 %v487, %v488
  %491 = vrot.lane.b32.xlu0 %v393, 96
  %v492 = vpop.permute.xlu0 %491
  %494 = vst.msk [vmem:[%s7] sm:$0xff] %vm245, %v492
  %s495 = scalar_lea.vmem %s7, 56
  %vm496 = vcmask 523520
  %497 = vst.msk [vmem:[%s495] sm:$0xff] %vm496, %v489
  %s498 = scalar_lea.vmem [#allocation2], 8
  %v499 = vld [vmem:[%s498] sm:$0xff]
  %s500 = scalar_lea.vmem [#allocation3], 48
  %v501 = vld [vmem:[%s500] sm:$0xff]
  %v502 = vsel %vm245, %v492, 0
  %504 = vmatprep.subr.mxu0 0.0
  %505 = vmatpush1.msra.mxu0 %v270
  %506 = vmatprep.subr.mxu0 0.0
  %507 = vmatpush1.msra.mxu0 %v271
  %508 = vmatprep.subr.mxu0 0.0
  %509 = vmatpush1.msra.mxu0 %v272
  %510 = vmatprep.subr.mxu0 0.0
  %511 = vmatpush1.msra.mxu0 %v273
  %512 = vmatprep.subr.mxu0 0.0
  %513 = vmatpush1.msra.mxu0 0.0
  %514 = vmatprep.subr.mxu0 0.0
  %515 = vmatpush1.msra.mxu0 0.0
  %516 = vmatprep.subr.mxu0 0.0
  %517 = vmatpush1.msra.mxu0 0.0
  %518 = vmatprep.subr.mxu0 0.0
  %519 = vmatpush1.msra.mxu0 0.0
  %520 = vmatprep.subr.mxu0 0.0
  %521 = vmatpush1.msra.mxu0 0.0
  %522 = vmatprep.subr.mxu0 0.0
  %523 = vmatpush1.msra.mxu0 0.0
  %524 = vmatprep.subr.mxu0 0.0
  %525 = vmatpush1.msra.mxu0 0.0
  %526 = vmatprep.subr.mxu0 0.0
  %527 = vmatpush1.msra.mxu0 0.0
  %528 = vmatprep.subr.mxu0 0.0
  %529 = vmatpush1.msra.mxu0 0.0
  %530 = vmatprep.subr.mxu0 0.0
  %531 = vmatpush1.msra.mxu0 0.0
  %532 = vmatprep.subr.mxu0 0.0
  %533 = vmatpush1.msra.mxu0 0.0
  %534 = vmatprep.subr.mxu0 0.0
  %535 = vmatpush1.msra.mxu0 0.0
  %536 = vmatprep.subr.mxu0 0.0
  %537 = vmatpush1.msra.mxu0 0.0
  %538 = vmatprep.subr.mxu0 0.0
  %539 = vmatpush1.msra.mxu0 0.0
  %540 = vmatprep.subr.mxu0 0.0
  %541 = vmatpush1.msra.mxu0 0.0
  %542 = vmatprep.subr.mxu0 0.0
  %543 = vmatpush1.msra.mxu0 0.0
  %544 = vmatprep.subr.mxu0 0.0
  %545 = vmatpush1.msra.mxu0 0.0
  %546 = vmatprep.subr.mxu0 0.0
  %547 = vmatpush1.msra.mxu0 0.0
  %548 = vmatprep.subr.mxu0 0.0
  %549 = vmatpush1.msra.mxu0 0.0
  %550 = vmatprep.subr.mxu0 0.0
  %551 = vmatpush1.msra.mxu0 0.0
  %552 = vmatprep.subr.mxu0 0.0
  %553 = vmatpush1.msra.mxu0 0.0
  %554 = vmatprep.subr.mxu0 0.0
  %555 = vmatpush1.msra.mxu0 0.0
  %556 = vmatprep.subr.mxu0 0.0
  %557 = vmatpush1.msra.mxu0 0.0
  %558 = vmatprep.subr.mxu0 0.0
  %559 = vmatpush1.msra.mxu0 0.0
  %560 = vmatprep.subr.mxu0 0.0
  %561 = vmatpush1.msra.mxu0 0.0
  %562 = vmatprep.subr.mxu0 0.0
  %563 = vmatpush1.msra.mxu0 0.0
  %564 = vmatprep.subr.mxu0 0.0
  %565 = vmatpush1.msra.mxu0 0.0
  %566 = vmatprep.subr.mxu0 0.0
  %567 = vmatpush1.msra.mxu0 0.0
  %568 = vmatprep.mubr.f32.mxu0 0.0
  %569 = vmatmul.mubr.f32.gmra.mrb[0].mxu0 %v502
  %v570 = vpop.f32.mrb[0].mxu0
  %v571 = vadd.f32 %v283, %v570
  %v572 = vpop.f32.mrb[0].mxu0
  %573 = vdwg.mxu0
  %v574 = vadd.f32 %v499, %v571
  %v575 = vxor.u32 %v574, 2147483648
  %v576 = vmul.f32 %v575, 1.442695
  %v577 = vpow.pop %v576
  %v578 = vadd.f32 %v577, 1.0
  %v579 = vrcp.pop %v578
  %v580 = vmul.f32 1.0, %v579
  %582 = vrot.lane.b32.xlu0 %v571, 64
  %v583 = vpop.permute.xlu0 %582
  %v585 = vmul.f32 %v580, %v583
  %587 = vrot.lane.b32.xlu0 %v585, 64
  %v588 = vpop.permute.xlu0 %587
  %v590 = vadd.f32 %v499, %v588
  %v591 = vtanh.pop %v590
  %v592 = vsub.f32 1.0, %v580
  %594 = vrot.lane.b32.xlu0 %v591, 96
  %v595 = vpop.permute.xlu0 %594
  %v597 = vmul.f32 %v592, %v595
  %v598 = vmul.f32 %v580, %v393
  %v599 = vadd.f32 %v597, %v598
  %601 = vrot.lane.b32.xlu0 %v489, 96
  %v602 = vpop.permute.xlu0 %601
  %v603 = vsel %vm245, %v602, 0
  %605 = vmatprep.subr.mxu0 0.0
  %606 = vmatpush1.msra.mxu0 %v274
  %607 = vmatprep.subr.mxu0 0.0
  %608 = vmatpush1.msra.mxu0 %v275
  %609 = vmatprep.subr.mxu0 0.0
  %610 = vmatpush1.msra.mxu0 %v276
  %611 = vmatprep.subr.mxu0 0.0
  %612 = vmatpush1.msra.mxu0 %v277
  %613 = vmatprep.subr.mxu0 0.0
  %614 = vmatpush1.msra.mxu0 0.0
  %615 = vmatprep.subr.mxu0 0.0
  %616 = vmatpush1.msra.mxu0 0.0
  %617 = vmatprep.subr.mxu0 0.0
  %618 = vmatpush1.msra.mxu0 0.0
  %619 = vmatprep.subr.mxu0 0.0
  %620 = vmatpush1.msra.mxu0 0.0
  %621 = vmatprep.subr.mxu0 0.0
  %622 = vmatpush1.msra.mxu0 0.0
  %623 = vmatprep.subr.mxu0 0.0
  %624 = vmatpush1.msra.mxu0 0.0
  %625 = vmatprep.subr.mxu0 0.0
  %626 = vmatpush1.msra.mxu0 0.0
  %627 = vmatprep.subr.mxu0 0.0
  %628 = vmatpush1.msra.mxu0 0.0
  %629 = vmatprep.subr.mxu0 0.0
  %630 = vmatpush1.msra.mxu0 0.0
  %631 = vmatprep.subr.mxu0 0.0
  %632 = vmatpush1.msra.mxu0 0.0
  %633 = vmatprep.subr.mxu0 0.0
  %634 = vmatpush1.msra.mxu0 0.0
  %635 = vmatprep.subr.mxu0 0.0
  %636 = vmatpush1.msra.mxu0 0.0
  %637 = vmatprep.subr.mxu0 0.0
  %638 = vmatpush1.msra.mxu0 0.0
  %639 = vmatprep.subr.mxu0 0.0
  %640 = vmatpush1.msra.mxu0 0.0
  %641 = vmatprep.subr.mxu0 0.0
  %642 = vmatpush1.msra.mxu0 0.0
  %643 = vmatprep.subr.mxu0 0.0
  %644 = vmatpush1.msra.mxu0 0.0
  %645 = vmatprep.subr.mxu0 0.0
  %646 = vmatpush1.msra.mxu0 0.0
  %647 = vmatprep.subr.mxu0 0.0
  %648 = vmatpush1.msra.mxu0 0.0
  %649 = vmatprep.subr.mxu0 0.0
  %650 = vmatpush1.msra.mxu0 0.0
  %651 = vmatprep.subr.mxu0 0.0
  %652 = vmatpush1.msra.mxu0 0.0
  %653 = vmatprep.subr.mxu0 0.0
  %654 = vmatpush1.msra.mxu0 0.0
  %655 = vmatprep.subr.mxu0 0.0
  %656 = vmatpush1.msra.mxu0 0.0
  %657 = vmatprep.subr.mxu0 0.0
  %658 = vmatpush1.msra.mxu0 0.0
  %659 = vmatprep.subr.mxu0 0.0
  %660 = vmatpush1.msra.mxu0 0.0
  %661 = vmatprep.subr.mxu0 0.0
  %662 = vmatpush1.msra.mxu0 0.0
  %663 = vmatprep.subr.mxu0 0.0
  %664 = vmatpush1.msra.mxu0 0.0
  %665 = vmatprep.subr.mxu0 0.0
  %666 = vmatpush1.msra.mxu0 0.0
  %667 = vmatprep.subr.mxu0 0.0
  %668 = vmatpush1.msra.mxu0 0.0
  %669 = vmatprep.mubr.f32.mxu0 0.0
  %670 = vmatmul.mubr.f32.gmra.mrb[0].mxu0 %v603
  %v671 = vpop.f32.mrb[0].mxu0
  %v672 = vadd.f32 %v290, %v671
  %v673 = vpop.f32.mrb[0].mxu0
  %674 = vdwg.mxu0
  %v675 = vadd.f32 %v501, %v672
  %v676 = vxor.u32 %v675, 2147483648
  %v677 = vmul.f32 %v676, 1.442695
  %v678 = vpow.pop %v677
  %v679 = vadd.f32 %v678, 1.0
  %v680 = vrcp.pop %v679
  %v681 = vmul.f32 1.0, %v680
  %683 = vrot.lane.b32.xlu0 %v672, 64
  %v684 = vpop.permute.xlu0 %683
  %v686 = vmul.f32 %v681, %v684
  %688 = vrot.lane.b32.xlu0 %v686, 64
  %v689 = vpop.permute.xlu0 %688
  %v691 = vadd.f32 %v501, %v689
  %v692 = vtanh.pop %v691
  %v693 = vsub.f32 1.0, %v681
  %695 = vrot.lane.b32.xlu0 %v692, 96
  %v696 = vpop.permute.xlu0 %695
  %v698 = vmul.f32 %v693, %v696
  %v699 = vmul.f32 %v681, %v489
  %v700 = vadd.f32 %v698, %v699
  %702 = vrot.lane.b32.xlu0 %v599, 96
  %v703 = vpop.permute.xlu0 %702
  %s705 = scalar_lea.vmem %s7, 8
  %706 = vst.msk [vmem:[%s705] sm:$0xff] %vm245, %v703
  %s707 = scalar_lea.vmem %s7, 48
  %708 = vst.msk [vmem:[%s707] sm:$0xff] %vm496, %v700
  %s709 = scalar_lea.vmem [#allocation2], 16
  %v710 = vld [vmem:[%s709] sm:$0xff]
  %s711 = scalar_lea.vmem [#allocation3], 40
  %v712 = vld [vmem:[%s711] sm:$0xff]
  %v713 = vsel %vm245, %v703, 0
  %715 = vmatprep.subr.mxu0 0.0
  %716 = vmatpush1.msra.mxu0 %v270
  %717 = vmatprep.subr.mxu0 0.0
  %718 = vmatpush1.msra.mxu0 %v271
  %719 = vmatprep.subr.mxu0 0.0
  %720 = vmatpush1.msra.mxu0 %v272
  %721 = vmatprep.subr.mxu0 0.0
  %722 = vmatpush1.msra.mxu0 %v273
  %723 = vmatprep.subr.mxu0 0.0
  %724 = vmatpush1.msra.mxu0 0.0
  %725 = vmatprep.subr.mxu0 0.0
  %726 = vmatpush1.msra.mxu0 0.0
  %727 = vmatprep.subr.mxu0 0.0
  %728 = vmatpush1.msra.mxu0 0.0
  %729 = vmatprep.subr.mxu0 0.0
  %730 = vmatpush1.msra.mxu0 0.0
  %731 = vmatprep.subr.mxu0 0.0
  %732 = vmatpush1.msra.mxu0 0.0
  %733 = vmatprep.subr.mxu0 0.0
  %734 = vmatpush1.msra.mxu0 0.0
  %735 = vmatprep.subr.mxu0 0.0
  %736 = vmatpush1.msra.mxu0 0.0
  %737 = vmatprep.subr.mxu0 0.0
  %738 = vmatpush1.msra.mxu0 0.0
  %739 = vmatprep.subr.mxu0 0.0
  %740 = vmatpush1.msra.mxu0 0.0
  %741 = vmatprep.subr.mxu0 0.0
  %742 = vmatpush1.msra.mxu0 0.0
  %743 = vmatprep.subr.mxu0 0.0
  %744 = vmatpush1.msra.mxu0 0.0
  %745 = vmatprep.subr.mxu0 0.0
  %746 = vmatpush1.msra.mxu0 0.0
  %747 = vmatprep.subr.mxu0 0.0
  %748 = vmatpush1.msra.mxu0 0.0
  %749 = vmatprep.subr.mxu0 0.0
  %750 = vmatpush1.msra.mxu0 0.0
  %751 = vmatprep.subr.mxu0 0.0
  %752 = vmatpush1.msra.mxu0 0.0
  %753 = vmatprep.subr.mxu0 0.0
  %754 = vmatpush1.msra.mxu0 0.0
  %755 = vmatprep.subr.mxu0 0.0
  %756 = vmatpush1.msra.mxu0 0.0
  %757 = vmatprep.subr.mxu0 0.0
  %758 = vmatpush1.msra.mxu0 0.0
  %759 = vmatprep.subr.mxu0 0.0
  %760 = vmatpush1.msra.mxu0 0.0
  %761 = vmatprep.subr.mxu0 0.0
  %762 = vmatpush1.msra.mxu0 0.0
  %763 = vmatprep.subr.mxu0 0.0
  %764 = vmatpush1.msra.mxu0 0.0
  %765 = vmatprep.subr.mxu0 0.0
  %766 = vmatpush1.msra.mxu0 0.0
  %767 = vmatprep.subr.mxu0 0.0
  %768 = vmatpush1.msra.mxu0 0.0
  %769 = vmatprep.subr.mxu0 0.0
  %770 = vmatpush1.msra.mxu0 0.0
  %771 = vmatprep.subr.mxu0 0.0
  %772 = vmatpush1.msra.mxu0 0.0
  %773 = vmatprep.subr.mxu0 0.0
  %774 = vmatpush1.msra.mxu0 0.0
  %775 = vmatprep.subr.mxu0 0.0
  %776 = vmatpush1.msra.mxu0 0.0
  %777 = vmatprep.subr.mxu0 0.0
  %778 = vmatpush1.msra.mxu0 0.0
  %779 = vmatprep.mubr.f32.mxu0 0.0
  %780 = vmatmul.mubr.f32.gmra.mrb[0].mxu0 %v713
  %v781 = vpop.f32.mrb[0].mxu0
  %v782 = vadd.f32 %v283, %v781
  %v783 = vpop.f32.mrb[0].mxu0
  %784 = vdwg.mxu0
  %v785 = vadd.f32 %v710, %v782
  %v786 = vxor.u32 %v785, 2147483648
  %v787 = vmul.f32 %v786, 1.442695
  %v788 = vpow.pop %v787
  %v789 = vadd.f32 %v788, 1.0
  %v790 = vrcp.pop %v789
  %v791 = vmul.f32 1.0, %v790
  %793 = vrot.lane.b32.xlu0 %v782, 64
  %v794 = vpop.permute.xlu0 %793
  %v796 = vmul.f32 %v791, %v794
  %798 = vrot.lane.b32.xlu0 %v796, 64
  %v799 = vpop.permute.xlu0 %798
  %v801 = vadd.f32 %v710, %v799
  %v802 = vtanh.pop %v801
  %v803 = vsub.f32 1.0, %v791
  %805 = vrot.lane.b32.xlu0 %v802, 96
  %v806 = vpop.permute.xlu0 %805
  %v808 = vmul.f32 %v803, %v806
  %v809 = vmul.f32 %v791, %v599
  %v810 = vadd.f32 %v808, %v809
  %812 = vrot.lane.b32.xlu0 %v700, 96
  %v813 = vpop.permute.xlu0 %812
  %v814 = vsel %vm245, %v813, 0
  %816 = vmatprep.subr.mxu0 0.0
  %817 = vmatpush1.msra.mxu0 %v274
  %818 = vmatprep.subr.mxu0 0.0
  %819 = vmatpush1.msra.mxu0 %v275
  %820 = vmatprep.subr.mxu0 0.0
  %821 = vmatpush1.msra.mxu0 %v276
  %822 = vmatprep.subr.mxu0 0.0
  %823 = vmatpush1.msra.mxu0 %v277
  %824 = vmatprep.subr.mxu0 0.0
  %825 = vmatpush1.msra.mxu0 0.0
  %826 = vmatprep.subr.mxu0 0.0
  %827 = vmatpush1.msra.mxu0 0.0
  %828 = vmatprep.subr.mxu0 0.0
  %829 = vmatpush1.msra.mxu0 0.0
  %830 = vmatprep.subr.mxu0 0.0
  %831 = vmatpush1.msra.mxu0 0.0
  %832 = vmatprep.subr.mxu0 0.0
  %833 = vmatpush1.msra.mxu0 0.0
  %834 = vmatprep.subr.mxu0 0.0
  %835 = vmatpush1.msra.mxu0 0.0
  %836 = vmatprep.subr.mxu0 0.0
  %837 = vmatpush1.msra.mxu0 0.0
  %838 = vmatprep.subr.mxu0 0.0
  %839 = vmatpush1.msra.mxu0 0.0
  %840 = vmatprep.subr.mxu0 0.0
  %841 = vmatpush1.msra.mxu0 0.0
  %842 = vmatprep.subr.mxu0 0.0
  %843 = vmatpush1.msra.mxu0 0.0
  %844 = vmatprep.subr.mxu0 0.0
  %845 = vmatpush1.msra.mxu0 0.0
  %846 = vmatprep.subr.mxu0 0.0
  %847 = vmatpush1.msra.mxu0 0.0
  %848 = vmatprep.subr.mxu0 0.0
  %849 = vmatpush1.msra.mxu0 0.0
  %850 = vmatprep.subr.mxu0 0.0
  %851 = vmatpush1.msra.mxu0 0.0
  %852 = vmatprep.subr.mxu0 0.0
  %853 = vmatpush1.msra.mxu0 0.0
  %854 = vmatprep.subr.mxu0 0.0
  %855 = vmatpush1.msra.mxu0 0.0
  %856 = vmatprep.subr.mxu0 0.0
  %857 = vmatpush1.msra.mxu0 0.0
  %858 = vmatprep.subr.mxu0 0.0
  %859 = vmatpush1.msra.mxu0 0.0
  %860 = vmatprep.subr.mxu0 0.0
  %861 = vmatpush1.msra.mxu0 0.0
  %862 = vmatprep.subr.mxu0 0.0
  %863 = vmatpush1.msra.mxu0 0.0
  %864 = vmatprep.subr.mxu0 0.0
  %865 = vmatpush1.msra.mxu0 0.0
  %866 = vmatprep.subr.mxu0 0.0
  %867 = vmatpush1.msra.mxu0 0.0
  %868 = vmatprep.subr.mxu0 0.0
  %869 = vmatpush1.msra.mxu0 0.0
  %870 = vmatprep.subr.mxu0 0.0
  %871 = vmatpush1.msra.mxu0 0.0
  %872 = vmatprep.subr.mxu0 0.0
  %873 = vmatpush1.msra.mxu0 0.0
  %874 = vmatprep.subr.mxu0 0.0
  %875 = vmatpush1.msra.mxu0 0.0
  %876 = vmatprep.subr.mxu0 0.0
  %877 = vmatpush1.msra.mxu0 0.0
  %878 = vmatprep.subr.mxu0 0.0
  %879 = vmatpush1.msra.mxu0 0.0
  %880 = vmatprep.mubr.f32.mxu0 0.0
  %881 = vmatmul.mubr.f32.gmra.mrb[0].mxu0 %v814
  %v882 = vpop.f32.mrb[0].mxu0
  %v883 = vadd.f32 %v290, %v882
  %v884 = vpop.f32.mrb[0].mxu0
  %885 = vdwg.mxu0
  %v886 = vadd.f32 %v712, %v883
  %v887 = vxor.u32 %v886, 2147483648
  %v888 = vmul.f32 %v887, 1.442695
  %v889 = vpow.pop %v888
  %v890 = vadd.f32 %v889, 1.0
  %v891 = vrcp.pop %v890
  %v892 = vmul.f32 1.0, %v891
  %894 = vrot.lane.b32.xlu0 %v883, 64
  %v895 = vpop.permute.xlu0 %894
  %v897 = vmul.f32 %v892, %v895
  %899 = vrot.lane.b32.xlu0 %v897, 64
  %v900 = vpop.permute.xlu0 %899
  %v902 = vadd.f32 %v712, %v900
  %v903 = vtanh.pop %v902
  %v904 = vsub.f32 1.0, %v892
  %906 = vrot.lane.b32.xlu0 %v903, 96
  %v907 = vpop.permute.xlu0 %906
  %v909 = vmul.f32 %v904, %v907
  %v910 = vmul.f32 %v892, %v700
  %v911 = vadd.f32 %v909, %v910
  %913 = vrot.lane.b32.xlu0 %v810, 96
  %v914 = vpop.permute.xlu0 %913
  %s916 = scalar_lea.vmem %s7, 16
  %917 = vst.msk [vmem:[%s916] sm:$0xff] %vm245, %v914
  %s918 = scalar_lea.vmem %s7, 40
  %919 = vst.msk [vmem:[%s918] sm:$0xff] %vm496, %v911
  %s920 = scalar_lea.vmem [#allocation2], 24
  %v921 = vld [vmem:[%s920] sm:$0xff]
  %s922 = scalar_lea.vmem [#allocation3], 32
  %v923 = vld [vmem:[%s922] sm:$0xff]
  %v924 = vsel %vm245, %v914, 0
  %926 = vmatprep.subr.mxu0 0.0
  %927 = vmatpush1.msra.mxu0 %v270
  %928 = vmatprep.subr.mxu0 0.0
  %929 = vmatpush1.msra.mxu0 %v271
  %930 = vmatprep.subr.mxu0 0.0
  %931 = vmatpush1.msra.mxu0 %v272
  %932 = vmatprep.subr.mxu0 0.0
  %933 = vmatpush1.msra.mxu0 %v273
  %934 = vmatprep.subr.mxu0 0.0
  %935 = vmatpush1.msra.mxu0 0.0
  %936 = vmatprep.subr.mxu0 0.0
  %937 = vmatpush1.msra.mxu0 0.0
  %938 = vmatprep.subr.mxu0 0.0
  %939 = vmatpush1.msra.mxu0 0.0
  %940 = vmatprep.subr.mxu0 0.0
  %941 = vmatpush1.msra.mxu0 0.0
  %942 = vmatprep.subr.mxu0 0.0
  %943 = vmatpush1.msra.mxu0 0.0
  %944 = vmatprep.subr.mxu0 0.0
  %945 = vmatpush1.msra.mxu0 0.0
  %946 = vmatprep.subr.mxu0 0.0
  %947 = vmatpush1.msra.mxu0 0.0
  %948 = vmatprep.subr.mxu0 0.0
  %949 = vmatpush1.msra.mxu0 0.0
  %950 = vmatprep.subr.mxu0 0.0
  %951 = vmatpush1.msra.mxu0 0.0
  %952 = vmatprep.subr.mxu0 0.0
  %953 = vmatpush1.msra.mxu0 0.0
  %954 = vmatprep.subr.mxu0 0.0
  %955 = vmatpush1.msra.mxu0 0.0
  %956 = vmatprep.subr.mxu0 0.0
  %957 = vmatpush1.msra.mxu0 0.0
  %958 = vmatprep.subr.mxu0 0.0
  %959 = vmatpush1.msra.mxu0 0.0
  %960 = vmatprep.subr.mxu0 0.0
  %961 = vmatpush1.msra.mxu0 0.0
  %962 = vmatprep.subr.mxu0 0.0
  %963 = vmatpush1.msra.mxu0 0.0
  %964 = vmatprep.subr.mxu0 0.0
  %965 = vmatpush1.msra.mxu0 0.0
  %966 = vmatprep.subr.mxu0 0.0
  %967 = vmatpush1.msra.mxu0 0.0
  %968 = vmatprep.subr.mxu0 0.0
  %969 = vmatpush1.msra.mxu0 0.0
  %970 = vmatprep.subr.mxu0 0.0
  %971 = vmatpush1.msra.mxu0 0.0
  %972 = vmatprep.subr.mxu0 0.0
  %973 = vmatpush1.msra.mxu0 0.0
  %974 = vmatprep.subr.mxu0 0.0
  %975 = vmatpush1.msra.mxu0 0.0
  %976 = vmatprep.subr.mxu0 0.0
  %977 = vmatpush1.msra.mxu0 0.0
  %978 = vmatprep.subr.mxu0 0.0
  %979 = vmatpush1.msra.mxu0 0.0
  %980 = vmatprep.subr.mxu0 0.0
  %981 = vmatpush1.msra.mxu0 0.0
  %982 = vmatprep.subr.mxu0 0.0
  %983 = vmatpush1.msra.mxu0 0.0
  %984 = vmatprep.subr.mxu0 0.0
  %985 = vmatpush1.msra.mxu0 0.0
  %986 = vmatprep.subr.mxu0 0.0
  %987 = vmatpush1.msra.mxu0 0.0
  %988 = vmatprep.subr.mxu0 0.0
  %989 = vmatpush1.msra.mxu0 0.0
  %990 = vmatprep.mubr.f32.mxu0 0.0
  %991 = vmatmul.mubr.f32.gmra.mrb[0].mxu0 %v924
  %v992 = vpop.f32.mrb[0].mxu0
  %v993 = vadd.f32 %v283, %v992
  %v994 = vpop.f32.mrb[0].mxu0
  %995 = vdwg.mxu0
  %v996 = vadd.f32 %v921, %v993
  %v997 = vxor.u32 %v996, 2147483648
  %v998 = vmul.f32 %v997, 1.442695
  %v999 = vpow.pop %v998
  %v1000 = vadd.f32 %v999, 1.0
  %v1001 = vrcp.pop %v1000
  %v1002 = vmul.f32 1.0, %v1001
  %1004 = vrot.lane.b32.xlu0 %v993, 64
  %v1005 = vpop.permute.xlu0 %1004
  %v1007 = vmul.f32 %v1002, %v1005
  %1009 = vrot.lane.b32.xlu0 %v1007, 64
  %v1010 = vpop.permute.xlu0 %1009
  %v1012 = vadd.f32 %v921, %v1010
  %v1013 = vtanh.pop %v1012
  %v1014 = vsub.f32 1.0, %v1002
  %1016 = vrot.lane.b32.xlu0 %v1013, 96
  %v1017 = vpop.permute.xlu0 %1016
  %v1019 = vmul.f32 %v1014, %v1017
  %v1020 = vmul.f32 %v1002, %v810
  %v1021 = vadd.f32 %v1019, %v1020
  %1023 = vrot.lane.b32.xlu0 %v911, 96
  %v1024 = vpop.permute.xlu0 %1023
  %v1025 = vsel %vm245, %v1024, 0
  %1027 = vmatprep.subr.mxu0 0.0
  %1028 = vmatpush1.msra.mxu0 %v274
  %1029 = vmatprep.subr.mxu0 0.0
  %1030 = vmatpush1.msra.mxu0 %v275
  %1031 = vmatprep.subr.mxu0 0.0
  %1032 = vmatpush1.msra.mxu0 %v276
  %1033 = vmatprep.subr.mxu0 0.0
  %1034 = vmatpush1.msra.mxu0 %v277
  %1035 = vmatprep.subr.mxu0 0.0
  %1036 = vmatpush1.msra.mxu0 0.0
  %1037 = vmatprep.subr.mxu0 0.0
  %1038 = vmatpush1.msra.mxu0 0.0
  %1039 = vmatprep.subr.mxu0 0.0
  %1040 = vmatpush1.msra.mxu0 0.0
  %1041 = vmatprep.subr.mxu0 0.0
  %1042 = vmatpush1.msra.mxu0 0.0
  %1043 = vmatprep.subr.mxu0 0.0
  %1044 = vmatpush1.msra.mxu0 0.0
  %1045 = vmatprep.subr.mxu0 0.0
  %1046 = vmatpush1.msra.mxu0 0.0
  %1047 = vmatprep.subr.mxu0 0.0
  %1048 = vmatpush1.msra.mxu0 0.0
  %1049 = vmatprep.subr.mxu0 0.0
  %1050 = vmatpush1.msra.mxu0 0.0
  %1051 = vmatprep.subr.mxu0 0.0
  %1052 = vmatpush1.msra.mxu0 0.0
  %1053 = vmatprep.subr.mxu0 0.0
  %1054 = vmatpush1.msra.mxu0 0.0
  %1055 = vmatprep.subr.mxu0 0.0
  %1056 = vmatpush1.msra.mxu0 0.0
  %1057 = vmatprep.subr.mxu0 0.0
  %1058 = vmatpush1.msra.mxu0 0.0
  %1059 = vmatprep.subr.mxu0 0.0
  %1060 = vmatpush1.msra.mxu0 0.0
  %1061 = vmatprep.subr.mxu0 0.0
  %1062 = vmatpush1.msra.mxu0 0.0
  %1063 = vmatprep.subr.mxu0 0.0
  %1064 = vmatpush1.msra.mxu0 0.0
  %1065 = vmatprep.subr.mxu0 0.0
  %1066 = vmatpush1.msra.mxu0 0.0
  %1067 = vmatprep.subr.mxu0 0.0
  %1068 = vmatpush1.msra.mxu0 0.0
  %1069 = vmatprep.subr.mxu0 0.0
  %1070 = vmatpush1.msra.mxu0 0.0
  %1071 = vmatprep.subr.mxu0 0.0
  %1072 = vmatpush1.msra.mxu0 0.0
  %1073 = vmatprep.subr.mxu0 0.0
  %1074 = vmatpush1.msra.mxu0 0.0
  %1075 = vmatprep.subr.mxu0 0.0
  %1076 = vmatpush1.msra.mxu0 0.0
  %1077 = vmatprep.subr.mxu0 0.0
  %1078 = vmatpush1.msra.mxu0 0.0
  %1079 = vmatprep.subr.mxu0 0.0
  %1080 = vmatpush1.msra.mxu0 0.0
  %1081 = vmatprep.subr.mxu0 0.0
  %1082 = vmatpush1.msra.mxu0 0.0
  %1083 = vmatprep.subr.mxu0 0.0
  %1084 = vmatpush1.msra.mxu0 0.0
  %1085 = vmatprep.subr.mxu0 0.0
  %1086 = vmatpush1.msra.mxu0 0.0
  %1087 = vmatprep.subr.mxu0 0.0
  %1088 = vmatpush1.msra.mxu0 0.0
  %1089 = vmatprep.subr.mxu0 0.0
  %1090 = vmatpush1.msra.mxu0 0.0
  %1091 = vmatprep.mubr.f32.mxu0 0.0
  %1092 = vmatmul.mubr.f32.gmra.mrb[0].mxu0 %v1025
  %v1093 = vpop.f32.mrb[0].mxu0
  %v1094 = vadd.f32 %v290, %v1093
  %v1095 = vpop.f32.mrb[0].mxu0
  %1096 = vdwg.mxu0
  %v1097 = vadd.f32 %v923, %v1094
  %v1098 = vxor.u32 %v1097, 2147483648
  %v1099 = vmul.f32 %v1098, 1.442695
  %v1100 = vpow.pop %v1099
  %v1101 = vadd.f32 %v1100, 1.0
  %v1102 = vrcp.pop %v1101
  %v1103 = vmul.f32 1.0, %v1102
  %1105 = vrot.lane.b32.xlu0 %v1094, 64
  %v1106 = vpop.permute.xlu0 %1105
  %v1108 = vmul.f32 %v1103, %v1106
  %1110 = vrot.lane.b32.xlu0 %v1108, 64
  %v1111 = vpop.permute.xlu0 %1110
  %v1113 = vadd.f32 %v923, %v1111
  %v1114 = vtanh.pop %v1113
  %v1115 = vsub.f32 1.0, %v1103
  %1117 = vrot.lane.b32.xlu0 %v1114, 96
  %v1118 = vpop.permute.xlu0 %1117
  %v1120 = vmul.f32 %v1115, %v1118
  %v1121 = vmul.f32 %v1103, %v911
  %v1122 = vadd.f32 %v1120, %v1121
  %1124 = vrot.lane.b32.xlu0 %v1021, 96
  %v1125 = vpop.permute.xlu0 %1124
  %s1127 = scalar_lea.vmem %s7, 24
  %1128 = vst.msk [vmem:[%s1127] sm:$0xff] %vm245, %v1125
  %s1129 = scalar_lea.vmem %s7, 32
  %1130 = vst.msk [vmem:[%s1129] sm:$0xff] %vm496, %v1122
  %s1131 = scalar_lea.vmem [#allocation2], 32
  %v1132 = vld [vmem:[%s1131] sm:$0xff]
  %s1133 = scalar_lea.vmem [#allocation3], 24
  %v1134 = vld [vmem:[%s1133] sm:$0xff]
  %v1135 = vsel %vm245, %v1125, 0
  %1137 = vmatprep.subr.mxu0 0.0
  %1138 = vmatpush1.msra.mxu0 %v270
  %1139 = vmatprep.subr.mxu0 0.0
  %1140 = vmatpush1.msra.mxu0 %v271
  %1141 = vmatprep.subr.mxu0 0.0
  %1142 = vmatpush1.msra.mxu0 %v272
  %1143 = vmatprep.subr.mxu0 0.0
  %1144 = vmatpush1.msra.mxu0 %v273
  %1145 = vmatprep.subr.mxu0 0.0
  %1146 = vmatpush1.msra.mxu0 0.0
  %1147 = vmatprep.subr.mxu0 0.0
  %1148 = vmatpush1.msra.mxu0 0.0
  %1149 = vmatprep.subr.mxu0 0.0
  %1150 = vmatpush1.msra.mxu0 0.0
  %1151 = vmatprep.subr.mxu0 0.0
  %1152 = vmatpush1.msra.mxu0 0.0
  %1153 = vmatprep.subr.mxu0 0.0
  %1154 = vmatpush1.msra.mxu0 0.0
  %1155 = vmatprep.subr.mxu0 0.0
  %1156 = vmatpush1.msra.mxu0 0.0
  %1157 = vmatprep.subr.mxu0 0.0
  %1158 = vmatpush1.msra.mxu0 0.0
  %1159 = vmatprep.subr.mxu0 0.0
  %1160 = vmatpush1.msra.mxu0 0.0
  %1161 = vmatprep.subr.mxu0 0.0
  %1162 = vmatpush1.msra.mxu0 0.0
  %1163 = vmatprep.subr.mxu0 0.0
  %1164 = vmatpush1.msra.mxu0 0.0
  %1165 = vmatprep.subr.mxu0 0.0
  %1166 = vmatpush1.msra.mxu0 0.0
  %1167 = vmatprep.subr.mxu0 0.0
  %1168 = vmatpush1.msra.mxu0 0.0
  %1169 = vmatprep.subr.mxu0 0.0
  %1170 = vmatpush1.msra.mxu0 0.0
  %1171 = vmatprep.subr.mxu0 0.0
  %1172 = vmatpush1.msra.mxu0 0.0
  %1173 = vmatprep.subr.mxu0 0.0
  %1174 = vmatpush1.msra.mxu0 0.0
  %1175 = vmatprep.subr.mxu0 0.0
  %1176 = vmatpush1.msra.mxu0 0.0
  %1177 = vmatprep.subr.mxu0 0.0
  %1178 = vmatpush1.msra.mxu0 0.0
  %1179 = vmatprep.subr.mxu0 0.0
  %1180 = vmatpush1.msra.mxu0 0.0
  %1181 = vmatprep.subr.mxu0 0.0
  %1182 = vmatpush1.msra.mxu0 0.0
  %1183 = vmatprep.subr.mxu0 0.0
  %1184 = vmatpush1.msra.mxu0 0.0
  %1185 = vmatprep.subr.mxu0 0.0
  %1186 = vmatpush1.msra.mxu0 0.0
  %1187 = vmatprep.subr.mxu0 0.0
  %1188 = vmatpush1.msra.mxu0 0.0
  %1189 = vmatprep.subr.mxu0 0.0
  %1190 = vmatpush1.msra.mxu0 0.0
  %1191 = vmatprep.subr.mxu0 0.0
  %1192 = vmatpush1.msra.mxu0 0.0
  %1193 = vmatprep.subr.mxu0 0.0
  %1194 = vmatpush1.msra.mxu0 0.0
  %1195 = vmatprep.subr.mxu0 0.0
  %1196 = vmatpush1.msra.mxu0 0.0
  %1197 = vmatprep.subr.mxu0 0.0
  %1198 = vmatpush1.msra.mxu0 0.0
  %1199 = vmatprep.subr.mxu0 0.0
  %1200 = vmatpush1.msra.mxu0 0.0
  %1201 = vmatprep.mubr.f32.mxu0 0.0
  %1202 = vmatmul.mubr.f32.gmra.mrb[0].mxu0 %v1135
  %v1203 = vpop.f32.mrb[0].mxu0
  %v1204 = vadd.f32 %v283, %v1203
  %v1205 = vpop.f32.mrb[0].mxu0
  %1206 = vdwg.mxu0
  %v1207 = vadd.f32 %v1132, %v1204
  %v1208 = vxor.u32 %v1207, 2147483648
  %v1209 = vmul.f32 %v1208, 1.442695
  %v1210 = vpow.pop %v1209
  %v1211 = vadd.f32 %v1210, 1.0
  %v1212 = vrcp.pop %v1211
  %v1213 = vmul.f32 1.0, %v1212
  %1215 = vrot.lane.b32.xlu0 %v1204, 64
  %v1216 = vpop.permute.xlu0 %1215
  %v1218 = vmul.f32 %v1213, %v1216
  %1220 = vrot.lane.b32.xlu0 %v1218, 64
  %v1221 = vpop.permute.xlu0 %1220
  %v1223 = vadd.f32 %v1132, %v1221
  %v1224 = vtanh.pop %v1223
  %v1225 = vsub.f32 1.0, %v1213
  %1227 = vrot.lane.b32.xlu0 %v1224, 96
  %v1228 = vpop.permute.xlu0 %1227
  %v1230 = vmul.f32 %v1225, %v1228
  %v1231 = vmul.f32 %v1213, %v1021
  %v1232 = vadd.f32 %v1230, %v1231
  %1234 = vrot.lane.b32.xlu0 %v1122, 96
  %v1235 = vpop.permute.xlu0 %1234
  %v1236 = vsel %vm245, %v1235, 0
  %1238 = vmatprep.subr.mxu0 0.0
  %1239 = vmatpush1.msra.mxu0 %v274
  %1240 = vmatprep.subr.mxu0 0.0
  %1241 = vmatpush1.msra.mxu0 %v275
  %1242 = vmatprep.subr.mxu0 0.0
  %1243 = vmatpush1.msra.mxu0 %v276
  %1244 = vmatprep.subr.mxu0 0.0
  %1245 = vmatpush1.msra.mxu0 %v277
  %1246 = vmatprep.subr.mxu0 0.0
  %1247 = vmatpush1.msra.mxu0 0.0
  %1248 = vmatprep.subr.mxu0 0.0
  %1249 = vmatpush1.msra.mxu0 0.0
  %1250 = vmatprep.subr.mxu0 0.0
  %1251 = vmatpush1.msra.mxu0 0.0
  %1252 = vmatprep.subr.mxu0 0.0
  %1253 = vmatpush1.msra.mxu0 0.0
  %1254 = vmatprep.subr.mxu0 0.0
  %1255 = vmatpush1.msra.mxu0 0.0
  %1256 = vmatprep.subr.mxu0 0.0
  %1257 = vmatpush1.msra.mxu0 0.0
  %1258 = vmatprep.subr.mxu0 0.0
  %1259 = vmatpush1.msra.mxu0 0.0
  %1260 = vmatprep.subr.mxu0 0.0
  %1261 = vmatpush1.msra.mxu0 0.0
  %1262 = vmatprep.subr.mxu0 0.0
  %1263 = vmatpush1.msra.mxu0 0.0
  %1264 = vmatprep.subr.mxu0 0.0
  %1265 = vmatpush1.msra.mxu0 0.0
  %1266 = vmatprep.subr.mxu0 0.0
  %1267 = vmatpush1.msra.mxu0 0.0
  %1268 = vmatprep.subr.mxu0 0.0
  %1269 = vmatpush1.msra.mxu0 0.0
  %1270 = vmatprep.subr.mxu0 0.0
  %1271 = vmatpush1.msra.mxu0 0.0
  %1272 = vmatprep.subr.mxu0 0.0
  %1273 = vmatpush1.msra.mxu0 0.0
  %1274 = vmatprep.subr.mxu0 0.0
  %1275 = vmatpush1.msra.mxu0 0.0
  %1276 = vmatprep.subr.mxu0 0.0
  %1277 = vmatpush1.msra.mxu0 0.0
  %1278 = vmatprep.subr.mxu0 0.0
  %1279 = vmatpush1.msra.mxu0 0.0
  %1280 = vmatprep.subr.mxu0 0.0
  %1281 = vmatpush1.msra.mxu0 0.0
  %1282 = vmatprep.subr.mxu0 0.0
  %1283 = vmatpush1.msra.mxu0 0.0
  %1284 = vmatprep.subr.mxu0 0.0
  %1285 = vmatpush1.msra.mxu0 0.0
  %1286 = vmatprep.subr.mxu0 0.0
  %1287 = vmatpush1.msra.mxu0 0.0
  %1288 = vmatprep.subr.mxu0 0.0
  %1289 = vmatpush1.msra.mxu0 0.0
  %1290 = vmatprep.subr.mxu0 0.0
  %1291 = vmatpush1.msra.mxu0 0.0
  %1292 = vmatprep.subr.mxu0 0.0
  %1293 = vmatpush1.msra.mxu0 0.0
  %1294 = vmatprep.subr.mxu0 0.0
  %1295 = vmatpush1.msra.mxu0 0.0
  %1296 = vmatprep.subr.mxu0 0.0
  %1297 = vmatpush1.msra.mxu0 0.0
  %1298 = vmatprep.subr.mxu0 0.0
  %1299 = vmatpush1.msra.mxu0 0.0
  %1300 = vmatprep.subr.mxu0 0.0
  %1301 = vmatpush1.msra.mxu0 0.0
  %1302 = vmatprep.mubr.f32.mxu0 0.0
  %1303 = vmatmul.mubr.f32.gmra.mrb[0].mxu0 %v1236
  %v1304 = vpop.f32.mrb[0].mxu0
  %v1305 = vadd.f32 %v290, %v1304
  %v1306 = vpop.f32.mrb[0].mxu0
  %1307 = vdwg.mxu0
  %v1308 = vadd.f32 %v1134, %v1305
  %v1309 = vxor.u32 %v1308, 2147483648
  %v1310 = vmul.f32 %v1309, 1.442695
  %v1311 = vpow.pop %v1310
  %v1312 = vadd.f32 %v1311, 1.0
  %v1313 = vrcp.pop %v1312
  %v1314 = vmul.f32 1.0, %v1313
  %1316 = vrot.lane.b32.xlu0 %v1305, 64
  %v1317 = vpop.permute.xlu0 %1316
  %v1319 = vmul.f32 %v1314, %v1317
  %1321 = vrot.lane.b32.xlu0 %v1319, 64
  %v1322 = vpop.permute.xlu0 %1321
  %v1324 = vadd.f32 %v1134, %v1322
  %v1325 = vtanh.pop %v1324
  %v1326 = vsub.f32 1.0, %v1314
  %1328 = vrot.lane.b32.xlu0 %v1325, 96
  %v1329 = vpop.permute.xlu0 %1328
  %v1331 = vmul.f32 %v1326, %v1329
  %v1332 = vmul.f32 %v1314, %v1122
  %v1333 = vadd.f32 %v1331, %v1332
  %1335 = vrot.lane.b32.xlu0 %v1232, 96
  %v1336 = vpop.permute.xlu0 %1335
  %1338 = vst.msk [vmem:[%s1129] sm:$0xff] %vm245, %v1336
  %1339 = vst.msk [vmem:[%s1127] sm:$0xff] %vm496, %v1333
  %s1340 = scalar_lea.vmem [#allocation2], 40
  %v1341 = vld [vmem:[%s1340] sm:$0xff]
  %s1342 = scalar_lea.vmem [#allocation3], 16
  %v1343 = vld [vmem:[%s1342] sm:$0xff]
  %v1344 = vsel %vm245, %v1336, 0
  %1346 = vmatprep.subr.mxu0 0.0
  %1347 = vmatpush1.msra.mxu0 %v270
  %1348 = vmatprep.subr.mxu0 0.0
  %1349 = vmatpush1.msra.mxu0 %v271
  %1350 = vmatprep.subr.mxu0 0.0
  %1351 = vmatpush1.msra.mxu0 %v272
  %1352 = vmatprep.subr.mxu0 0.0
  %1353 = vmatpush1.msra.mxu0 %v273
  %1354 = vmatprep.subr.mxu0 0.0
  %1355 = vmatpush1.msra.mxu0 0.0
  %1356 = vmatprep.subr.mxu0 0.0
  %1357 = vmatpush1.msra.mxu0 0.0
  %1358 = vmatprep.subr.mxu0 0.0
  %1359 = vmatpush1.msra.mxu0 0.0
  %1360 = vmatprep.subr.mxu0 0.0
  %1361 = vmatpush1.msra.mxu0 0.0
  %1362 = vmatprep.subr.mxu0 0.0
  %1363 = vmatpush1.msra.mxu0 0.0
  %1364 = vmatprep.subr.mxu0 0.0
  %1365 = vmatpush1.msra.mxu0 0.0
  %1366 = vmatprep.subr.mxu0 0.0
  %1367 = vmatpush1.msra.mxu0 0.0
  %1368 = vmatprep.subr.mxu0 0.0
  %1369 = vmatpush1.msra.mxu0 0.0
  %1370 = vmatprep.subr.mxu0 0.0
  %1371 = vmatpush1.msra.mxu0 0.0
  %1372 = vmatprep.subr.mxu0 0.0
  %1373 = vmatpush1.msra.mxu0 0.0
  %1374 = vmatprep.subr.mxu0 0.0
  %1375 = vmatpush1.msra.mxu0 0.0
  %1376 = vmatprep.subr.mxu0 0.0
  %1377 = vmatpush1.msra.mxu0 0.0
  %1378 = vmatprep.subr.mxu0 0.0
  %1379 = vmatpush1.msra.mxu0 0.0
  %1380 = vmatprep.subr.mxu0 0.0
  %1381 = vmatpush1.msra.mxu0 0.0
  %1382 = vmatprep.subr.mxu0 0.0
  %1383 = vmatpush1.msra.mxu0 0.0
  %1384 = vmatprep.subr.mxu0 0.0
  %1385 = vmatpush1.msra.mxu0 0.0
  %1386 = vmatprep.subr.mxu0 0.0
  %1387 = vmatpush1.msra.mxu0 0.0
  %1388 = vmatprep.subr.mxu0 0.0
  %1389 = vmatpush1.msra.mxu0 0.0
  %1390 = vmatprep.subr.mxu0 0.0
  %1391 = vmatpush1.msra.mxu0 0.0
  %1392 = vmatprep.subr.mxu0 0.0
  %1393 = vmatpush1.msra.mxu0 0.0
  %1394 = vmatprep.subr.mxu0 0.0
  %1395 = vmatpush1.msra.mxu0 0.0
  %1396 = vmatprep.subr.mxu0 0.0
  %1397 = vmatpush1.msra.mxu0 0.0
  %1398 = vmatprep.subr.mxu0 0.0
  %1399 = vmatpush1.msra.mxu0 0.0
  %1400 = vmatprep.subr.mxu0 0.0
  %1401 = vmatpush1.msra.mxu0 0.0
  %1402 = vmatprep.subr.mxu0 0.0
  %1403 = vmatpush1.msra.mxu0 0.0
  %1404 = vmatprep.subr.mxu0 0.0
  %1405 = vmatpush1.msra.mxu0 0.0
  %1406 = vmatprep.subr.mxu0 0.0
  %1407 = vmatpush1.msra.mxu0 0.0
  %1408 = vmatprep.subr.mxu0 0.0
  %1409 = vmatpush1.msra.mxu0 0.0
  %1410 = vmatprep.mubr.f32.mxu0 0.0
  %1411 = vmatmul.mubr.f32.gmra.mrb[0].mxu0 %v1344
  %v1412 = vpop.f32.mrb[0].mxu0
  %v1413 = vadd.f32 %v283, %v1412
  %v1414 = vpop.f32.mrb[0].mxu0
  %1415 = vdwg.mxu0
  %v1416 = vadd.f32 %v1341, %v1413
  %v1417 = vxor.u32 %v1416, 2147483648
  %v1418 = vmul.f32 %v1417, 1.442695
  %v1419 = vpow.pop %v1418
  %v1420 = vadd.f32 %v1419, 1.0
  %v1421 = vrcp.pop %v1420
  %v1422 = vmul.f32 1.0, %v1421
  %1424 = vrot.lane.b32.xlu0 %v1413, 64
  %v1425 = vpop.permute.xlu0 %1424
  %v1427 = vmul.f32 %v1422, %v1425
  %1429 = vrot.lane.b32.xlu0 %v1427, 64
  %v1430 = vpop.permute.xlu0 %1429
  %v1432 = vadd.f32 %v1341, %v1430
  %v1433 = vtanh.pop %v1432
  %v1434 = vsub.f32 1.0, %v1422
  %1436 = vrot.lane.b32.xlu0 %v1433, 96
  %v1437 = vpop.permute.xlu0 %1436
  %v1439 = vmul.f32 %v1434, %v1437
  %v1440 = vmul.f32 %v1422, %v1232
  %v1441 = vadd.f32 %v1439, %v1440
  %1443 = vrot.lane.b32.xlu0 %v1333, 96
  %v1444 = vpop.permute.xlu0 %1443
  %v1445 = vsel %vm245, %v1444, 0
  %1447 = vmatprep.subr.mxu0 0.0
  %1448 = vmatpush1.msra.mxu0 %v274
  %1449 = vmatprep.subr.mxu0 0.0
  %1450 = vmatpush1.msra.mxu0 %v275
  %1451 = vmatprep.subr.mxu0 0.0
  %1452 = vmatpush1.msra.mxu0 %v276
  %1453 = vmatprep.subr.mxu0 0.0
  %1454 = vmatpush1.msra.mxu0 %v277
  %1455 = vmatprep.subr.mxu0 0.0
  %1456 = vmatpush1.msra.mxu0 0.0
  %1457 = vmatprep.subr.mxu0 0.0
  %1458 = vmatpush1.msra.mxu0 0.0
  %1459 = vmatprep.subr.mxu0 0.0
  %1460 = vmatpush1.msra.mxu0 0.0
  %1461 = vmatprep.subr.mxu0 0.0
  %1462 = vmatpush1.msra.mxu0 0.0
  %1463 = vmatprep.subr.mxu0 0.0
  %1464 = vmatpush1.msra.mxu0 0.0
  %1465 = vmatprep.subr.mxu0 0.0
  %1466 = vmatpush1.msra.mxu0 0.0
  %1467 = vmatprep.subr.mxu0 0.0
  %1468 = vmatpush1.msra.mxu0 0.0
  %1469 = vmatprep.subr.mxu0 0.0
  %1470 = vmatpush1.msra.mxu0 0.0
  %1471 = vmatprep.subr.mxu0 0.0
  %1472 = vmatpush1.msra.mxu0 0.0
  %1473 = vmatprep.subr.mxu0 0.0
  %1474 = vmatpush1.msra.mxu0 0.0
  %1475 = vmatprep.subr.mxu0 0.0
  %1476 = vmatpush1.msra.mxu0 0.0
  %1477 = vmatprep.subr.mxu0 0.0
  %1478 = vmatpush1.msra.mxu0 0.0
  %1479 = vmatprep.subr.mxu0 0.0
  %1480 = vmatpush1.msra.mxu0 0.0
  %1481 = vmatprep.subr.mxu0 0.0
  %1482 = vmatpush1.msra.mxu0 0.0
  %1483 = vmatprep.subr.mxu0 0.0
  %1484 = vmatpush1.msra.mxu0 0.0
  %1485 = vmatprep.subr.mxu0 0.0
  %1486 = vmatpush1.msra.mxu0 0.0
  %1487 = vmatprep.subr.mxu0 0.0
  %1488 = vmatpush1.msra.mxu0 0.0
  %1489 = vmatprep.subr.mxu0 0.0
  %1490 = vmatpush1.msra.mxu0 0.0
  %1491 = vmatprep.subr.mxu0 0.0
  %1492 = vmatpush1.msra.mxu0 0.0
  %1493 = vmatprep.subr.mxu0 0.0
  %1494 = vmatpush1.msra.mxu0 0.0
  %1495 = vmatprep.subr.mxu0 0.0
  %1496 = vmatpush1.msra.mxu0 0.0
  %1497 = vmatprep.subr.mxu0 0.0
  %1498 = vmatpush1.msra.mxu0 0.0
  %1499 = vmatprep.subr.mxu0 0.0
  %1500 = vmatpush1.msra.mxu0 0.0
  %1501 = vmatprep.subr.mxu0 0.0
  %1502 = vmatpush1.msra.mxu0 0.0
  %1503 = vmatprep.subr.mxu0 0.0
  %1504 = vmatpush1.msra.mxu0 0.0
  %1505 = vmatprep.subr.mxu0 0.0
  %1506 = vmatpush1.msra.mxu0 0.0
  %1507 = vmatprep.subr.mxu0 0.0
  %1508 = vmatpush1.msra.mxu0 0.0
  %1509 = vmatprep.subr.mxu0 0.0
  %1510 = vmatpush1.msra.mxu0 0.0
  %1511 = vmatprep.mubr.f32.mxu0 0.0
  %1512 = vmatmul.mubr.f32.gmra.mrb[0].mxu0 %v1445
  %v1513 = vpop.f32.mrb[0].mxu0
  %v1514 = vadd.f32 %v290, %v1513
  %v1515 = vpop.f32.mrb[0].mxu0
  %1516 = vdwg.mxu0
  %v1517 = vadd.f32 %v1343, %v1514
  %v1518 = vxor.u32 %v1517, 2147483648
  %v1519 = vmul.f32 %v1518, 1.442695
  %v1520 = vpow.pop %v1519
  %v1521 = vadd.f32 %v1520, 1.0
  %v1522 = vrcp.pop %v1521
  %v1523 = vmul.f32 1.0, %v1522
  %1525 = vrot.lane.b32.xlu0 %v1514, 64
  %v1526 = vpop.permute.xlu0 %1525
  %v1528 = vmul.f32 %v1523, %v1526
  %1530 = vrot.lane.b32.xlu0 %v1528, 64
  %v1531 = vpop.permute.xlu0 %1530
  %v1533 = vadd.f32 %v1343, %v1531
  %v1534 = vtanh.pop %v1533
  %v1535 = vsub.f32 1.0, %v1523
  %1537 = vrot.lane.b32.xlu0 %v1534, 96
  %v1538 = vpop.permute.xlu0 %1537
  %v1540 = vmul.f32 %v1535, %v1538
  %v1541 = vmul.f32 %v1523, %v1333
  %v1542 = vadd.f32 %v1540, %v1541
  %1544 = vrot.lane.b32.xlu0 %v1441, 96
  %v1545 = vpop.permute.xlu0 %1544
  %1547 = vst.msk [vmem:[%s918] sm:$0xff] %vm245, %v1545
  %1548 = vst.msk [vmem:[%s916] sm:$0xff] %vm496, %v1542
  %s1549 = scalar_lea.vmem [#allocation2], 48
  %v1550 = vld [vmem:[%s1549] sm:$0xff]
  %s1551 = scalar_lea.vmem [#allocation3], 8
  %v1552 = vld [vmem:[%s1551] sm:$0xff]
  %v1553 = vsel %vm245, %v1545, 0
  %1555 = vmatprep.subr.mxu0 0.0
  %1556 = vmatpush1.msra.mxu0 %v270
  %1557 = vmatprep.subr.mxu0 0.0
  %1558 = vmatpush1.msra.mxu0 %v271
  %1559 = vmatprep.subr.mxu0 0.0
  %1560 = vmatpush1.msra.mxu0 %v272
  %1561 = vmatprep.subr.mxu0 0.0
  %1562 = vmatpush1.msra.mxu0 %v273
  %1563 = vmatprep.subr.mxu0 0.0
  %1564 = vmatpush1.msra.mxu0 0.0
  %1565 = vmatprep.subr.mxu0 0.0
  %1566 = vmatpush1.msra.mxu0 0.0
  %1567 = vmatprep.subr.mxu0 0.0
  %1568 = vmatpush1.msra.mxu0 0.0
  %1569 = vmatprep.subr.mxu0 0.0
  %1570 = vmatpush1.msra.mxu0 0.0
  %1571 = vmatprep.subr.mxu0 0.0
  %1572 = vmatpush1.msra.mxu0 0.0
  %1573 = vmatprep.subr.mxu0 0.0
  %1574 = vmatpush1.msra.mxu0 0.0
  %1575 = vmatprep.subr.mxu0 0.0
  %1576 = vmatpush1.msra.mxu0 0.0
  %1577 = vmatprep.subr.mxu0 0.0
  %1578 = vmatpush1.msra.mxu0 0.0
  %1579 = vmatprep.subr.mxu0 0.0
  %1580 = vmatpush1.msra.mxu0 0.0
  %1581 = vmatprep.subr.mxu0 0.0
  %1582 = vmatpush1.msra.mxu0 0.0
  %1583 = vmatprep.subr.mxu0 0.0
  %1584 = vmatpush1.msra.mxu0 0.0
  %1585 = vmatprep.subr.mxu0 0.0
  %1586 = vmatpush1.msra.mxu0 0.0
  %1587 = vmatprep.subr.mxu0 0.0
  %1588 = vmatpush1.msra.mxu0 0.0
  %1589 = vmatprep.subr.mxu0 0.0
  %1590 = vmatpush1.msra.mxu0 0.0
  %1591 = vmatprep.subr.mxu0 0.0
  %1592 = vmatpush1.msra.mxu0 0.0
  %1593 = vmatprep.subr.mxu0 0.0
  %1594 = vmatpush1.msra.mxu0 0.0
  %1595 = vmatprep.subr.mxu0 0.0
  %1596 = vmatpush1.msra.mxu0 0.0
  %1597 = vmatprep.subr.mxu0 0.0
  %1598 = vmatpush1.msra.mxu0 0.0
  %1599 = vmatprep.subr.mxu0 0.0
  %1600 = vmatpush1.msra.mxu0 0.0
  %1601 = vmatprep.subr.mxu0 0.0
  %1602 = vmatpush1.msra.mxu0 0.0
  %1603 = vmatprep.subr.mxu0 0.0
  %1604 = vmatpush1.msra.mxu0 0.0
  %1605 = vmatprep.subr.mxu0 0.0
  %1606 = vmatpush1.msra.mxu0 0.0
  %1607 = vmatprep.subr.mxu0 0.0
  %1608 = vmatpush1.msra.mxu0 0.0
  %1609 = vmatprep.subr.mxu0 0.0
  %1610 = vmatpush1.msra.mxu0 0.0
  %1611 = vmatprep.subr.mxu0 0.0
  %1612 = vmatpush1.msra.mxu0 0.0
  %1613 = vmatprep.subr.mxu0 0.0
  %1614 = vmatpush1.msra.mxu0 0.0
  %1615 = vmatprep.subr.mxu0 0.0
  %1616 = vmatpush1.msra.mxu0 0.0
  %1617 = vmatprep.subr.mxu0 0.0
  %1618 = vmatpush1.msra.mxu0 0.0
  %1619 = vmatprep.mubr.f32.mxu0 0.0
  %1620 = vmatmul.mubr.f32.gmra.mrb[0].mxu0 %v1553
  %v1621 = vpop.f32.mrb[0].mxu0
  %v1622 = vadd.f32 %v283, %v1621
  %v1623 = vpop.f32.mrb[0].mxu0
  %1624 = vdwg.mxu0
  %v1625 = vadd.f32 %v1550, %v1622
  %v1626 = vxor.u32 %v1625, 2147483648
  %v1627 = vmul.f32 %v1626, 1.442695
  %v1628 = vpow.pop %v1627
  %v1629 = vadd.f32 %v1628, 1.0
  %v1630 = vrcp.pop %v1629
  %v1631 = vmul.f32 1.0, %v1630
  %1633 = vrot.lane.b32.xlu0 %v1622, 64
  %v1634 = vpop.permute.xlu0 %1633
  %v1636 = vmul.f32 %v1631, %v1634
  %1638 = vrot.lane.b32.xlu0 %v1636, 64
  %v1639 = vpop.permute.xlu0 %1638
  %v1641 = vadd.f32 %v1550, %v1639
  %v1642 = vtanh.pop %v1641
  %v1643 = vsub.f32 1.0, %v1631
  %1645 = vrot.lane.b32.xlu0 %v1642, 96
  %v1646 = vpop.permute.xlu0 %1645
  %v1648 = vmul.f32 %v1643, %v1646
  %v1649 = vmul.f32 %v1631, %v1441
  %v1650 = vadd.f32 %v1648, %v1649
  %1652 = vrot.lane.b32.xlu0 %v1542, 96
  %v1653 = vpop.permute.xlu0 %1652
  %v1654 = vsel %vm245, %v1653, 0
  %1656 = vmatprep.subr.mxu0 0.0
  %1657 = vmatpush1.msra.mxu0 %v274
  %1658 = vmatprep.subr.mxu0 0.0
  %1659 = vmatpush1.msra.mxu0 %v275
  %1660 = vmatprep.subr.mxu0 0.0
  %1661 = vmatpush1.msra.mxu0 %v276
  %1662 = vmatprep.subr.mxu0 0.0
  %1663 = vmatpush1.msra.mxu0 %v277
  %1664 = vmatprep.subr.mxu0 0.0
  %1665 = vmatpush1.msra.mxu0 0.0
  %1666 = vmatprep.subr.mxu0 0.0
  %1667 = vmatpush1.msra.mxu0 0.0
  %1668 = vmatprep.subr.mxu0 0.0
  %1669 = vmatpush1.msra.mxu0 0.0
  %1670 = vmatprep.subr.mxu0 0.0
  %1671 = vmatpush1.msra.mxu0 0.0
  %1672 = vmatprep.subr.mxu0 0.0
  %1673 = vmatpush1.msra.mxu0 0.0
  %1674 = vmatprep.subr.mxu0 0.0
  %1675 = vmatpush1.msra.mxu0 0.0
  %1676 = vmatprep.subr.mxu0 0.0
  %1677 = vmatpush1.msra.mxu0 0.0
  %1678 = vmatprep.subr.mxu0 0.0
  %1679 = vmatpush1.msra.mxu0 0.0
  %1680 = vmatprep.subr.mxu0 0.0
  %1681 = vmatpush1.msra.mxu0 0.0
  %1682 = vmatprep.subr.mxu0 0.0
  %1683 = vmatpush1.msra.mxu0 0.0
  %1684 = vmatprep.subr.mxu0 0.0
  %1685 = vmatpush1.msra.mxu0 0.0
  %1686 = vmatprep.subr.mxu0 0.0
  %1687 = vmatpush1.msra.mxu0 0.0
  %1688 = vmatprep.subr.mxu0 0.0
  %1689 = vmatpush1.msra.mxu0 0.0
  %1690 = vmatprep.subr.mxu0 0.0
  %1691 = vmatpush1.msra.mxu0 0.0
  %1692 = vmatprep.subr.mxu0 0.0
  %1693 = vmatpush1.msra.mxu0 0.0
  %1694 = vmatprep.subr.mxu0 0.0
  %1695 = vmatpush1.msra.mxu0 0.0
  %1696 = vmatprep.subr.mxu0 0.0
  %1697 = vmatpush1.msra.mxu0 0.0
  %1698 = vmatprep.subr.mxu0 0.0
  %1699 = vmatpush1.msra.mxu0 0.0
  %1700 = vmatprep.subr.mxu0 0.0
  %1701 = vmatpush1.msra.mxu0 0.0
  %1702 = vmatprep.subr.mxu0 0.0
  %1703 = vmatpush1.msra.mxu0 0.0
  %1704 = vmatprep.subr.mxu0 0.0
  %1705 = vmatpush1.msra.mxu0 0.0
  %1706 = vmatprep.subr.mxu0 0.0
  %1707 = vmatpush1.msra.mxu0 0.0
  %1708 = vmatprep.subr.mxu0 0.0
  %1709 = vmatpush1.msra.mxu0 0.0
  %1710 = vmatprep.subr.mxu0 0.0
  %1711 = vmatpush1.msra.mxu0 0.0
  %1712 = vmatprep.subr.mxu0 0.0
  %1713 = vmatpush1.msra.mxu0 0.0
  %1714 = vmatprep.subr.mxu0 0.0
  %1715 = vmatpush1.msra.mxu0 0.0
  %1716 = vmatprep.subr.mxu0 0.0
  %1717 = vmatpush1.msra.mxu0 0.0
  %1718 = vmatprep.subr.mxu0 0.0
  %1719 = vmatpush1.msra.mxu0 0.0
  %1720 = vmatprep.mubr.f32.mxu0 0.0
  %1721 = vmatmul.mubr.f32.gmra.mrb[0].mxu0 %v1654
  %v1722 = vpop.f32.mrb[0].mxu0
  %v1723 = vadd.f32 %v290, %v1722
  %v1724 = vpop.f32.mrb[0].mxu0
  %1725 = vdwg.mxu0
  %v1726 = vadd.f32 %v1552, %v1723
  %v1727 = vxor.u32 %v1726, 2147483648
  %v1728 = vmul.f32 %v1727, 1.442695
  %v1729 = vpow.pop %v1728
  %v1730 = vadd.f32 %v1729, 1.0
  %v1731 = vrcp.pop %v1730
  %v1732 = vmul.f32 1.0, %v1731
  %1734 = vrot.lane.b32.xlu0 %v1723, 64
  %v1735 = vpop.permute.xlu0 %1734
  %v1737 = vmul.f32 %v1732, %v1735
  %1739 = vrot.lane.b32.xlu0 %v1737, 64
  %v1740 = vpop.permute.xlu0 %1739
  %v1742 = vadd.f32 %v1552, %v1740
  %v1743 = vtanh.pop %v1742
  %v1744 = vsub.f32 1.0, %v1732
  %1746 = vrot.lane.b32.xlu0 %v1743, 96
  %v1747 = vpop.permute.xlu0 %1746
  %v1749 = vmul.f32 %v1744, %v1747
  %v1750 = vmul.f32 %v1732, %v1542
  %v1751 = vadd.f32 %v1749, %v1750
  %1753 = vrot.lane.b32.xlu0 %v1650, 96
  %v1754 = vpop.permute.xlu0 %1753
  %1756 = vst.msk [vmem:[%s707] sm:$0xff] %vm245, %v1754
  %1757 = vst.msk [vmem:[%s705] sm:$0xff] %vm496, %v1751
  %s1758 = scalar_lea.vmem [#allocation2], 56
  %v1759 = vld [vmem:[%s1758] sm:$0xff]
  %v1760 = vld [vmem:[#allocation3] sm:$0xff]
  %v1761 = vsel %vm245, %v1754, 0
  %1763 = vmatprep.subr.mxu0 0.0
  %1764 = vmatpush1.msra.mxu0 %v270
  %1765 = vmatprep.subr.mxu0 0.0
  %1766 = vmatpush1.msra.mxu0 %v271
  %1767 = vmatprep.subr.mxu0 0.0
  %1768 = vmatpush1.msra.mxu0 %v272
  %1769 = vmatprep.subr.mxu0 0.0
  %1770 = vmatpush1.msra.mxu0 %v273
  %1771 = vmatprep.subr.mxu0 0.0
  %1772 = vmatpush1.msra.mxu0 0.0
  %1773 = vmatprep.subr.mxu0 0.0
  %1774 = vmatpush1.msra.mxu0 0.0
  %1775 = vmatprep.subr.mxu0 0.0
  %1776 = vmatpush1.msra.mxu0 0.0
  %1777 = vmatprep.subr.mxu0 0.0
  %1778 = vmatpush1.msra.mxu0 0.0
  %1779 = vmatprep.subr.mxu0 0.0
  %1780 = vmatpush1.msra.mxu0 0.0
  %1781 = vmatprep.subr.mxu0 0.0
  %1782 = vmatpush1.msra.mxu0 0.0
  %1783 = vmatprep.subr.mxu0 0.0
  %1784 = vmatpush1.msra.mxu0 0.0
  %1785 = vmatprep.subr.mxu0 0.0
  %1786 = vmatpush1.msra.mxu0 0.0
  %1787 = vmatprep.subr.mxu0 0.0
  %1788 = vmatpush1.msra.mxu0 0.0
  %1789 = vmatprep.subr.mxu0 0.0
  %1790 = vmatpush1.msra.mxu0 0.0
  %1791 = vmatprep.subr.mxu0 0.0
  %1792 = vmatpush1.msra.mxu0 0.0
  %1793 = vmatprep.subr.mxu0 0.0
  %1794 = vmatpush1.msra.mxu0 0.0
  %1795 = vmatprep.subr.mxu0 0.0
  %1796 = vmatpush1.msra.mxu0 0.0
  %1797 = vmatprep.subr.mxu0 0.0
  %1798 = vmatpush1.msra.mxu0 0.0
  %1799 = vmatprep.subr.mxu0 0.0
  %1800 = vmatpush1.msra.mxu0 0.0
  %1801 = vmatprep.subr.mxu0 0.0
  %1802 = vmatpush1.msra.mxu0 0.0
  %1803 = vmatprep.subr.mxu0 0.0
  %1804 = vmatpush1.msra.mxu0 0.0
  %1805 = vmatprep.subr.mxu0 0.0
  %1806 = vmatpush1.msra.mxu0 0.0
  %1807 = vmatprep.subr.mxu0 0.0
  %1808 = vmatpush1.msra.mxu0 0.0
  %1809 = vmatprep.subr.mxu0 0.0
  %1810 = vmatpush1.msra.mxu0 0.0
  %1811 = vmatprep.subr.mxu0 0.0
  %1812 = vmatpush1.msra.mxu0 0.0
  %1813 = vmatprep.subr.mxu0 0.0
  %1814 = vmatpush1.msra.mxu0 0.0
  %1815 = vmatprep.subr.mxu0 0.0
  %1816 = vmatpush1.msra.mxu0 0.0
  %1817 = vmatprep.subr.mxu0 0.0
  %1818 = vmatpush1.msra.mxu0 0.0
  %1819 = vmatprep.subr.mxu0 0.0
  %1820 = vmatpush1.msra.mxu0 0.0
  %1821 = vmatprep.subr.mxu0 0.0
  %1822 = vmatpush1.msra.mxu0 0.0
  %1823 = vmatprep.subr.mxu0 0.0
  %1824 = vmatpush1.msra.mxu0 0.0
  %1825 = vmatprep.subr.mxu0 0.0
  %1826 = vmatpush1.msra.mxu0 0.0
  %1827 = vmatprep.mubr.f32.mxu0 0.0
  %1828 = vmatmul.mubr.f32.gmra.mrb[0].mxu0 %v1761
  %v1829 = vpop.f32.mrb[0].mxu0
  %v1830 = vadd.f32 %v283, %v1829
  %v1831 = vpop.f32.mrb[0].mxu0
  %1832 = vdwg.mxu0
  %v1833 = vadd.f32 %v1759, %v1830
  %v1834 = vxor.u32 %v1833, 2147483648
  %v1835 = vmul.f32 %v1834, 1.442695
  %v1836 = vpow.pop %v1835
  %v1837 = vadd.f32 %v1836, 1.0
  %v1838 = vrcp.pop %v1837
  %v1839 = vmul.f32 1.0, %v1838
  %1841 = vrot.lane.b32.xlu0 %v1830, 64
  %v1842 = vpop.permute.xlu0 %1841
  %v1844 = vmul.f32 %v1839, %v1842
  %1846 = vrot.lane.b32.xlu0 %v1844, 64
  %v1847 = vpop.permute.xlu0 %1846
  %v1849 = vadd.f32 %v1759, %v1847
  %v1850 = vtanh.pop %v1849
  %v1851 = vsub.f32 1.0, %v1839
  %1853 = vrot.lane.b32.xlu0 %v1850, 96
  %v1854 = vpop.permute.xlu0 %1853
  %v1856 = vmul.f32 %v1851, %v1854
  %v1857 = vmul.f32 %v1839, %v1650
  %v1858 = vadd.f32 %v1856, %v1857
  %1860 = vrot.lane.b32.xlu0 %v1751, 96
  %v1861 = vpop.permute.xlu0 %1860
  %v1862 = vsel %vm245, %v1861, 0
  %1864 = vmatprep.subr.mxu0 0.0
  %1865 = vmatpush1.msra.mxu0 %v274
  %1866 = vmatprep.subr.mxu0 0.0
  %1867 = vmatpush1.msra.mxu0 %v275
  %1868 = vmatprep.subr.mxu0 0.0
  %1869 = vmatpush1.msra.mxu0 %v276
  %1870 = vmatprep.subr.mxu0 0.0
  %1871 = vmatpush1.msra.mxu0 %v277
  %1872 = vmatprep.subr.mxu0 0.0
  %1873 = vmatpush1.msra.mxu0 0.0
  %1874 = vmatprep.subr.mxu0 0.0
  %1875 = vmatpush1.msra.mxu0 0.0
  %1876 = vmatprep.subr.mxu0 0.0
  %1877 = vmatpush1.msra.mxu0 0.0
  %1878 = vmatprep.subr.mxu0 0.0
  %1879 = vmatpush1.msra.mxu0 0.0
  %1880 = vmatprep.subr.mxu0 0.0
  %1881 = vmatpush1.msra.mxu0 0.0
  %1882 = vmatprep.subr.mxu0 0.0
  %1883 = vmatpush1.msra.mxu0 0.0
  %1884 = vmatprep.subr.mxu0 0.0
  %1885 = vmatpush1.msra.mxu0 0.0
  %1886 = vmatprep.subr.mxu0 0.0
  %1887 = vmatpush1.msra.mxu0 0.0
  %1888 = vmatprep.subr.mxu0 0.0
  %1889 = vmatpush1.msra.mxu0 0.0
  %1890 = vmatprep.subr.mxu0 0.0
  %1891 = vmatpush1.msra.mxu0 0.0
  %1892 = vmatprep.subr.mxu0 0.0
  %1893 = vmatpush1.msra.mxu0 0.0
  %1894 = vmatprep.subr.mxu0 0.0
  %1895 = vmatpush1.msra.mxu0 0.0
  %1896 = vmatprep.subr.mxu0 0.0
  %1897 = vmatpush1.msra.mxu0 0.0
  %1898 = vmatprep.subr.mxu0 0.0
  %1899 = vmatpush1.msra.mxu0 0.0
  %1900 = vmatprep.subr.mxu0 0.0
  %1901 = vmatpush1.msra.mxu0 0.0
  %1902 = vmatprep.subr.mxu0 0.0
  %1903 = vmatpush1.msra.mxu0 0.0
  %1904 = vmatprep.subr.mxu0 0.0
  %1905 = vmatpush1.msra.mxu0 0.0
  %1906 = vmatprep.subr.mxu0 0.0
  %1907 = vmatpush1.msra.mxu0 0.0
  %1908 = vmatprep.subr.mxu0 0.0
  %1909 = vmatpush1.msra.mxu0 0.0
  %1910 = vmatprep.subr.mxu0 0.0
  %1911 = vmatpush1.msra.mxu0 0.0
  %1912 = vmatprep.subr.mxu0 0.0
  %1913 = vmatpush1.msra.mxu0 0.0
  %1914 = vmatprep.subr.mxu0 0.0
  %1915 = vmatpush1.msra.mxu0 0.0
  %1916 = vmatprep.subr.mxu0 0.0
  %1917 = vmatpush1.msra.mxu0 0.0
  %1918 = vmatprep.subr.mxu0 0.0
  %1919 = vmatpush1.msra.mxu0 0.0
  %1920 = vmatprep.subr.mxu0 0.0
  %1921 = vmatpush1.msra.mxu0 0.0
  %1922 = vmatprep.subr.mxu0 0.0
  %1923 = vmatpush1.msra.mxu0 0.0
  %1924 = vmatprep.subr.mxu0 0.0
  %1925 = vmatpush1.msra.mxu0 0.0
  %1926 = vmatprep.subr.mxu0 0.0
  %1927 = vmatpush1.msra.mxu0 0.0
  %1928 = vmatprep.mubr.f32.mxu0 0.0
  %1929 = vmatmul.mubr.f32.gmra.mrb[0].mxu0 %v1862
  %v1930 = vpop.f32.mrb[0].mxu0
  %v1931 = vadd.f32 %v290, %v1930
  %v1932 = vpop.f32.mrb[0].mxu0
  %1933 = vdwg.mxu0
  %v1934 = vadd.f32 %v1760, %v1931
  %v1935 = vxor.u32 %v1934, 2147483648
  %v1936 = vmul.f32 %v1935, 1.442695
  %v1937 = vpow.pop %v1936
  %v1938 = vadd.f32 %v1937, 1.0
  %v1939 = vrcp.pop %v1938
  %v1940 = vmul.f32 1.0, %v1939
  %1942 = vrot.lane.b32.xlu0 %v1931, 64
  %v1943 = vpop.permute.xlu0 %1942
  %v1945 = vmul.f32 %v1940, %v1943
  %1947 = vrot.lane.b32.xlu0 %v1945, 64
  %v1948 = vpop.permute.xlu0 %1947
  %v1950 = vadd.f32 %v1760, %v1948
  %v1951 = vtanh.pop %v1950
  %v1952 = vsub.f32 1.0, %v1940
  %1954 = vrot.lane.b32.xlu0 %v1951, 96
  %v1955 = vpop.permute.xlu0 %1954
  %v1957 = vmul.f32 %v1952, %v1955
  %v1958 = vmul.f32 %v1940, %v1751
  %v1959 = vadd.f32 %v1957, %v1958
  %1961 = vrot.lane.b32.xlu0 %v1858, 96
  %v1962 = vpop.permute.xlu0 %1961
  %1964 = vst.msk [vmem:[%s495] sm:$0xff] %vm245, %v1962
  %1965 = vst.msk [vmem:[%s7] sm:$0xff] %vm496, %v1959
  // Predicated region
  $region30: #{bigru_forward.2} parent=0 // pred_check
    _
  $region31: #{bigru_forward.2} parent=0 // pred_check_branch
    %1967 = sbr.rel (0) target = $region33
  $region32: #{bigru_forward.2} parent=0 // pred_region
    _
  $region33: #{bigru_forward.2} parent=0 // pred_fallthru
    _
  // Predicated region
  $region34: #{bigru_forward.2} parent=0 // pred_check
    _
  $region35: #{bigru_forward.2} parent=0 // pred_check_branch
    %1969 = sbr.rel (0) target = $region37
  $region36: #{bigru_forward.2} parent=0 // pred_region
    _
  $region37: #{bigru_forward.2} parent=0 // pred_fallthru
    _

</llo_original>
